<compile_context>
chip_gen: v5e
topology: v5e:2x2
jax: 0.10.0
libtpu: 0.0.40
codegen_flags: <defaults>
</compile_context>

<pallas_src>
import functools

import numpy as np
import jax
import jax.numpy as jnp
from jax.experimental import pallas as pl
from jax.experimental.pallas import tpu as pltpu


# ----------------------------------------------------------------------------
# Pallas kernel: T_BLK timesteps of one layer per grid step.
#   grid = (num_layers [parallel], t_pad // t_blk [arbitrary/sequential])
# ----------------------------------------------------------------------------
def _gru_seq_kernel(w_ref, xgb_ref, h0_ref, kt_ref, ph_ref, out_ref, h_ref, *,
                    batch, n_pad, num_kernels, max_diffusion_step, k_tot, t_blk):
    layer = pl.program_id(0)
    tb = pl.program_id(1)

    @pl.when(tb == 0)
    def _():
        h_ref[...] = h0_ref[...]          # (re)initialise the recurrent scratch

    def wsc(gate, col):                   # Linear weight scalar from SMEM
        return w_ref[layer, gate * (2 * k_tot) + col]

    def h_cheb_wsum(state, gates):
        """Diffuse `state` (B, n_pad) through the Chebyshev chain (x0/x1 carry
        over BETWEEN graph kernels, as in the PyTorch code) and fuse the
        per-feature Linear weights into running accumulators (no feats list)."""
        accs = [[wsc(g, mp * k_tot) * state for mp in range(2)] for g in gates]
        x0 = state
        kpos = 1
        for j in range(num_kernels):
            kmat = kt_ref[j]              # (n_pad, n_pad) == K^T, zero-padded
            x1 = jnp.dot(x0, kmat, preferred_element_type=jnp.float32)
            for gi, g in enumerate(gates):
                for mp in range(2):
                    accs[gi][mp] = accs[gi][mp] + wsc(g, mp * k_tot + kpos) * x1
            kpos += 1
            for _ in range(2, max_diffusion_step + 1):
                x2 = 2.0 * jnp.dot(x1, kmat,
                                   preferred_element_type=jnp.float32) - x0
                for gi, g in enumerate(gates):
                    for mp in range(2):
                        accs[gi][mp] = accs[gi][mp] + wsc(g, mp * k_tot + kpos) * x2
                kpos += 1
                x1, x0 = x2, x1
        return accs                       # accs[gi][mp] : (B, n_pad)

    two_bn = 2 * batch * n_pad

    for i in range(t_blk):                # time-blocked inner loop
        h = h_ref[...]                    # (B, n_pad) hidden state
        xgb = xgb_ref[i]                  # (2B, n_pad): rows [0:B] = W1(x)+b1,
                                          #              rows [B:2B] = W2(x)+b2

        # r / u gates: hidden-channel weighted sums + ONE fused gather matmul.
        accs = h_cheb_wsum(h, gates=(0, 1))
        lhs = jnp.concatenate(accs[0] + accs[1], axis=0).reshape(2, two_bn)
        g = jnp.dot(lhs, ph_ref[...], preferred_element_type=jnp.float32)
        g = g.reshape(2, batch, n_pad)
        r = jax.nn.sigmoid(g[0] + xgb[0:batch])
        u = jax.nn.sigmoid(g[1] + xgb[batch:2 * batch])

        # C gate: gconv2 reused on (x, r*h) -- PyTorch behaviour preserved.
        accs_c = h_cheb_wsum(r * h, gates=(1,))
        lhs_c = jnp.concatenate(accs_c[0], axis=0).reshape(1, two_bn)
        gc = jnp.dot(lhs_c, ph_ref[...], preferred_element_type=jnp.float32)
        c = jnp.tanh(gc.reshape(batch, n_pad) + xgb[batch:2 * batch])

        h_new = u * h + (1.0 - u) * c     # pad lanes stay exactly 0 (bias is
        h_ref[...] = h_new                # pre-masked, gather cols are 0)
        out_ref[i] = h_new


@functools.lru_cache(maxsize=None)
def _make_gru_call(num_layers, t_pad, t_blk, batch, n_pad, num_kernels,
                   max_diffusion_step, k_tot):
    two_bn = 2 * batch * n_pad
    bn = batch * n_pad

    kernel = functools.partial(
        _gru_seq_kernel, batch=batch, n_pad=n_pad, num_kernels=num_kernels,
        max_diffusion_step=max_diffusion_step, k_tot=k_tot, t_blk=t_blk)

    call = pl.pallas_call(
        kernel,
        grid=(num_layers, t_pad // t_blk),
        in_specs=[
            pl.BlockSpec(memory_space=pltpu.MemorySpace.SMEM),            # W (L, 4*k_tot)
            pl.BlockSpec((None, t_blk, 2 * batch, n_pad),
                         lambda l, t: (l, t, 0, 0)),                      # hoisted x-contrib
            pl.BlockSpec((None, batch, n_pad), lambda l, t: (l, 0, 0)),   # h0 (per layer)
            pl.BlockSpec((num_kernels, n_pad, n_pad),
                         lambda l, t: (0, 0, 0)),                         # K^T (resident)
            pl.BlockSpec((two_bn, bn), lambda l, t: (0, 0)),              # P_h (resident)
        ],
        out_specs=pl.BlockSpec((None, t_blk, batch, n_pad),
                               lambda l, t: (l, t, 0, 0)),
        out_shape=jax.ShapeDtypeStruct((num_layers, t_pad, batch, n_pad),
                                       jnp.float32),
        scratch_shapes=[pltpu.VMEM((batch, n_pad), jnp.float32)],         # recurrent h
        compiler_params=pltpu.CompilerParams(
            dimension_semantics=("parallel", "arbitrary"),
            vmem_limit_bytes=32 * 1024 * 1024),
    )
    return jax.jit(call)


# ----------------------------------------------------------------------------
# Host-side preprocessing (O(B*N) index math + batched XLA matmuls).
# ----------------------------------------------------------------------------
def _pad_graph_kernels(graph_kernels, n, n_pad):
    out = np.zeros((len(graph_kernels), n_pad, n_pad), np.float32)
    for i, k in enumerate(graph_kernels):
        out[i, :n, :n] = np.asarray(k, np.float32).T
    return jnp.asarray(out)


def _build_gather_matrices(batch, n, n_pad):
    """0/1 matrices implementing the buggy torch `.view(k_tot, N, 2, B)`
    scramble, split by source channel:
      px : gathers from the (m', b, n) layout of the x-channel weighted sums
           (applied OUTSIDE the recurrence),
      ph : gathers from the (m', b, n) layout of the hidden-channel weighted
           sums (applied inside the kernel).
    Destination columns are b'*n_pad + n'.  Pad rows/cols stay all-zero."""
    px = np.zeros((2 * batch * n_pad, batch * n_pad), np.float32)
    ph = np.zeros((2 * batch * n_pad, batch * n_pad), np.float32)
    for bp in range(batch):
        for ip in range(n):
            dst = bp * n_pad + ip
            for mp in range(2):
                p = ip * 2 * batch + mp * batch + bp      # buggy-view source idx
                c_src = p % 2
                b_src = p // (2 * n)
                n_src = (p % (2 * n)) // 2
                src = (mp * batch + b_src) * n_pad + n_src
                if c_src == 0:
                    px[src, dst] += 1.0
                else:
                    ph[src, dst] += 1.0
    return jnp.asarray(px), jnp.asarray(ph)


def graph_conv_gru_forward(inputs, graph_kernels, layer_params,
                           max_diffusion_step, hidden=None, t_blk=4):
    """inputs: (seq_len, batch, input_size) float32 (batch_first=False).
    t_blk: timesteps per grid step (raise to 8-16 for long sequences)."""
    seq_len, batch, n = inputs.shape
    num_layers = len(layer_params)
    num_kernels = len(graph_kernels)
    k_tot = num_kernels * max_diffusion_step + 1
    n_pad = max(128, -(-n // 128) * 128)               # lane-dense minor axis
    t_blk = max(1, min(t_blk, seq_len))
    t_pad = -(-seq_len // t_blk) * t_blk
    high = jax.lax.Precision.HIGHEST

    kt_pad = _pad_graph_kernels(graph_kernels, n, n_pad)
    px, ph = _build_gather_matrices(batch, n, n_pad)

    # ---- hoisted x-channel work: diffusion + Linear k-weighting + x-half of
    #      the scramble gather, for every timestep and layer at once. ----
    x_pad = jnp.zeros((seq_len, batch, n_pad), jnp.float32)
    x_pad = x_pad.at[:, :, :n].set(inputs.astype(jnp.float32))

    feats = [x_pad]
    x0 = x_pad
    for j in range(num_kernels):
        kmat = kt_pad[j]
        x1 = jnp.matmul(x0, kmat, precision=high)
        feats.append(x1)
        for _ in range(2, max_diffusion_step + 1):
            x2 = 2.0 * jnp.matmul(x1, kmat, precision=high) - x0
            feats.append(x2)
            x1, x0 = x2, x1
    xdiff = jnp.stack(feats, axis=1)                   # (T, k_tot, B, n_pad)

    wvec = jnp.stack([jnp.stack([jnp.asarray(p["W1"], jnp.float32).reshape(-1),
                                 jnp.asarray(p["W2"], jnp.float32).reshape(-1)])
                      for p in layer_params], axis=0)  # (L, 2, 2*k_tot)
    bias = jnp.asarray([[p["b1"], p["b2"]] for p in layer_params], jnp.float32)
    w4 = wvec.reshape(num_layers, 2, 2, k_tot)         # (L, gate, m', k)

    # per-layer / per-gate / per-m' k-weighted x features.
    xw = jnp.einsum("tkbn,lgmk->ltgmbn", xdiff, w4, precision=high)
    xw_flat = xw.reshape(num_layers, seq_len, 2, 2 * batch * n_pad)
    xg = jnp.matmul(xw_flat, px, precision=high)       # x-half of the scramble
    xg = xg.reshape(num_layers, seq_len, 2, batch, n_pad)
    lane_valid = (jnp.arange(n_pad) < n).astype(jnp.float32)
    xgb = xg + bias[:, None, :, None, None] * lane_valid   # bias pre-masked
    xgb = xgb.reshape(num_layers, seq_len, 2 * batch, n_pad)
    if t_pad != seq_len:
        xgb = jnp.pad(xgb, ((0, 0), (0, t_pad - seq_len), (0, 0), (0, 0)))

    wflat = wvec.reshape(num_layers, 4 * k_tot)        # SMEM weight table

    if hidden is None:
        hidden = jnp.zeros((num_layers, batch, n), jnp.float32)
    h0 = jnp.zeros((num_layers, batch, n_pad), jnp.float32)
    h0 = h0.at[:, :, :n].set(jnp.asarray(hidden, jnp.float32))

    call = _make_gru_call(num_layers, t_pad, t_blk, batch, n_pad, num_kernels,
                          max_diffusion_step, k_tot)
    out = call(wflat, xgb, h0, kt_pad, ph)             # (L, T_pad, B, n_pad)

    # PyTorch bug kept: every layer consumes the ORIGINAL input and only the
    # last layer's outputs are stacked; hidden_out is each layer's last h.
    output = out[num_layers - 1, :seq_len, :, :n]
    hidden_out = out[:, seq_len - 1, :, :n]
    return output, hidden_out
    # TODO(synk): gconv3 and the cell's Linear(input_size, hidden_size) exist in
    # the PyTorch module but are never used by its forward (hidden==input size),
    # so they carry no computation here.


# ----------------------------------------------------------------------------
# Pure-JAX reference mirroring the PyTorch forward verbatim (for verification).
# ----------------------------------------------------------------------------
def _gconv_ref(x, h, graph_kernels, w, b, max_diffusion_step):
    batch, n = x.shape
    state = jnp.stack([x, h], axis=2)                       # (B, N, 2)
    feats = [state]
    x0 = state
    for kmat in graph_kernels:
        x1 = jnp.einsum("ij,bjm->bim", kmat, x0)
        feats.append(x1)
        for _ in range(2, max_diffusion_step + 1):
            x2 = 2.0 * jnp.einsum("ij,bjm->bim", kmat, x1) - x0
            feats.append(x2)
            x1, x0 = x2, x1
    k_tot = len(graph_kernels) * max_diffusion_step + 1
    xs = jnp.stack(feats, axis=0)                           # (k_tot, B, N, 2)
    xs = xs.reshape(k_tot, n, 2, batch)                     # buggy torch .view
    xs = jnp.transpose(xs, (3, 1, 2, 0))                    # (B, N, 2, k_tot)
    xs = xs.reshape(batch * n, 2 * k_tot)
    out = xs @ jnp.reshape(w, (2 * k_tot, 1)) + b
    return out.reshape(batch, n)


def _cell_ref(x, h, graph_kernels, p, d):
    r = jax.nn.sigmoid(_gconv_ref(x, h, graph_kernels, p["W1"], p["b1"], d))
    u = jax.nn.sigmoid(_gconv_ref(x, h, graph_kernels, p["W2"], p["b2"], d))
    c = jnp.tanh(_gconv_ref(x, r * h, graph_kernels, p["W2"], p["b2"], d))
    return u * h + (1.0 - u) * c


def _gru_ref(inputs, graph_kernels, layer_params, d, hidden=None):
    seq_len, batch, n = inputs.shape
    num_layers = len(layer_params)
    if hidden is None:
        hidden = jnp.zeros((num_layers, batch, n), jnp.float32)
    outs = None
    hidden_out = []
    for layer in range(num_layers):
        p = layer_params[layer]
        h = hidden[layer]
        outs = []
        for t in range(seq_len):
            h = _cell_ref(inputs[t], h, graph_kernels, p, d)
            outs.append(h)
        hidden_out.append(h)
    return jnp.stack(outs, 0), jnp.stack(hidden_out, 0)


# ----------------------------------------------------------------------------
if __name__ == "__main__":
    key = jax.random.PRNGKey(0)
    seq_len, batch, n = 8, 2, 16          # input_size = number of graph nodes
    num_layers = 2                        # exercises the parallel layer axis
    max_diffusion_step = 2
    num_kernels = 2
    k_tot = num_kernels * max_diffusion_step + 1

    keys = jax.random.split(key, 16)
    graph_kernels = [0.3 * jax.random.normal(keys[i], (n, n), jnp.float32)
                     for i in range(num_kernels)]
    inputs = jax.random.normal(keys[2], (seq_len, batch, n), jnp.float32)

    def lin_init(k, fan_in, shape):
        bound = 1.0 / np.sqrt(fan_in)
        return jax.random.uniform(k, shape, jnp.float32, -bound, bound)

    layer_params = []
    for i in range(num_layers):
        lk = jax.random.split(keys[3 + i], 4)
        layer_params.append({
            "W1": lin_init(lk[0], 2 * k_tot, (2 * k_tot,)),   # gconv1 Linear
            "b1": float(lin_init(lk[1], 2 * k_tot, ())),
            "W2": lin_init(lk[2], 2 * k_tot, (2 * k_tot,)),   # gconv2 Linear
            "b2": float(lin_init(lk[3], 2 * k_tot, ())),
            # gconv3 + cell.Linear exist in the PyTorch module but are unused
            # by its forward pass, so they carry no computation here.
        })

    out, h_out = graph_conv_gru_forward(inputs, graph_kernels, layer_params,
                                        max_diffusion_step, t_blk=4)
    out = jax.block_until_ready(out)
    h_out = jax.block_until_ready(h_out)

    ref_out, ref_h = _gru_ref(inputs, graph_kernels, layer_params,
                              max_diffusion_step)
    np.testing.assert_allclose(np.asarray(out), np.asarray(ref_out),
                               rtol=5e-3, atol=5e-3)
    np.testing.assert_allclose(np.asarray(h_out), np.asarray(ref_h),
                               rtol=5e-3, atol=5e-3)
    print("KERNEL_OK")
</pallas_src>

<mosaic_0001>
module attributes {stable_mosaic.version = 11 : i64} {
  func.func @_gru_seq_kernel(%arg0: i32, %arg1: i32, %arg2: memref<2x20xf32, #tpu.memory_space<smem>>, %arg3: memref<1x4x4x128xf32, #tpu.memory_space<vmem>>, %arg4: memref<1x2x128xf32, #tpu.memory_space<vmem>>, %arg5: memref<2x128x128xf32, #tpu.memory_space<vmem>>, %arg6: memref<512x256xf32, #tpu.memory_space<vmem>>, %arg7: memref<1x4x2x128xf32, #tpu.memory_space<vmem>>, %arg8: memref<2x128xf32, #tpu.memory_space<vmem>>) attributes {dimension_semantics = [#tpu.dimension_semantics<parallel>, #tpu.dimension_semantics<arbitrary>], iteration_bounds = array<i64: 2, 2>, scalar_prefetch = 0 : i64, scratch_operands = 1 : i64, tpu.core_type = #tpu.core_type<tc>, window_params = [{transform_indices = @transform_0, window_bounds = array<i64: 2, 20>}, {transform_indices = @transform_1, window_bounds = array<i64: 1, 4, 4, 128>}, {transform_indices = @transform_2, window_bounds = array<i64: 1, 2, 128>}, {pipeline_mode = #tpu.pipeline_mode<synchronous>, transform_indices = @transform_3, window_bounds = array<i64: 2, 128, 128>}, {pipeline_mode = #tpu.pipeline_mode<synchronous>, transform_indices = @transform_4, window_bounds = array<i64: 512, 256>}, {transform_indices = @transform_5, window_bounds = array<i64: 1, 4, 2, 128>}]} {
    %c0_i32 = arith.constant 0 : i32
    %0 = arith.cmpi eq, %arg1, %c0_i32 : i32
    %1 = arith.extui %0 : i1 to i32
    %c0_i32_0 = arith.constant 0 : i32
    %2 = arith.cmpi ne, %1, %c0_i32_0 : i32
    scf.if %2 {
      %c0_280 = arith.constant 0 : index
      %c0_281 = arith.constant 0 : index
      %c0_282 = arith.constant 0 : index
      %867 = vector.load %arg4[%c0_280, %c0_281, %c0_282] : memref<1x2x128xf32, #tpu.memory_space<vmem>>, vector<1x2x128xf32>
      %868 = vector.shape_cast %867 : vector<1x2x128xf32> to vector<2x128xf32>
      %c0_283 = arith.constant 0 : index
      %c0_284 = arith.constant 0 : index
      %869 = vector.load %arg8[%c0_283, %c0_284] : memref<2x128xf32, #tpu.memory_space<vmem>>, vector<2x128xf32>
      tpu.vector_store %arg8[%c0_283, %c0_284], %868 {strides = array<i32>} : memref<2x128xf32, #tpu.memory_space<vmem>>, vector<2x128xf32>,
    } else {
    }
    %c0 = arith.constant 0 : index
    %c0_1 = arith.constant 0 : index
    %3 = vector.load %arg8[%c0, %c0_1] : memref<2x128xf32, #tpu.memory_space<vmem>>, vector<2x128xf32>
    %c0_2 = arith.constant 0 : index
    %c0_3 = arith.constant 0 : index
    %c0_4 = arith.constant 0 : index
    %c0_5 = arith.constant 0 : index
    %4 = vector.load %arg3[%c0_2, %c0_3, %c0_4, %c0_5] : memref<1x4x4x128xf32, #tpu.memory_space<vmem>>, vector<1x1x4x128xf32>
    %5 = vector.shape_cast %4 : vector<1x1x4x128xf32> to vector<4x128xf32>
    %6 = arith.index_cast %arg0 : i32 to index
    %c0_6 = arith.constant 0 : index
    %7 = memref.load %arg2[%6, %c0_6] : memref<2x20xf32, #tpu.memory_space<smem>>
    %8 = vector.broadcast %7 : f32 to vector<2x128xf32>
    %9 = arith.mulf %8, %3 : vector<2x128xf32>
    %10 = arith.index_cast %arg0 : i32 to index
    %c5 = arith.constant 5 : index
    %11 = memref.load %arg2[%10, %c5] : memref<2x20xf32, #tpu.memory_space<smem>>
    %12 = vector.broadcast %11 : f32 to vector<2x128xf32>
    %13 = arith.mulf %12, %3 : vector<2x128xf32>
    %14 = arith.index_cast %arg0 : i32 to index
    %c10 = arith.constant 10 : index
    %15 = memref.load %arg2[%14, %c10] : memref<2x20xf32, #tpu.memory_space<smem>>
    %16 = vector.broadcast %15 : f32 to vector<2x128xf32>
    %17 = arith.mulf %16, %3 : vector<2x128xf32>
    %18 = arith.index_cast %arg0 : i32 to index
    %c15 = arith.constant 15 : index
    %19 = memref.load %arg2[%18, %c15] : memref<2x20xf32, #tpu.memory_space<smem>>
    %20 = vector.broadcast %19 : f32 to vector<2x128xf32>
    %21 = arith.mulf %20, %3 : vector<2x128xf32>
    %c0_7 = arith.constant 0 : index
    %c0_8 = arith.constant 0 : index
    %c0_9 = arith.constant 0 : index
    %22 = vector.load %arg5[%c0_7, %c0_8, %c0_9] : memref<2x128x128xf32, #tpu.memory_space<vmem>>, vector<1x128x128xf32>
    %23 = vector.shape_cast %22 : vector<1x128x128xf32> to vector<128x128xf32>
    %cst = arith.constant dense<0.000000e+00> : vector<2x128xf32>
    %24 = tpu.matmul %3, %23, %cst {dimension_numbers = #tpu.dot_dimension_numbers<[1], [0], [0], [1], [0, 0, 1, 1], [], []>} : vector<2x128xf32>, vector<128x128xf32>, vector<2x128xf32> -> vector<2x128xf32>
    %25 = arith.index_cast %arg0 : i32 to index
    %c1 = arith.constant 1 : index
    %26 = memref.load %arg2[%25, %c1] : memref<2x20xf32, #tpu.memory_space<smem>>
    %27 = vector.broadcast %26 : f32 to vector<2x128xf32>
    %28 = arith.mulf %27, %24 : vector<2x128xf32>
    %29 = arith.addf %9, %28 : vector<2x128xf32>
    %30 = arith.index_cast %arg0 : i32 to index
    %c6 = arith.constant 6 : index
    %31 = memref.load %arg2[%30, %c6] : memref<2x20xf32, #tpu.memory_space<smem>>
    %32 = vector.broadcast %31 : f32 to vector<2x128xf32>
    %33 = arith.mulf %32, %24 : vector<2x128xf32>
    %34 = arith.addf %13, %33 : vector<2x128xf32>
    %35 = arith.index_cast %arg0 : i32 to index
    %c11 = arith.constant 11 : index
    %36 = memref.load %arg2[%35, %c11] : memref<2x20xf32, #tpu.memory_space<smem>>
    %37 = vector.broadcast %36 : f32 to vector<2x128xf32>
    %38 = arith.mulf %37, %24 : vector<2x128xf32>
    %39 = arith.addf %17, %38 : vector<2x128xf32>
    %40 = arith.index_cast %arg0 : i32 to index
    %c16 = arith.constant 16 : index
    %41 = memref.load %arg2[%40, %c16] : memref<2x20xf32, #tpu.memory_space<smem>>
    %42 = vector.broadcast %41 : f32 to vector<2x128xf32>
    %43 = arith.mulf %42, %24 : vector<2x128xf32>
    %44 = arith.addf %21, %43 : vector<2x128xf32>
    %cst_10 = arith.constant dense<0.000000e+00> : vector<2x128xf32>
    %45 = tpu.matmul %24, %23, %cst_10 {dimension_numbers = #tpu.dot_dimension_numbers<[1], [0], [0], [1], [0, 0, 1, 1], [], []>} : vector<2x128xf32>, vector<128x128xf32>, vector<2x128xf32> -> vector<2x128xf32>
    %cst_11 = arith.constant 2.000000e+00 : f32
    %46 = vector.broadcast %cst_11 : f32 to vector<2x128xf32>
    %47 = arith.mulf %46, %45 : vector<2x128xf32>
    %48 = arith.subf %47, %3 : vector<2x128xf32>
    %49 = arith.index_cast %arg0 : i32 to index
    %c2 = arith.constant 2 : index
    %50 = memref.load %arg2[%49, %c2] : memref<2x20xf32, #tpu.memory_space<smem>>
    %51 = vector.broadcast %50 : f32 to vector<2x128xf32>
    %52 = arith.mulf %51, %48 : vector<2x128xf32>
    %53 = arith.addf %29, %52 : vector<2x128xf32>
    %54 = arith.index_cast %arg0 : i32 to index
    %c7 = arith.constant 7 : index
    %55 = memref.load %arg2[%54, %c7] : memref<2x20xf32, #tpu.memory_space<smem>>
    %56 = vector.broadcast %55 : f32 to vector<2x128xf32>
    %57 = arith.mulf %56, %48 : vector<2x128xf32>
    %58 = arith.addf %34, %57 : vector<2x128xf32>
    %59 = arith.index_cast %arg0 : i32 to index
    %c12 = arith.constant 12 : index
    %60 = memref.load %arg2[%59, %c12] : memref<2x20xf32, #tpu.memory_space<smem>>
    %61 = vector.broadcast %60 : f32 to vector<2x128xf32>
    %62 = arith.mulf %61, %48 : vector<2x128xf32>
    %63 = arith.addf %39, %62 : vector<2x128xf32>
    %64 = arith.index_cast %arg0 : i32 to index
    %c17 = arith.constant 17 : index
    %65 = memref.load %arg2[%64, %c17] : memref<2x20xf32, #tpu.memory_space<smem>>
    %66 = vector.broadcast %65 : f32 to vector<2x128xf32>
    %67 = arith.mulf %66, %48 : vector<2x128xf32>
    %68 = arith.addf %44, %67 : vector<2x128xf32>
    %c1_12 = arith.constant 1 : index
    %c0_13 = arith.constant 0 : index
    %c0_14 = arith.constant 0 : index
    %69 = vector.load %arg5[%c1_12, %c0_13, %c0_14] : memref<2x128x128xf32, #tpu.memory_space<vmem>>, vector<1x128x128xf32>
    %70 = vector.shape_cast %69 : vector<1x128x128xf32> to vector<128x128xf32>
    %cst_15 = arith.constant dense<0.000000e+00> : vector<2x128xf32>
    %71 = tpu.matmul %24, %70, %cst_15 {dimension_numbers = #tpu.dot_dimension_numbers<[1], [0], [0], [1], [0, 0, 1, 1], [], []>} : vector<2x128xf32>, vector<128x128xf32>, vector<2x128xf32> -> vector<2x128xf32>
    %72 = arith.index_cast %arg0 : i32 to index
    %c3 = arith.constant 3 : index
    %73 = memref.load %arg2[%72, %c3] : memref<2x20xf32, #tpu.memory_space<smem>>
    %74 = vector.broadcast %73 : f32 to vector<2x128xf32>
    %75 = arith.mulf %74, %71 : vector<2x128xf32>
    %76 = arith.addf %53, %75 : vector<2x128xf32>
    %77 = arith.index_cast %arg0 : i32 to index
    %c8 = arith.constant 8 : index
    %78 = memref.load %arg2[%77, %c8] : memref<2x20xf32, #tpu.memory_space<smem>>
    %79 = vector.broadcast %78 : f32 to vector<2x128xf32>
    %80 = arith.mulf %79, %71 : vector<2x128xf32>
    %81 = arith.addf %58, %80 : vector<2x128xf32>
    %82 = arith.index_cast %arg0 : i32 to index
    %c13 = arith.constant 13 : index
    %83 = memref.load %arg2[%82, %c13] : memref<2x20xf32, #tpu.memory_space<smem>>
    %84 = vector.broadcast %83 : f32 to vector<2x128xf32>
    %85 = arith.mulf %84, %71 : vector<2x128xf32>
    %86 = arith.addf %63, %85 : vector<2x128xf32>
    %87 = arith.index_cast %arg0 : i32 to index
    %c18 = arith.constant 18 : index
    %88 = memref.load %arg2[%87, %c18] : memref<2x20xf32, #tpu.memory_space<smem>>
    %89 = vector.broadcast %88 : f32 to vector<2x128xf32>
    %90 = arith.mulf %89, %71 : vector<2x128xf32>
    %91 = arith.addf %68, %90 : vector<2x128xf32>
    %cst_16 = arith.constant dense<0.000000e+00> : vector<2x128xf32>
    %92 = tpu.matmul %71, %70, %cst_16 {dimension_numbers = #tpu.dot_dimension_numbers<[1], [0], [0], [1], [0, 0, 1, 1], [], []>} : vector<2x128xf32>, vector<128x128xf32>, vector<2x128xf32> -> vector<2x128xf32>
    %cst_17 = arith.constant 2.000000e+00 : f32
    %93 = vector.broadcast %cst_17 : f32 to vector<2x128xf32>
    %94 = arith.mulf %93, %92 : vector<2x128xf32>
    %95 = arith.subf %94, %24 : vector<2x128xf32>
    %96 = arith.index_cast %arg0 : i32 to index
    %c4 = arith.constant 4 : index
    %97 = memref.load %arg2[%96, %c4] : memref<2x20xf32, #tpu.memory_space<smem>>
    %98 = vector.broadcast %97 : f32 to vector<2x128xf32>
    %99 = arith.mulf %98, %95 : vector<2x128xf32>
    %100 = arith.addf %76, %99 : vector<2x128xf32>
    %101 = arith.index_cast %arg0 : i32 to index
    %c9 = arith.constant 9 : index
    %102 = memref.load %arg2[%101, %c9] : memref<2x20xf32, #tpu.memory_space<smem>>
    %103 = vector.broadcast %102 : f32 to vector<2x128xf32>
    %104 = arith.mulf %103, %95 : vector<2x128xf32>
    %105 = arith.addf %81, %104 : vector<2x128xf32>
    %106 = arith.index_cast %arg0 : i32 to index
    %c14 = arith.constant 14 : index
    %107 = memref.load %arg2[%106, %c14] : memref<2x20xf32, #tpu.memory_space<smem>>
    %108 = vector.broadcast %107 : f32 to vector<2x128xf32>
    %109 = arith.mulf %108, %95 : vector<2x128xf32>
    %110 = arith.addf %86, %109 : vector<2x128xf32>
    %111 = arith.index_cast %arg0 : i32 to index
    %c19 = arith.constant 19 : index
    %112 = memref.load %arg2[%111, %c19] : memref<2x20xf32, #tpu.memory_space<smem>>
    %113 = vector.broadcast %112 : f32 to vector<2x128xf32>
    %114 = arith.mulf %113, %95 : vector<2x128xf32>
    %115 = arith.addf %91, %114 : vector<2x128xf32>
    %116 = tpu.concatenate %100, %105, %110, %115 in 0 : vector<2x128xf32>, vector<2x128xf32>, vector<2x128xf32>, vector<2x128xf32> -> vector<8x128xf32>
    %117 = vector.shape_cast %116 : vector<8x128xf32> to vector<2x512xf32>
    %c0_18 = arith.constant 0 : index
    %c0_19 = arith.constant 0 : index
    %118 = vector.load %arg6[%c0_18, %c0_19] : memref<512x256xf32, #tpu.memory_space<vmem>>, vector<512x256xf32>
    %cst_20 = arith.constant dense<0.000000e+00> : vector<2x256xf32>
    %119 = tpu.matmul %117, %118, %cst_20 {dimension_numbers = #tpu.dot_dimension_numbers<[1], [0], [0], [1], [0, 0, 1, 1], [], []>} : vector<2x512xf32>, vector<512x256xf32>, vector<2x256xf32> -> vector<2x256xf32>
    %120 = vector.shape_cast %119 : vector<2x256xf32> to vector<2x2x128xf32>
    %121 = vector.extract_strided_slice %120 {offsets = [0, 0, 0], sizes = [1, 2, 128], strides = [1, 1, 1]} : vector<2x2x128xf32> to vector<1x2x128xf32>
    %122 = vector.shape_cast %121 : vector<1x2x128xf32> to vector<2x128xf32>
    %123 = vector.extract_strided_slice %5 {offsets = [0, 0], sizes = [2, 128], strides = [1, 1]} : vector<4x128xf32> to vector<2x128xf32>
    %124 = arith.addf %122, %123 : vector<2x128xf32>
    %125 = arith.negf %124 : vector<2x128xf32>
    %126 = math.exp %125 : vector<2x128xf32>
    %cst_21 = arith.constant 1.000000e+00 : f32
    %127 = vector.broadcast %cst_21 : f32 to vector<2x128xf32>
    %128 = arith.addf %127, %126 : vector<2x128xf32>
    %129 = arith.divf %127, %128 : vector<2x128xf32>
    %130 = vector.extract_strided_slice %120 {offsets = [1, 0, 0], sizes = [1, 2, 128], strides = [1, 1, 1]} : vector<2x2x128xf32> to vector<1x2x128xf32>
    %131 = vector.shape_cast %130 : vector<1x2x128xf32> to vector<2x128xf32>
    %132 = vector.extract_strided_slice %5 {offsets = [2, 0], sizes = [2, 128], strides = [1, 1]} : vector<4x128xf32> to vector<2x128xf32>
    %133 = arith.addf %131, %132 : vector<2x128xf32>
    %134 = arith.negf %133 : vector<2x128xf32>
    %135 = math.exp %134 : vector<2x128xf32>
    %cst_22 = arith.constant 1.000000e+00 : f32
    %136 = vector.broadcast %cst_22 : f32 to vector<2x128xf32>
    %137 = arith.addf %136, %135 : vector<2x128xf32>
    %138 = arith.divf %136, %137 : vector<2x128xf32>
    %139 = arith.mulf %129, %3 : vector<2x128xf32>
    %140 = arith.index_cast %arg0 : i32 to index
    %c10_23 = arith.constant 10 : index
    %141 = memref.load %arg2[%140, %c10_23] : memref<2x20xf32, #tpu.memory_space<smem>>
    %142 = vector.broadcast %141 : f32 to vector<2x128xf32>
    %143 = arith.mulf %142, %139 : vector<2x128xf32>
    %144 = arith.index_cast %arg0 : i32 to index
    %c15_24 = arith.constant 15 : index
    %145 = memref.load %arg2[%144, %c15_24] : memref<2x20xf32, #tpu.memory_space<smem>>
    %146 = vector.broadcast %145 : f32 to vector<2x128xf32>
    %147 = arith.mulf %146, %139 : vector<2x128xf32>
    %c0_25 = arith.constant 0 : index
    %c0_26 = arith.constant 0 : index
    %c0_27 = arith.constant 0 : index
    %148 = vector.load %arg5[%c0_25, %c0_26, %c0_27] : memref<2x128x128xf32, #tpu.memory_space<vmem>>, vector<1x128x128xf32>
    %149 = vector.shape_cast %148 : vector<1x128x128xf32> to vector<128x128xf32>
    %cst_28 = arith.constant dense<0.000000e+00> : vector<2x128xf32>
    %150 = tpu.matmul %139, %149, %cst_28 {dimension_numbers = #tpu.dot_dimension_numbers<[1], [0], [0], [1], [0, 0, 1, 1], [], []>} : vector<2x128xf32>, vector<128x128xf32>, vector<2x128xf32> -> vector<2x128xf32>
    %151 = arith.index_cast %arg0 : i32 to index
    %c11_29 = arith.constant 11 : index
    %152 = memref.load %arg2[%151, %c11_29] : memref<2x20xf32, #tpu.memory_space<smem>>
    %153 = vector.broadcast %152 : f32 to vector<2x128xf32>
    %154 = arith.mulf %153, %150 : vector<2x128xf32>
    %155 = arith.addf %143, %154 : vector<2x128xf32>
    %156 = arith.index_cast %arg0 : i32 to index
    %c16_30 = arith.constant 16 : index
    %157 = memref.load %arg2[%156, %c16_30] : memref<2x20xf32, #tpu.memory_space<smem>>
    %158 = vector.broadcast %157 : f32 to vector<2x128xf32>
    %159 = arith.mulf %158, %150 : vector<2x128xf32>
    %160 = arith.addf %147, %159 : vector<2x128xf32>
    %cst_31 = arith.constant dense<0.000000e+00> : vector<2x128xf32>
    %161 = tpu.matmul %150, %149, %cst_31 {dimension_numbers = #tpu.dot_dimension_numbers<[1], [0], [0], [1], [0, 0, 1, 1], [], []>} : vector<2x128xf32>, vector<128x128xf32>, vector<2x128xf32> -> vector<2x128xf32>
    %cst_32 = arith.constant 2.000000e+00 : f32
    %162 = vector.broadcast %cst_32 : f32 to vector<2x128xf32>
    %163 = arith.mulf %162, %161 : vector<2x128xf32>
    %164 = arith.subf %163, %139 : vector<2x128xf32>
    %165 = arith.index_cast %arg0 : i32 to index
    %c12_33 = arith.constant 12 : index
    %166 = memref.load %arg2[%165, %c12_33] : memref<2x20xf32, #tpu.memory_space<smem>>
    %167 = vector.broadcast %166 : f32 to vector<2x128xf32>
    %168 = arith.mulf %167, %164 : vector<2x128xf32>
    %169 = arith.addf %155, %168 : vector<2x128xf32>
    %170 = arith.index_cast %arg0 : i32 to index
    %c17_34 = arith.constant 17 : index
    %171 = memref.load %arg2[%170, %c17_34] : memref<2x20xf32, #tpu.memory_space<smem>>
    %172 = vector.broadcast %171 : f32 to vector<2x128xf32>
    %173 = arith.mulf %172, %164 : vector<2x128xf32>
    %174 = arith.addf %160, %173 : vector<2x128xf32>
    %c1_35 = arith.constant 1 : index
    %c0_36 = arith.constant 0 : index
    %c0_37 = arith.constant 0 : index
    %175 = vector.load %arg5[%c1_35, %c0_36, %c0_37] : memref<2x128x128xf32, #tpu.memory_space<vmem>>, vector<1x128x128xf32>
    %176 = vector.shape_cast %175 : vector<1x128x128xf32> to vector<128x128xf32>
    %cst_38 = arith.constant dense<0.000000e+00> : vector<2x128xf32>
    %177 = tpu.matmul %150, %176, %cst_38 {dimension_numbers = #tpu.dot_dimension_numbers<[1], [0], [0], [1], [0, 0, 1, 1], [], []>} : vector<2x128xf32>, vector<128x128xf32>, vector<2x128xf32> -> vector<2x128xf32>
    %178 = arith.index_cast %arg0 : i32 to index
    %c13_39 = arith.constant 13 : index
    %179 = memref.load %arg2[%178, %c13_39] : memref<2x20xf32, #tpu.memory_space<smem>>
    %180 = vector.broadcast %179 : f32 to vector<2x128xf32>
    %181 = arith.mulf %180, %177 : vector<2x128xf32>
    %182 = arith.addf %169, %181 : vector<2x128xf32>
    %183 = arith.index_cast %arg0 : i32 to index
    %c18_40 = arith.constant 18 : index
    %184 = memref.load %arg2[%183, %c18_40] : memref<2x20xf32, #tpu.memory_space<smem>>
    %185 = vector.broadcast %184 : f32 to vector<2x128xf32>
    %186 = arith.mulf %185, %177 : vector<2x128xf32>
    %187 = arith.addf %174, %186 : vector<2x128xf32>
    %cst_41 = arith.constant dense<0.000000e+00> : vector<2x128xf32>
    %188 = tpu.matmul %177, %176, %cst_41 {dimension_numbers = #tpu.dot_dimension_numbers<[1], [0], [0], [1], [0, 0, 1, 1], [], []>} : vector<2x128xf32>, vector<128x128xf32>, vector<2x128xf32> -> vector<2x128xf32>
    %cst_42 = arith.constant 2.000000e+00 : f32
    %189 = vector.broadcast %cst_42 : f32 to vector<2x128xf32>
    %190 = arith.mulf %189, %188 : vector<2x128xf32>
    %191 = arith.subf %190, %150 : vector<2x128xf32>
    %192 = arith.index_cast %arg0 : i32 to index
    %c14_43 = arith.constant 14 : index
    %193 = memref.load %arg2[%192, %c14_43] : memref<2x20xf32, #tpu.memory_space<smem>>
    %194 = vector.broadcast %193 : f32 to vector<2x128xf32>
    %195 = arith.mulf %194, %191 : vector<2x128xf32>
    %196 = arith.addf %182, %195 : vector<2x128xf32>
    %197 = arith.index_cast %arg0 : i32 to index
    %c19_44 = arith.constant 19 : index
    %198 = memref.load %arg2[%197, %c19_44] : memref<2x20xf32, #tpu.memory_space<smem>>
    %199 = vector.broadcast %198 : f32 to vector<2x128xf32>
    %200 = arith.mulf %199, %191 : vector<2x128xf32>
    %201 = arith.addf %187, %200 : vector<2x128xf32>
    %202 = tpu.concatenate %196, %201 in 0 : vector<2x128xf32>, vector<2x128xf32> -> vector<4x128xf32>
    %203 = vector.shape_cast %202 : vector<4x128xf32> to vector<1x512xf32>
    %c0_45 = arith.constant 0 : index
    %c0_46 = arith.constant 0 : index
    %204 = vector.load %arg6[%c0_45, %c0_46] : memref<512x256xf32, #tpu.memory_space<vmem>>, vector<512x256xf32>
    %cst_47 = arith.constant dense<0.000000e+00> : vector<1x256xf32>
    %205 = tpu.matmul %203, %204, %cst_47 {dimension_numbers = #tpu.dot_dimension_numbers<[1], [0], [0], [1], [0, 0, 1, 1], [], []>} : vector<1x512xf32>, vector<512x256xf32>, vector<1x256xf32> -> vector<1x256xf32>
    %206 = vector.shape_cast %205 : vector<1x256xf32> to vector<2x128xf32>
    %207 = vector.extract_strided_slice %5 {offsets = [2, 0], sizes = [2, 128], strides = [1, 1]} : vector<4x128xf32> to vector<2x128xf32>
    %208 = arith.addf %206, %207 : vector<2x128xf32>
    %209 = math.tanh %208 : vector<2x128xf32>
    %210 = arith.mulf %138, %3 : vector<2x128xf32>
    %cst_48 = arith.constant 1.000000e+00 : f32
    %211 = vector.broadcast %cst_48 : f32 to vector<2x128xf32>
    %212 = arith.subf %211, %138 : vector<2x128xf32>
    %213 = arith.mulf %212, %209 : vector<2x128xf32>
    %214 = arith.addf %210, %213 : vector<2x128xf32>
    %c0_49 = arith.constant 0 : index
    %c0_50 = arith.constant 0 : index
    %215 = vector.load %arg8[%c0_49, %c0_50] : memref<2x128xf32, #tpu.memory_space<vmem>>, vector<2x128xf32>
    tpu.vector_store %arg8[%c0_49, %c0_50], %214 {strides = array<i32>} : memref<2x128xf32, #tpu.memory_space<vmem>>, vector<2x128xf32>,
    %c0_51 = arith.constant 0 : index
    %c0_52 = arith.constant 0 : index
    %c0_53 = arith.constant 0 : index
    %c0_54 = arith.constant 0 : index
    %216 = vector.load %arg7[%c0_51, %c0_52, %c0_53, %c0_54] : memref<1x4x2x128xf32, #tpu.memory_space<vmem>>, vector<1x1x2x128xf32>
    %217 = vector.shape_cast %216 : vector<1x1x2x128xf32> to vector<2x128xf32>
    %218 = vector.shape_cast %214 : vector<2x128xf32> to vector<1x1x2x128xf32>
    tpu.vector_store %arg7[%c0_51, %c0_52, %c0_53, %c0_54], %218 {strides = array<i32>} : memref<1x4x2x128xf32, #tpu.memory_space<vmem>>, vector<1x1x2x128xf32>,
    %c0_55 = arith.constant 0 : index
    %c0_56 = arith.constant 0 : index
    %219 = vector.load %arg8[%c0_55, %c0_56] : memref<2x128xf32, #tpu.memory_space<vmem>>, vector<2x128xf32>
    %c0_57 = arith.constant 0 : index
    %c1_58 = arith.constant 1 : index
    %c0_59 = arith.constant 0 : index
    %c0_60 = arith.constant 0 : index
    %220 = vector.load %arg3[%c0_57, %c1_58, %c0_59, %c0_60] : memref<1x4x4x128xf32, #tpu.memory_space<vmem>>, vector<1x1x4x128xf32>
    %221 = vector.shape_cast %220 : vector<1x1x4x128xf32> to vector<4x128xf32>
    %222 = arith.index_cast %arg0 : i32 to index
    %c0_61 = arith.constant 0 : index
    %223 = memref.load %arg2[%222, %c0_61] : memref<2x20xf32, #tpu.memory_space<smem>>
    %224 = vector.broadcast %223 : f32 to vector<2x128xf32>
    %225 = arith.mulf %224, %219 : vector<2x128xf32>
    %226 = arith.index_cast %arg0 : i32 to index
    %c5_62 = arith.constant 5 : index
    %227 = memref.load %arg2[%226, %c5_62] : memref<2x20xf32, #tpu.memory_space<smem>>
    %228 = vector.broadcast %227 : f32 to vector<2x128xf32>
    %229 = arith.mulf %228, %219 : vector<2x128xf32>
    %230 = arith.index_cast %arg0 : i32 to index
    %c10_63 = arith.constant 10 : index
    %231 = memref.load %arg2[%230, %c10_63] : memref<2x20xf32, #tpu.memory_space<smem>>
    %232 = vector.broadcast %231 : f32 to vector<2x128xf32>
    %233 = arith.mulf %232, %219 : vector<2x128xf32>
    %234 = arith.index_cast %arg0 : i32 to index
    %c15_64 = arith.constant 15 : index
    %235 = memref.load %arg2[%234, %c15_64] : memref<2x20xf32, #tpu.memory_space<smem>>
    %236 = vector.broadcast %235 : f32 to vector<2x128xf32>
    %237 = arith.mulf %236, %219 : vector<2x128xf32>
    %c0_65 = arith.constant 0 : index
    %c0_66 = arith.constant 0 : index
    %c0_67 = arith.constant 0 : index
    %238 = vector.load %arg5[%c0_65, %c0_66, %c0_67] : memref<2x128x128xf32, #tpu.memory_space<vmem>>, vector<1x128x128xf32>
    %239 = vector.shape_cast %238 : vector<1x128x128xf32> to vector<128x128xf32>
    %cst_68 = arith.constant dense<0.000000e+00> : vector<2x128xf32>
    %240 = tpu.matmul %219, %239, %cst_68 {dimension_numbers = #tpu.dot_dimension_numbers<[1], [0], [0], [1], [0, 0, 1, 1], [], []>} : vector<2x128xf32>, vector<128x128xf32>, vector<2x128xf32> -> vector<2x128xf32>
    %241 = arith.index_cast %arg0 : i32 to index
    %c1_69 = arith.constant 1 : index
    %242 = memref.load %arg2[%241, %c1_69] : memref<2x20xf32, #tpu.memory_space<smem>>
    %243 = vector.broadcast %242 : f32 to vector<2x128xf32>
    %244 = arith.mulf %243, %240 : vector<2x128xf32>
    %245 = arith.addf %225, %244 : vector<2x128xf32>
    %246 = arith.index_cast %arg0 : i32 to index
    %c6_70 = arith.constant 6 : index
    %247 = memref.load %arg2[%246, %c6_70] : memref<2x20xf32, #tpu.memory_space<smem>>
    %248 = vector.broadcast %247 : f32 to vector<2x128xf32>
    %249 = arith.mulf %248, %240 : vector<2x128xf32>
    %250 = arith.addf %229, %249 : vector<2x128xf32>
    %251 = arith.index_cast %arg0 : i32 to index
    %c11_71 = arith.constant 11 : index
    %252 = memref.load %arg2[%251, %c11_71] : memref<2x20xf32, #tpu.memory_space<smem>>
    %253 = vector.broadcast %252 : f32 to vector<2x128xf32>
    %254 = arith.mulf %253, %240 : vector<2x128xf32>
    %255 = arith.addf %233, %254 : vector<2x128xf32>
    %256 = arith.index_cast %arg0 : i32 to index
    %c16_72 = arith.constant 16 : index
    %257 = memref.load %arg2[%256, %c16_72] : memref<2x20xf32, #tpu.memory_space<smem>>
    %258 = vector.broadcast %257 : f32 to vector<2x128xf32>
    %259 = arith.mulf %258, %240 : vector<2x128xf32>
    %260 = arith.addf %237, %259 : vector<2x128xf32>
    %cst_73 = arith.constant dense<0.000000e+00> : vector<2x128xf32>
    %261 = tpu.matmul %240, %239, %cst_73 {dimension_numbers = #tpu.dot_dimension_numbers<[1], [0], [0], [1], [0, 0, 1, 1], [], []>} : vector<2x128xf32>, vector<128x128xf32>, vector<2x128xf32> -> vector<2x128xf32>
    %cst_74 = arith.constant 2.000000e+00 : f32
    %262 = vector.broadcast %cst_74 : f32 to vector<2x128xf32>
    %263 = arith.mulf %262, %261 : vector<2x128xf32>
    %264 = arith.subf %263, %219 : vector<2x128xf32>
    %265 = arith.index_cast %arg0 : i32 to index
    %c2_75 = arith.constant 2 : index
    %266 = memref.load %arg2[%265, %c2_75] : memref<2x20xf32, #tpu.memory_space<smem>>
    %267 = vector.broadcast %266 : f32 to vector<2x128xf32>
    %268 = arith.mulf %267, %264 : vector<2x128xf32>
    %269 = arith.addf %245, %268 : vector<2x128xf32>
    %270 = arith.index_cast %arg0 : i32 to index
    %c7_76 = arith.constant 7 : index
    %271 = memref.load %arg2[%270, %c7_76] : memref<2x20xf32, #tpu.memory_space<smem>>
    %272 = vector.broadcast %271 : f32 to vector<2x128xf32>
    %273 = arith.mulf %272, %264 : vector<2x128xf32>
    %274 = arith.addf %250, %273 : vector<2x128xf32>
    %275 = arith.index_cast %arg0 : i32 to index
    %c12_77 = arith.constant 12 : index
    %276 = memref.load %arg2[%275, %c12_77] : memref<2x20xf32, #tpu.memory_space<smem>>
    %277 = vector.broadcast %276 : f32 to vector<2x128xf32>
    %278 = arith.mulf %277, %264 : vector<2x128xf32>
    %279 = arith.addf %255, %278 : vector<2x128xf32>
    %280 = arith.index_cast %arg0 : i32 to index
    %c17_78 = arith.constant 17 : index
    %281 = memref.load %arg2[%280, %c17_78] : memref<2x20xf32, #tpu.memory_space<smem>>
    %282 = vector.broadcast %281 : f32 to vector<2x128xf32>
    %283 = arith.mulf %282, %264 : vector<2x128xf32>
    %284 = arith.addf %260, %283 : vector<2x128xf32>
    %c1_79 = arith.constant 1 : index
    %c0_80 = arith.constant 0 : index
    %c0_81 = arith.constant 0 : index
    %285 = vector.load %arg5[%c1_79, %c0_80, %c0_81] : memref<2x128x128xf32, #tpu.memory_space<vmem>>, vector<1x128x128xf32>
    %286 = vector.shape_cast %285 : vector<1x128x128xf32> to vector<128x128xf32>
    %cst_82 = arith.constant dense<0.000000e+00> : vector<2x128xf32>
    %287 = tpu.matmul %240, %286, %cst_82 {dimension_numbers = #tpu.dot_dimension_numbers<[1], [0], [0], [1], [0, 0, 1, 1], [], []>} : vector<2x128xf32>, vector<128x128xf32>, vector<2x128xf32> -> vector<2x128xf32>
    %288 = arith.index_cast %arg0 : i32 to index
    %c3_83 = arith.constant 3 : index
    %289 = memref.load %arg2[%288, %c3_83] : memref<2x20xf32, #tpu.memory_space<smem>>
    %290 = vector.broadcast %289 : f32 to vector<2x128xf32>
    %291 = arith.mulf %290, %287 : vector<2x128xf32>
    %292 = arith.addf %269, %291 : vector<2x128xf32>
    %293 = arith.index_cast %arg0 : i32 to index
    %c8_84 = arith.constant 8 : index
    %294 = memref.load %arg2[%293, %c8_84] : memref<2x20xf32, #tpu.memory_space<smem>>
    %295 = vector.broadcast %294 : f32 to vector<2x128xf32>
    %296 = arith.mulf %295, %287 : vector<2x128xf32>
    %297 = arith.addf %274, %296 : vector<2x128xf32>
    %298 = arith.index_cast %arg0 : i32 to index
    %c13_85 = arith.constant 13 : index
    %299 = memref.load %arg2[%298, %c13_85] : memref<2x20xf32, #tpu.memory_space<smem>>
    %300 = vector.broadcast %299 : f32 to vector<2x128xf32>
    %301 = arith.mulf %300, %287 : vector<2x128xf32>
    %302 = arith.addf %279, %301 : vector<2x128xf32>
    %303 = arith.index_cast %arg0 : i32 to index
    %c18_86 = arith.constant 18 : index
    %304 = memref.load %arg2[%303, %c18_86] : memref<2x20xf32, #tpu.memory_space<smem>>
    %305 = vector.broadcast %304 : f32 to vector<2x128xf32>
    %306 = arith.mulf %305, %287 : vector<2x128xf32>
    %307 = arith.addf %284, %306 : vector<2x128xf32>
    %cst_87 = arith.constant dense<0.000000e+00> : vector<2x128xf32>
    %308 = tpu.matmul %287, %286, %cst_87 {dimension_numbers = #tpu.dot_dimension_numbers<[1], [0], [0], [1], [0, 0, 1, 1], [], []>} : vector<2x128xf32>, vector<128x128xf32>, vector<2x128xf32> -> vector<2x128xf32>
    %cst_88 = arith.constant 2.000000e+00 : f32
    %309 = vector.broadcast %cst_88 : f32 to vector<2x128xf32>
    %310 = arith.mulf %309, %308 : vector<2x128xf32>
    %311 = arith.subf %310, %240 : vector<2x128xf32>
    %312 = arith.index_cast %arg0 : i32 to index
    %c4_89 = arith.constant 4 : index
    %313 = memref.load %arg2[%312, %c4_89] : memref<2x20xf32, #tpu.memory_space<smem>>
    %314 = vector.broadcast %313 : f32 to vector<2x128xf32>
    %315 = arith.mulf %314, %311 : vector<2x128xf32>
    %316 = arith.addf %292, %315 : vector<2x128xf32>
    %317 = arith.index_cast %arg0 : i32 to index
    %c9_90 = arith.constant 9 : index
    %318 = memref.load %arg2[%317, %c9_90] : memref<2x20xf32, #tpu.memory_space<smem>>
    %319 = vector.broadcast %318 : f32 to vector<2x128xf32>
    %320 = arith.mulf %319, %311 : vector<2x128xf32>
    %321 = arith.addf %297, %320 : vector<2x128xf32>
    %322 = arith.index_cast %arg0 : i32 to index
    %c14_91 = arith.constant 14 : index
    %323 = memref.load %arg2[%322, %c14_91] : memref<2x20xf32, #tpu.memory_space<smem>>
    %324 = vector.broadcast %323 : f32 to vector<2x128xf32>
    %325 = arith.mulf %324, %311 : vector<2x128xf32>
    %326 = arith.addf %302, %325 : vector<2x128xf32>
    %327 = arith.index_cast %arg0 : i32 to index
    %c19_92 = arith.constant 19 : index
    %328 = memref.load %arg2[%327, %c19_92] : memref<2x20xf32, #tpu.memory_space<smem>>
    %329 = vector.broadcast %328 : f32 to vector<2x128xf32>
    %330 = arith.mulf %329, %311 : vector<2x128xf32>
    %331 = arith.addf %307, %330 : vector<2x128xf32>
    %332 = tpu.concatenate %316, %321, %326, %331 in 0 : vector<2x128xf32>, vector<2x128xf32>, vector<2x128xf32>, vector<2x128xf32> -> vector<8x128xf32>
    %333 = vector.shape_cast %332 : vector<8x128xf32> to vector<2x512xf32>
    %c0_93 = arith.constant 0 : index
    %c0_94 = arith.constant 0 : index
    %334 = vector.load %arg6[%c0_93, %c0_94] : memref<512x256xf32, #tpu.memory_space<vmem>>, vector<512x256xf32>
    %cst_95 = arith.constant dense<0.000000e+00> : vector<2x256xf32>
    %335 = tpu.matmul %333, %334, %cst_95 {dimension_numbers = #tpu.dot_dimension_numbers<[1], [0], [0], [1], [0, 0, 1, 1], [], []>} : vector<2x512xf32>, vector<512x256xf32>, vector<2x256xf32> -> vector<2x256xf32>
    %336 = vector.shape_cast %335 : vector<2x256xf32> to vector<2x2x128xf32>
    %337 = vector.extract_strided_slice %336 {offsets = [0, 0, 0], sizes = [1, 2, 128], strides = [1, 1, 1]} : vector<2x2x128xf32> to vector<1x2x128xf32>
    %338 = vector.shape_cast %337 : vector<1x2x128xf32> to vector<2x128xf32>
    %339 = vector.extract_strided_slice %221 {offsets = [0, 0], sizes = [2, 128], strides = [1, 1]} : vector<4x128xf32> to vector<2x128xf32>
    %340 = arith.addf %338, %339 : vector<2x128xf32>
    %341 = arith.negf %340 : vector<2x128xf32>
    %342 = math.exp %341 : vector<2x128xf32>
    %cst_96 = arith.constant 1.000000e+00 : f32
    %343 = vector.broadcast %cst_96 : f32 to vector<2x128xf32>
    %344 = arith.addf %343, %342 : vector<2x128xf32>
    %345 = arith.divf %343, %344 : vector<2x128xf32>
    %346 = vector.extract_strided_slice %336 {offsets = [1, 0, 0], sizes = [1, 2, 128], strides = [1, 1, 1]} : vector<2x2x128xf32> to vector<1x2x128xf32>
    %347 = vector.shape_cast %346 : vector<1x2x128xf32> to vector<2x128xf32>
    %348 = vector.extract_strided_slice %221 {offsets = [2, 0], sizes = [2, 128], strides = [1, 1]} : vector<4x128xf32> to vector<2x128xf32>
    %349 = arith.addf %347, %348 : vector<2x128xf32>
    %350 = arith.negf %349 : vector<2x128xf32>
    %351 = math.exp %350 : vector<2x128xf32>
    %cst_97 = arith.constant 1.000000e+00 : f32
    %352 = vector.broadcast %cst_97 : f32 to vector<2x128xf32>
    %353 = arith.addf %352, %351 : vector<2x128xf32>
    %354 = arith.divf %352, %353 : vector<2x128xf32>
    %355 = arith.mulf %345, %219 : vector<2x128xf32>
    %356 = arith.index_cast %arg0 : i32 to index
    %c10_98 = arith.constant 10 : index
    %357 = memref.load %arg2[%356, %c10_98] : memref<2x20xf32, #tpu.memory_space<smem>>
    %358 = vector.broadcast %357 : f32 to vector<2x128xf32>
    %359 = arith.mulf %358, %355 : vector<2x128xf32>
    %360 = arith.index_cast %arg0 : i32 to index
    %c15_99 = arith.constant 15 : index
    %361 = memref.load %arg2[%360, %c15_99] : memref<2x20xf32, #tpu.memory_space<smem>>
    %362 = vector.broadcast %361 : f32 to vector<2x128xf32>
    %363 = arith.mulf %362, %355 : vector<2x128xf32>
    %c0_100 = arith.constant 0 : index
    %c0_101 = arith.constant 0 : index
    %c0_102 = arith.constant 0 : index
    %364 = vector.load %arg5[%c0_100, %c0_101, %c0_102] : memref<2x128x128xf32, #tpu.memory_space<vmem>>, vector<1x128x128xf32>
    %365 = vector.shape_cast %364 : vector<1x128x128xf32> to vector<128x128xf32>
    %cst_103 = arith.constant dense<0.000000e+00> : vector<2x128xf32>
    %366 = tpu.matmul %355, %365, %cst_103 {dimension_numbers = #tpu.dot_dimension_numbers<[1], [0], [0], [1], [0, 0, 1, 1], [], []>} : vector<2x128xf32>, vector<128x128xf32>, vector<2x128xf32> -> vector<2x128xf32>
    %367 = arith.index_cast %arg0 : i32 to index
    %c11_104 = arith.constant 11 : index
    %368 = memref.load %arg2[%367, %c11_104] : memref<2x20xf32, #tpu.memory_space<smem>>
    %369 = vector.broadcast %368 : f32 to vector<2x128xf32>
    %370 = arith.mulf %369, %366 : vector<2x128xf32>
    %371 = arith.addf %359, %370 : vector<2x128xf32>
    %372 = arith.index_cast %arg0 : i32 to index
    %c16_105 = arith.constant 16 : index
    %373 = memref.load %arg2[%372, %c16_105] : memref<2x20xf32, #tpu.memory_space<smem>>
    %374 = vector.broadcast %373 : f32 to vector<2x128xf32>
    %375 = arith.mulf %374, %366 : vector<2x128xf32>
    %376 = arith.addf %363, %375 : vector<2x128xf32>
    %cst_106 = arith.constant dense<0.000000e+00> : vector<2x128xf32>
    %377 = tpu.matmul %366, %365, %cst_106 {dimension_numbers = #tpu.dot_dimension_numbers<[1], [0], [0], [1], [0, 0, 1, 1], [], []>} : vector<2x128xf32>, vector<128x128xf32>, vector<2x128xf32> -> vector<2x128xf32>
    %cst_107 = arith.constant 2.000000e+00 : f32
    %378 = vector.broadcast %cst_107 : f32 to vector<2x128xf32>
    %379 = arith.mulf %378, %377 : vector<2x128xf32>
    %380 = arith.subf %379, %355 : vector<2x128xf32>
    %381 = arith.index_cast %arg0 : i32 to index
    %c12_108 = arith.constant 12 : index
    %382 = memref.load %arg2[%381, %c12_108] : memref<2x20xf32, #tpu.memory_space<smem>>
    %383 = vector.broadcast %382 : f32 to vector<2x128xf32>
    %384 = arith.mulf %383, %380 : vector<2x128xf32>
    %385 = arith.addf %371, %384 : vector<2x128xf32>
    %386 = arith.index_cast %arg0 : i32 to index
    %c17_109 = arith.constant 17 : index
    %387 = memref.load %arg2[%386, %c17_109] : memref<2x20xf32, #tpu.memory_space<smem>>
    %388 = vector.broadcast %387 : f32 to vector<2x128xf32>
    %389 = arith.mulf %388, %380 : vector<2x128xf32>
    %390 = arith.addf %376, %389 : vector<2x128xf32>
    %c1_110 = arith.constant 1 : index
    %c0_111 = arith.constant 0 : index
    %c0_112 = arith.constant 0 : index
    %391 = vector.load %arg5[%c1_110, %c0_111, %c0_112] : memref<2x128x128xf32, #tpu.memory_space<vmem>>, vector<1x128x128xf32>
    %392 = vector.shape_cast %391 : vector<1x128x128xf32> to vector<128x128xf32>
    %cst_113 = arith.constant dense<0.000000e+00> : vector<2x128xf32>
    %393 = tpu.matmul %366, %392, %cst_113 {dimension_numbers = #tpu.dot_dimension_numbers<[1], [0], [0], [1], [0, 0, 1, 1], [], []>} : vector<2x128xf32>, vector<128x128xf32>, vector<2x128xf32> -> vector<2x128xf32>
    %394 = arith.index_cast %arg0 : i32 to index
    %c13_114 = arith.constant 13 : index
    %395 = memref.load %arg2[%394, %c13_114] : memref<2x20xf32, #tpu.memory_space<smem>>
    %396 = vector.broadcast %395 : f32 to vector<2x128xf32>
    %397 = arith.mulf %396, %393 : vector<2x128xf32>
    %398 = arith.addf %385, %397 : vector<2x128xf32>
    %399 = arith.index_cast %arg0 : i32 to index
    %c18_115 = arith.constant 18 : index
    %400 = memref.load %arg2[%399, %c18_115] : memref<2x20xf32, #tpu.memory_space<smem>>
    %401 = vector.broadcast %400 : f32 to vector<2x128xf32>
    %402 = arith.mulf %401, %393 : vector<2x128xf32>
    %403 = arith.addf %390, %402 : vector<2x128xf32>
    %cst_116 = arith.constant dense<0.000000e+00> : vector<2x128xf32>
    %404 = tpu.matmul %393, %392, %cst_116 {dimension_numbers = #tpu.dot_dimension_numbers<[1], [0], [0], [1], [0, 0, 1, 1], [], []>} : vector<2x128xf32>, vector<128x128xf32>, vector<2x128xf32> -> vector<2x128xf32>
    %cst_117 = arith.constant 2.000000e+00 : f32
    %405 = vector.broadcast %cst_117 : f32 to vector<2x128xf32>
    %406 = arith.mulf %405, %404 : vector<2x128xf32>
    %407 = arith.subf %406, %366 : vector<2x128xf32>
    %408 = arith.index_cast %arg0 : i32 to index
    %c14_118 = arith.constant 14 : index
    %409 = memref.load %arg2[%408, %c14_118] : memref<2x20xf32, #tpu.memory_space<smem>>
    %410 = vector.broadcast %409 : f32 to vector<2x128xf32>
    %411 = arith.mulf %410, %407 : vector<2x128xf32>
    %412 = arith.addf %398, %411 : vector<2x128xf32>
    %413 = arith.index_cast %arg0 : i32 to index
    %c19_119 = arith.constant 19 : index
    %414 = memref.load %arg2[%413, %c19_119] : memref<2x20xf32, #tpu.memory_space<smem>>
    %415 = vector.broadcast %414 : f32 to vector<2x128xf32>
    %416 = arith.mulf %415, %407 : vector<2x128xf32>
    %417 = arith.addf %403, %416 : vector<2x128xf32>
    %418 = tpu.concatenate %412, %417 in 0 : vector<2x128xf32>, vector<2x128xf32> -> vector<4x128xf32>
    %419 = vector.shape_cast %418 : vector<4x128xf32> to vector<1x512xf32>
    %c0_120 = arith.constant 0 : index
    %c0_121 = arith.constant 0 : index
    %420 = vector.load %arg6[%c0_120, %c0_121] : memref<512x256xf32, #tpu.memory_space<vmem>>, vector<512x256xf32>
    %cst_122 = arith.constant dense<0.000000e+00> : vector<1x256xf32>
    %421 = tpu.matmul %419, %420, %cst_122 {dimension_numbers = #tpu.dot_dimension_numbers<[1], [0], [0], [1], [0, 0, 1, 1], [], []>} : vector<1x512xf32>, vector<512x256xf32>, vector<1x256xf32> -> vector<1x256xf32>
    %422 = vector.shape_cast %421 : vector<1x256xf32> to vector<2x128xf32>
    %423 = vector.extract_strided_slice %221 {offsets = [2, 0], sizes = [2, 128], strides = [1, 1]} : vector<4x128xf32> to vector<2x128xf32>
    %424 = arith.addf %422, %423 : vector<2x128xf32>
    %425 = math.tanh %424 : vector<2x128xf32>
    %426 = arith.mulf %354, %219 : vector<2x128xf32>
    %cst_123 = arith.constant 1.000000e+00 : f32
    %427 = vector.broadcast %cst_123 : f32 to vector<2x128xf32>
    %428 = arith.subf %427, %354 : vector<2x128xf32>
    %429 = arith.mulf %428, %425 : vector<2x128xf32>
    %430 = arith.addf %426, %429 : vector<2x128xf32>
    %c0_124 = arith.constant 0 : index
    %c0_125 = arith.constant 0 : index
    %431 = vector.load %arg8[%c0_124, %c0_125] : memref<2x128xf32, #tpu.memory_space<vmem>>, vector<2x128xf32>
    tpu.vector_store %arg8[%c0_124, %c0_125], %430 {strides = array<i32>} : memref<2x128xf32, #tpu.memory_space<vmem>>, vector<2x128xf32>,
    %c0_126 = arith.constant 0 : index
    %c1_127 = arith.constant 1 : index
    %c0_128 = arith.constant 0 : index
    %c0_129 = arith.constant 0 : index
    %432 = vector.load %arg7[%c0_126, %c1_127, %c0_128, %c0_129] : memref<1x4x2x128xf32, #tpu.memory_space<vmem>>, vector<1x1x2x128xf32>
    %433 = vector.shape_cast %432 : vector<1x1x2x128xf32> to vector<2x128xf32>
    %434 = vector.shape_cast %430 : vector<2x128xf32> to vector<1x1x2x128xf32>
    tpu.vector_store %arg7[%c0_126, %c1_127, %c0_128, %c0_129], %434 {strides = array<i32>} : memref<1x4x2x128xf32, #tpu.memory_space<vmem>>, vector<1x1x2x128xf32>,
    %c0_130 = arith.constant 0 : index
    %c0_131 = arith.constant 0 : index
    %435 = vector.load %arg8[%c0_130, %c0_131] : memref<2x128xf32, #tpu.memory_space<vmem>>, vector<2x128xf32>
    %c0_132 = arith.constant 0 : index
    %c2_133 = arith.constant 2 : index
    %c0_134 = arith.constant 0 : index
    %c0_135 = arith.constant 0 : index
    %436 = vector.load %arg3[%c0_132, %c2_133, %c0_134, %c0_135] : memref<1x4x4x128xf32, #tpu.memory_space<vmem>>, vector<1x1x4x128xf32>
    %437 = vector.shape_cast %436 : vector<1x1x4x128xf32> to vector<4x128xf32>
    %438 = arith.index_cast %arg0 : i32 to index
    %c0_136 = arith.constant 0 : index
    %439 = memref.load %arg2[%438, %c0_136] : memref<2x20xf32, #tpu.memory_space<smem>>
    %440 = vector.broadcast %439 : f32 to vector<2x128xf32>
    %441 = arith.mulf %440, %435 : vector<2x128xf32>
    %442 = arith.index_cast %arg0 : i32 to index
    %c5_137 = arith.constant 5 : index
    %443 = memref.load %arg2[%442, %c5_137] : memref<2x20xf32, #tpu.memory_space<smem>>
    %444 = vector.broadcast %443 : f32 to vector<2x128xf32>
    %445 = arith.mulf %444, %435 : vector<2x128xf32>
    %446 = arith.index_cast %arg0 : i32 to index
    %c10_138 = arith.constant 10 : index
    %447 = memref.load %arg2[%446, %c10_138] : memref<2x20xf32, #tpu.memory_space<smem>>
    %448 = vector.broadcast %447 : f32 to vector<2x128xf32>
    %449 = arith.mulf %448, %435 : vector<2x128xf32>
    %450 = arith.index_cast %arg0 : i32 to index
    %c15_139 = arith.constant 15 : index
    %451 = memref.load %arg2[%450, %c15_139] : memref<2x20xf32, #tpu.memory_space<smem>>
    %452 = vector.broadcast %451 : f32 to vector<2x128xf32>
    %453 = arith.mulf %452, %435 : vector<2x128xf32>
    %c0_140 = arith.constant 0 : index
    %c0_141 = arith.constant 0 : index
    %c0_142 = arith.constant 0 : index
    %454 = vector.load %arg5[%c0_140, %c0_141, %c0_142] : memref<2x128x128xf32, #tpu.memory_space<vmem>>, vector<1x128x128xf32>
    %455 = vector.shape_cast %454 : vector<1x128x128xf32> to vector<128x128xf32>
    %cst_143 = arith.constant dense<0.000000e+00> : vector<2x128xf32>
    %456 = tpu.matmul %435, %455, %cst_143 {dimension_numbers = #tpu.dot_dimension_numbers<[1], [0], [0], [1], [0, 0, 1, 1], [], []>} : vector<2x128xf32>, vector<128x128xf32>, vector<2x128xf32> -> vector<2x128xf32>
    %457 = arith.index_cast %arg0 : i32 to index
    %c1_144 = arith.constant 1 : index
    %458 = memref.load %arg2[%457, %c1_144] : memref<2x20xf32, #tpu.memory_space<smem>>
    %459 = vector.broadcast %458 : f32 to vector<2x128xf32>
    %460 = arith.mulf %459, %456 : vector<2x128xf32>
    %461 = arith.addf %441, %460 : vector<2x128xf32>
    %462 = arith.index_cast %arg0 : i32 to index
    %c6_145 = arith.constant 6 : index
    %463 = memref.load %arg2[%462, %c6_145] : memref<2x20xf32, #tpu.memory_space<smem>>
    %464 = vector.broadcast %463 : f32 to vector<2x128xf32>
    %465 = arith.mulf %464, %456 : vector<2x128xf32>
    %466 = arith.addf %445, %465 : vector<2x128xf32>
    %467 = arith.index_cast %arg0 : i32 to index
    %c11_146 = arith.constant 11 : index
    %468 = memref.load %arg2[%467, %c11_146] : memref<2x20xf32, #tpu.memory_space<smem>>
    %469 = vector.broadcast %468 : f32 to vector<2x128xf32>
    %470 = arith.mulf %469, %456 : vector<2x128xf32>
    %471 = arith.addf %449, %470 : vector<2x128xf32>
    %472 = arith.index_cast %arg0 : i32 to index
    %c16_147 = arith.constant 16 : index
    %473 = memref.load %arg2[%472, %c16_147] : memref<2x20xf32, #tpu.memory_space<smem>>
    %474 = vector.broadcast %473 : f32 to vector<2x128xf32>
    %475 = arith.mulf %474, %456 : vector<2x128xf32>
    %476 = arith.addf %453, %475 : vector<2x128xf32>
    %cst_148 = arith.constant dense<0.000000e+00> : vector<2x128xf32>
    %477 = tpu.matmul %456, %455, %cst_148 {dimension_numbers = #tpu.dot_dimension_numbers<[1], [0], [0], [1], [0, 0, 1, 1], [], []>} : vector<2x128xf32>, vector<128x128xf32>, vector<2x128xf32> -> vector<2x128xf32>
    %cst_149 = arith.constant 2.000000e+00 : f32
    %478 = vector.broadcast %cst_149 : f32 to vector<2x128xf32>
    %479 = arith.mulf %478, %477 : vector<2x128xf32>
    %480 = arith.subf %479, %435 : vector<2x128xf32>
    %481 = arith.index_cast %arg0 : i32 to index
    %c2_150 = arith.constant 2 : index
    %482 = memref.load %arg2[%481, %c2_150] : memref<2x20xf32, #tpu.memory_space<smem>>
    %483 = vector.broadcast %482 : f32 to vector<2x128xf32>
    %484 = arith.mulf %483, %480 : vector<2x128xf32>
    %485 = arith.addf %461, %484 : vector<2x128xf32>
    %486 = arith.index_cast %arg0 : i32 to index
    %c7_151 = arith.constant 7 : index
    %487 = memref.load %arg2[%486, %c7_151] : memref<2x20xf32, #tpu.memory_space<smem>>
    %488 = vector.broadcast %487 : f32 to vector<2x128xf32>
    %489 = arith.mulf %488, %480 : vector<2x128xf32>
    %490 = arith.addf %466, %489 : vector<2x128xf32>
    %491 = arith.index_cast %arg0 : i32 to index
    %c12_152 = arith.constant 12 : index
    %492 = memref.load %arg2[%491, %c12_152] : memref<2x20xf32, #tpu.memory_space<smem>>
    %493 = vector.broadcast %492 : f32 to vector<2x128xf32>
    %494 = arith.mulf %493, %480 : vector<2x128xf32>
    %495 = arith.addf %471, %494 : vector<2x128xf32>
    %496 = arith.index_cast %arg0 : i32 to index
    %c17_153 = arith.constant 17 : index
    %497 = memref.load %arg2[%496, %c17_153] : memref<2x20xf32, #tpu.memory_space<smem>>
    %498 = vector.broadcast %497 : f32 to vector<2x128xf32>
    %499 = arith.mulf %498, %480 : vector<2x128xf32>
    %500 = arith.addf %476, %499 : vector<2x128xf32>
    %c1_154 = arith.constant 1 : index
    %c0_155 = arith.constant 0 : index
    %c0_156 = arith.constant 0 : index
    %501 = vector.load %arg5[%c1_154, %c0_155, %c0_156] : memref<2x128x128xf32, #tpu.memory_space<vmem>>, vector<1x128x128xf32>
    %502 = vector.shape_cast %501 : vector<1x128x128xf32> to vector<128x128xf32>
    %cst_157 = arith.constant dense<0.000000e+00> : vector<2x128xf32>
    %503 = tpu.matmul %456, %502, %cst_157 {dimension_numbers = #tpu.dot_dimension_numbers<[1], [0], [0], [1], [0, 0, 1, 1], [], []>} : vector<2x128xf32>, vector<128x128xf32>, vector<2x128xf32> -> vector<2x128xf32>
    %504 = arith.index_cast %arg0 : i32 to index
    %c3_158 = arith.constant 3 : index
    %505 = memref.load %arg2[%504, %c3_158] : memref<2x20xf32, #tpu.memory_space<smem>>
    %506 = vector.broadcast %505 : f32 to vector<2x128xf32>
    %507 = arith.mulf %506, %503 : vector<2x128xf32>
    %508 = arith.addf %485, %507 : vector<2x128xf32>
    %509 = arith.index_cast %arg0 : i32 to index
    %c8_159 = arith.constant 8 : index
    %510 = memref.load %arg2[%509, %c8_159] : memref<2x20xf32, #tpu.memory_space<smem>>
    %511 = vector.broadcast %510 : f32 to vector<2x128xf32>
    %512 = arith.mulf %511, %503 : vector<2x128xf32>
    %513 = arith.addf %490, %512 : vector<2x128xf32>
    %514 = arith.index_cast %arg0 : i32 to index
    %c13_160 = arith.constant 13 : index
    %515 = memref.load %arg2[%514, %c13_160] : memref<2x20xf32, #tpu.memory_space<smem>>
    %516 = vector.broadcast %515 : f32 to vector<2x128xf32>
    %517 = arith.mulf %516, %503 : vector<2x128xf32>
    %518 = arith.addf %495, %517 : vector<2x128xf32>
    %519 = arith.index_cast %arg0 : i32 to index
    %c18_161 = arith.constant 18 : index
    %520 = memref.load %arg2[%519, %c18_161] : memref<2x20xf32, #tpu.memory_space<smem>>
    %521 = vector.broadcast %520 : f32 to vector<2x128xf32>
    %522 = arith.mulf %521, %503 : vector<2x128xf32>
    %523 = arith.addf %500, %522 : vector<2x128xf32>
    %cst_162 = arith.constant dense<0.000000e+00> : vector<2x128xf32>
    %524 = tpu.matmul %503, %502, %cst_162 {dimension_numbers = #tpu.dot_dimension_numbers<[1], [0], [0], [1], [0, 0, 1, 1], [], []>} : vector<2x128xf32>, vector<128x128xf32>, vector<2x128xf32> -> vector<2x128xf32>
    %cst_163 = arith.constant 2.000000e+00 : f32
    %525 = vector.broadcast %cst_163 : f32 to vector<2x128xf32>
    %526 = arith.mulf %525, %524 : vector<2x128xf32>
    %527 = arith.subf %526, %456 : vector<2x128xf32>
    %528 = arith.index_cast %arg0 : i32 to index
    %c4_164 = arith.constant 4 : index
    %529 = memref.load %arg2[%528, %c4_164] : memref<2x20xf32, #tpu.memory_space<smem>>
    %530 = vector.broadcast %529 : f32 to vector<2x128xf32>
    %531 = arith.mulf %530, %527 : vector<2x128xf32>
    %532 = arith.addf %508, %531 : vector<2x128xf32>
    %533 = arith.index_cast %arg0 : i32 to index
    %c9_165 = arith.constant 9 : index
    %534 = memref.load %arg2[%533, %c9_165] : memref<2x20xf32, #tpu.memory_space<smem>>
    %535 = vector.broadcast %534 : f32 to vector<2x128xf32>
    %536 = arith.mulf %535, %527 : vector<2x128xf32>
    %537 = arith.addf %513, %536 : vector<2x128xf32>
    %538 = arith.index_cast %arg0 : i32 to index
    %c14_166 = arith.constant 14 : index
    %539 = memref.load %arg2[%538, %c14_166] : memref<2x20xf32, #tpu.memory_space<smem>>
    %540 = vector.broadcast %539 : f32 to vector<2x128xf32>
    %541 = arith.mulf %540, %527 : vector<2x128xf32>
    %542 = arith.addf %518, %541 : vector<2x128xf32>
    %543 = arith.index_cast %arg0 : i32 to index
    %c19_167 = arith.constant 19 : index
    %544 = memref.load %arg2[%543, %c19_167] : memref<2x20xf32, #tpu.memory_space<smem>>
    %545 = vector.broadcast %544 : f32 to vector<2x128xf32>
    %546 = arith.mulf %545, %527 : vector<2x128xf32>
    %547 = arith.addf %523, %546 : vector<2x128xf32>
    %548 = tpu.concatenate %532, %537, %542, %547 in 0 : vector<2x128xf32>, vector<2x128xf32>, vector<2x128xf32>, vector<2x128xf32> -> vector<8x128xf32>
    %549 = vector.shape_cast %548 : vector<8x128xf32> to vector<2x512xf32>
    %c0_168 = arith.constant 0 : index
    %c0_169 = arith.constant 0 : index
    %550 = vector.load %arg6[%c0_168, %c0_169] : memref<512x256xf32, #tpu.memory_space<vmem>>, vector<512x256xf32>
    %cst_170 = arith.constant dense<0.000000e+00> : vector<2x256xf32>
    %551 = tpu.matmul %549, %550, %cst_170 {dimension_numbers = #tpu.dot_dimension_numbers<[1], [0], [0], [1], [0, 0, 1, 1], [], []>} : vector<2x512xf32>, vector<512x256xf32>, vector<2x256xf32> -> vector<2x256xf32>
    %552 = vector.shape_cast %551 : vector<2x256xf32> to vector<2x2x128xf32>
    %553 = vector.extract_strided_slice %552 {offsets = [0, 0, 0], sizes = [1, 2, 128], strides = [1, 1, 1]} : vector<2x2x128xf32> to vector<1x2x128xf32>
    %554 = vector.shape_cast %553 : vector<1x2x128xf32> to vector<2x128xf32>
    %555 = vector.extract_strided_slice %437 {offsets = [0, 0], sizes = [2, 128], strides = [1, 1]} : vector<4x128xf32> to vector<2x128xf32>
    %556 = arith.addf %554, %555 : vector<2x128xf32>
    %557 = arith.negf %556 : vector<2x128xf32>
    %558 = math.exp %557 : vector<2x128xf32>
    %cst_171 = arith.constant 1.000000e+00 : f32
    %559 = vector.broadcast %cst_171 : f32 to vector<2x128xf32>
    %560 = arith.addf %559, %558 : vector<2x128xf32>
    %561 = arith.divf %559, %560 : vector<2x128xf32>
    %562 = vector.extract_strided_slice %552 {offsets = [1, 0, 0], sizes = [1, 2, 128], strides = [1, 1, 1]} : vector<2x2x128xf32> to vector<1x2x128xf32>
    %563 = vector.shape_cast %562 : vector<1x2x128xf32> to vector<2x128xf32>
    %564 = vector.extract_strided_slice %437 {offsets = [2, 0], sizes = [2, 128], strides = [1, 1]} : vector<4x128xf32> to vector<2x128xf32>
    %565 = arith.addf %563, %564 : vector<2x128xf32>
    %566 = arith.negf %565 : vector<2x128xf32>
    %567 = math.exp %566 : vector<2x128xf32>
    %cst_172 = arith.constant 1.000000e+00 : f32
    %568 = vector.broadcast %cst_172 : f32 to vector<2x128xf32>
    %569 = arith.addf %568, %567 : vector<2x128xf32>
    %570 = arith.divf %568, %569 : vector<2x128xf32>
    %571 = arith.mulf %561, %435 : vector<2x128xf32>
    %572 = arith.index_cast %arg0 : i32 to index
    %c10_173 = arith.constant 10 : index
    %573 = memref.load %arg2[%572, %c10_173] : memref<2x20xf32, #tpu.memory_space<smem>>
    %574 = vector.broadcast %573 : f32 to vector<2x128xf32>
    %575 = arith.mulf %574, %571 : vector<2x128xf32>
    %576 = arith.index_cast %arg0 : i32 to index
    %c15_174 = arith.constant 15 : index
    %577 = memref.load %arg2[%576, %c15_174] : memref<2x20xf32, #tpu.memory_space<smem>>
    %578 = vector.broadcast %577 : f32 to vector<2x128xf32>
    %579 = arith.mulf %578, %571 : vector<2x128xf32>
    %c0_175 = arith.constant 0 : index
    %c0_176 = arith.constant 0 : index
    %c0_177 = arith.constant 0 : index
    %580 = vector.load %arg5[%c0_175, %c0_176, %c0_177] : memref<2x128x128xf32, #tpu.memory_space<vmem>>, vector<1x128x128xf32>
    %581 = vector.shape_cast %580 : vector<1x128x128xf32> to vector<128x128xf32>
    %cst_178 = arith.constant dense<0.000000e+00> : vector<2x128xf32>
    %582 = tpu.matmul %571, %581, %cst_178 {dimension_numbers = #tpu.dot_dimension_numbers<[1], [0], [0], [1], [0, 0, 1, 1], [], []>} : vector<2x128xf32>, vector<128x128xf32>, vector<2x128xf32> -> vector<2x128xf32>
    %583 = arith.index_cast %arg0 : i32 to index
    %c11_179 = arith.constant 11 : index
    %584 = memref.load %arg2[%583, %c11_179] : memref<2x20xf32, #tpu.memory_space<smem>>
    %585 = vector.broadcast %584 : f32 to vector<2x128xf32>
    %586 = arith.mulf %585, %582 : vector<2x128xf32>
    %587 = arith.addf %575, %586 : vector<2x128xf32>
    %588 = arith.index_cast %arg0 : i32 to index
    %c16_180 = arith.constant 16 : index
    %589 = memref.load %arg2[%588, %c16_180] : memref<2x20xf32, #tpu.memory_space<smem>>
    %590 = vector.broadcast %589 : f32 to vector<2x128xf32>
    %591 = arith.mulf %590, %582 : vector<2x128xf32>
    %592 = arith.addf %579, %591 : vector<2x128xf32>
    %cst_181 = arith.constant dense<0.000000e+00> : vector<2x128xf32>
    %593 = tpu.matmul %582, %581, %cst_181 {dimension_numbers = #tpu.dot_dimension_numbers<[1], [0], [0], [1], [0, 0, 1, 1], [], []>} : vector<2x128xf32>, vector<128x128xf32>, vector<2x128xf32> -> vector<2x128xf32>
    %cst_182 = arith.constant 2.000000e+00 : f32
    %594 = vector.broadcast %cst_182 : f32 to vector<2x128xf32>
    %595 = arith.mulf %594, %593 : vector<2x128xf32>
    %596 = arith.subf %595, %571 : vector<2x128xf32>
    %597 = arith.index_cast %arg0 : i32 to index
    %c12_183 = arith.constant 12 : index
    %598 = memref.load %arg2[%597, %c12_183] : memref<2x20xf32, #tpu.memory_space<smem>>
    %599 = vector.broadcast %598 : f32 to vector<2x128xf32>
    %600 = arith.mulf %599, %596 : vector<2x128xf32>
    %601 = arith.addf %587, %600 : vector<2x128xf32>
    %602 = arith.index_cast %arg0 : i32 to index
    %c17_184 = arith.constant 17 : index
    %603 = memref.load %arg2[%602, %c17_184] : memref<2x20xf32, #tpu.memory_space<smem>>
    %604 = vector.broadcast %603 : f32 to vector<2x128xf32>
    %605 = arith.mulf %604, %596 : vector<2x128xf32>
    %606 = arith.addf %592, %605 : vector<2x128xf32>
    %c1_185 = arith.constant 1 : index
    %c0_186 = arith.constant 0 : index
    %c0_187 = arith.constant 0 : index
    %607 = vector.load %arg5[%c1_185, %c0_186, %c0_187] : memref<2x128x128xf32, #tpu.memory_space<vmem>>, vector<1x128x128xf32>
    %608 = vector.shape_cast %607 : vector<1x128x128xf32> to vector<128x128xf32>
    %cst_188 = arith.constant dense<0.000000e+00> : vector<2x128xf32>
    %609 = tpu.matmul %582, %608, %cst_188 {dimension_numbers = #tpu.dot_dimension_numbers<[1], [0], [0], [1], [0, 0, 1, 1], [], []>} : vector<2x128xf32>, vector<128x128xf32>, vector<2x128xf32> -> vector<2x128xf32>
    %610 = arith.index_cast %arg0 : i32 to index
    %c13_189 = arith.constant 13 : index
    %611 = memref.load %arg2[%610, %c13_189] : memref<2x20xf32, #tpu.memory_space<smem>>
    %612 = vector.broadcast %611 : f32 to vector<2x128xf32>
    %613 = arith.mulf %612, %609 : vector<2x128xf32>
    %614 = arith.addf %601, %613 : vector<2x128xf32>
    %615 = arith.index_cast %arg0 : i32 to index
    %c18_190 = arith.constant 18 : index
    %616 = memref.load %arg2[%615, %c18_190] : memref<2x20xf32, #tpu.memory_space<smem>>
    %617 = vector.broadcast %616 : f32 to vector<2x128xf32>
    %618 = arith.mulf %617, %609 : vector<2x128xf32>
    %619 = arith.addf %606, %618 : vector<2x128xf32>
    %cst_191 = arith.constant dense<0.000000e+00> : vector<2x128xf32>
    %620 = tpu.matmul %609, %608, %cst_191 {dimension_numbers = #tpu.dot_dimension_numbers<[1], [0], [0], [1], [0, 0, 1, 1], [], []>} : vector<2x128xf32>, vector<128x128xf32>, vector<2x128xf32> -> vector<2x128xf32>
    %cst_192 = arith.constant 2.000000e+00 : f32
    %621 = vector.broadcast %cst_192 : f32 to vector<2x128xf32>
    %622 = arith.mulf %621, %620 : vector<2x128xf32>
    %623 = arith.subf %622, %582 : vector<2x128xf32>
    %624 = arith.index_cast %arg0 : i32 to index
    %c14_193 = arith.constant 14 : index
    %625 = memref.load %arg2[%624, %c14_193] : memref<2x20xf32, #tpu.memory_space<smem>>
    %626 = vector.broadcast %625 : f32 to vector<2x128xf32>
    %627 = arith.mulf %626, %623 : vector<2x128xf32>
    %628 = arith.addf %614, %627 : vector<2x128xf32>
    %629 = arith.index_cast %arg0 : i32 to index
    %c19_194 = arith.constant 19 : index
    %630 = memref.load %arg2[%629, %c19_194] : memref<2x20xf32, #tpu.memory_space<smem>>
    %631 = vector.broadcast %630 : f32 to vector<2x128xf32>
    %632 = arith.mulf %631, %623 : vector<2x128xf32>
    %633 = arith.addf %619, %632 : vector<2x128xf32>
    %634 = tpu.concatenate %628, %633 in 0 : vector<2x128xf32>, vector<2x128xf32> -> vector<4x128xf32>
    %635 = vector.shape_cast %634 : vector<4x128xf32> to vector<1x512xf32>
    %c0_195 = arith.constant 0 : index
    %c0_196 = arith.constant 0 : index
    %636 = vector.load %arg6[%c0_195, %c0_196] : memref<512x256xf32, #tpu.memory_space<vmem>>, vector<512x256xf32>
    %cst_197 = arith.constant dense<0.000000e+00> : vector<1x256xf32>
    %637 = tpu.matmul %635, %636, %cst_197 {dimension_numbers = #tpu.dot_dimension_numbers<[1], [0], [0], [1], [0, 0, 1, 1], [], []>} : vector<1x512xf32>, vector<512x256xf32>, vector<1x256xf32> -> vector<1x256xf32>
    %638 = vector.shape_cast %637 : vector<1x256xf32> to vector<2x128xf32>
    %639 = vector.extract_strided_slice %437 {offsets = [2, 0], sizes = [2, 128], strides = [1, 1]} : vector<4x128xf32> to vector<2x128xf32>
    %640 = arith.addf %638, %639 : vector<2x128xf32>
    %641 = math.tanh %640 : vector<2x128xf32>
    %642 = arith.mulf %570, %435 : vector<2x128xf32>
    %cst_198 = arith.constant 1.000000e+00 : f32
    %643 = vector.broadcast %cst_198 : f32 to vector<2x128xf32>
    %644 = arith.subf %643, %570 : vector<2x128xf32>
    %645 = arith.mulf %644, %641 : vector<2x128xf32>
    %646 = arith.addf %642, %645 : vector<2x128xf32>
    %c0_199 = arith.constant 0 : index
    %c0_200 = arith.constant 0 : index
    %647 = vector.load %arg8[%c0_199, %c0_200] : memref<2x128xf32, #tpu.memory_space<vmem>>, vector<2x128xf32>
    tpu.vector_store %arg8[%c0_199, %c0_200], %646 {strides = array<i32>} : memref<2x128xf32, #tpu.memory_space<vmem>>, vector<2x128xf32>,
    %c0_201 = arith.constant 0 : index
    %c2_202 = arith.constant 2 : index
    %c0_203 = arith.constant 0 : index
    %c0_204 = arith.constant 0 : index
    %648 = vector.load %arg7[%c0_201, %c2_202, %c0_203, %c0_204] : memref<1x4x2x128xf32, #tpu.memory_space<vmem>>, vector<1x1x2x128xf32>
    %649 = vector.shape_cast %648 : vector<1x1x2x128xf32> to vector<2x128xf32>
    %650 = vector.shape_cast %646 : vector<2x128xf32> to vector<1x1x2x128xf32>
    tpu.vector_store %arg7[%c0_201, %c2_202, %c0_203, %c0_204], %650 {strides = array<i32>} : memref<1x4x2x128xf32, #tpu.memory_space<vmem>>, vector<1x1x2x128xf32>,
    %c0_205 = arith.constant 0 : index
    %c0_206 = arith.constant 0 : index
    %651 = vector.load %arg8[%c0_205, %c0_206] : memref<2x128xf32, #tpu.memory_space<vmem>>, vector<2x128xf32>
    %c0_207 = arith.constant 0 : index
    %c3_208 = arith.constant 3 : index
    %c0_209 = arith.constant 0 : index
    %c0_210 = arith.constant 0 : index
    %652 = vector.load %arg3[%c0_207, %c3_208, %c0_209, %c0_210] : memref<1x4x4x128xf32, #tpu.memory_space<vmem>>, vector<1x1x4x128xf32>
    %653 = vector.shape_cast %652 : vector<1x1x4x128xf32> to vector<4x128xf32>
    %654 = arith.index_cast %arg0 : i32 to index
    %c0_211 = arith.constant 0 : index
    %655 = memref.load %arg2[%654, %c0_211] : memref<2x20xf32, #tpu.memory_space<smem>>
    %656 = vector.broadcast %655 : f32 to vector<2x128xf32>
    %657 = arith.mulf %656, %651 : vector<2x128xf32>
    %658 = arith.index_cast %arg0 : i32 to index
    %c5_212 = arith.constant 5 : index
    %659 = memref.load %arg2[%658, %c5_212] : memref<2x20xf32, #tpu.memory_space<smem>>
    %660 = vector.broadcast %659 : f32 to vector<2x128xf32>
    %661 = arith.mulf %660, %651 : vector<2x128xf32>
    %662 = arith.index_cast %arg0 : i32 to index
    %c10_213 = arith.constant 10 : index
    %663 = memref.load %arg2[%662, %c10_213] : memref<2x20xf32, #tpu.memory_space<smem>>
    %664 = vector.broadcast %663 : f32 to vector<2x128xf32>
    %665 = arith.mulf %664, %651 : vector<2x128xf32>
    %666 = arith.index_cast %arg0 : i32 to index
    %c15_214 = arith.constant 15 : index
    %667 = memref.load %arg2[%666, %c15_214] : memref<2x20xf32, #tpu.memory_space<smem>>
    %668 = vector.broadcast %667 : f32 to vector<2x128xf32>
    %669 = arith.mulf %668, %651 : vector<2x128xf32>
    %c0_215 = arith.constant 0 : index
    %c0_216 = arith.constant 0 : index
    %c0_217 = arith.constant 0 : index
    %670 = vector.load %arg5[%c0_215, %c0_216, %c0_217] : memref<2x128x128xf32, #tpu.memory_space<vmem>>, vector<1x128x128xf32>
    %671 = vector.shape_cast %670 : vector<1x128x128xf32> to vector<128x128xf32>
    %cst_218 = arith.constant dense<0.000000e+00> : vector<2x128xf32>
    %672 = tpu.matmul %651, %671, %cst_218 {dimension_numbers = #tpu.dot_dimension_numbers<[1], [0], [0], [1], [0, 0, 1, 1], [], []>} : vector<2x128xf32>, vector<128x128xf32>, vector<2x128xf32> -> vector<2x128xf32>
    %673 = arith.index_cast %arg0 : i32 to index
    %c1_219 = arith.constant 1 : index
    %674 = memref.load %arg2[%673, %c1_219] : memref<2x20xf32, #tpu.memory_space<smem>>
    %675 = vector.broadcast %674 : f32 to vector<2x128xf32>
    %676 = arith.mulf %675, %672 : vector<2x128xf32>
    %677 = arith.addf %657, %676 : vector<2x128xf32>
    %678 = arith.index_cast %arg0 : i32 to index
    %c6_220 = arith.constant 6 : index
    %679 = memref.load %arg2[%678, %c6_220] : memref<2x20xf32, #tpu.memory_space<smem>>
    %680 = vector.broadcast %679 : f32 to vector<2x128xf32>
    %681 = arith.mulf %680, %672 : vector<2x128xf32>
    %682 = arith.addf %661, %681 : vector<2x128xf32>
    %683 = arith.index_cast %arg0 : i32 to index
    %c11_221 = arith.constant 11 : index
    %684 = memref.load %arg2[%683, %c11_221] : memref<2x20xf32, #tpu.memory_space<smem>>
    %685 = vector.broadcast %684 : f32 to vector<2x128xf32>
    %686 = arith.mulf %685, %672 : vector<2x128xf32>
    %687 = arith.addf %665, %686 : vector<2x128xf32>
    %688 = arith.index_cast %arg0 : i32 to index
    %c16_222 = arith.constant 16 : index
    %689 = memref.load %arg2[%688, %c16_222] : memref<2x20xf32, #tpu.memory_space<smem>>
    %690 = vector.broadcast %689 : f32 to vector<2x128xf32>
    %691 = arith.mulf %690, %672 : vector<2x128xf32>
    %692 = arith.addf %669, %691 : vector<2x128xf32>
    %cst_223 = arith.constant dense<0.000000e+00> : vector<2x128xf32>
    %693 = tpu.matmul %672, %671, %cst_223 {dimension_numbers = #tpu.dot_dimension_numbers<[1], [0], [0], [1], [0, 0, 1, 1], [], []>} : vector<2x128xf32>, vector<128x128xf32>, vector<2x128xf32> -> vector<2x128xf32>
    %cst_224 = arith.constant 2.000000e+00 : f32
    %694 = vector.broadcast %cst_224 : f32 to vector<2x128xf32>
    %695 = arith.mulf %694, %693 : vector<2x128xf32>
    %696 = arith.subf %695, %651 : vector<2x128xf32>
    %697 = arith.index_cast %arg0 : i32 to index
    %c2_225 = arith.constant 2 : index
    %698 = memref.load %arg2[%697, %c2_225] : memref<2x20xf32, #tpu.memory_space<smem>>
    %699 = vector.broadcast %698 : f32 to vector<2x128xf32>
    %700 = arith.mulf %699, %696 : vector<2x128xf32>
    %701 = arith.addf %677, %700 : vector<2x128xf32>
    %702 = arith.index_cast %arg0 : i32 to index
    %c7_226 = arith.constant 7 : index
    %703 = memref.load %arg2[%702, %c7_226] : memref<2x20xf32, #tpu.memory_space<smem>>
    %704 = vector.broadcast %703 : f32 to vector<2x128xf32>
    %705 = arith.mulf %704, %696 : vector<2x128xf32>
    %706 = arith.addf %682, %705 : vector<2x128xf32>
    %707 = arith.index_cast %arg0 : i32 to index
    %c12_227 = arith.constant 12 : index
    %708 = memref.load %arg2[%707, %c12_227] : memref<2x20xf32, #tpu.memory_space<smem>>
    %709 = vector.broadcast %708 : f32 to vector<2x128xf32>
    %710 = arith.mulf %709, %696 : vector<2x128xf32>
    %711 = arith.addf %687, %710 : vector<2x128xf32>
    %712 = arith.index_cast %arg0 : i32 to index
    %c17_228 = arith.constant 17 : index
    %713 = memref.load %arg2[%712, %c17_228] : memref<2x20xf32, #tpu.memory_space<smem>>
    %714 = vector.broadcast %713 : f32 to vector<2x128xf32>
    %715 = arith.mulf %714, %696 : vector<2x128xf32>
    %716 = arith.addf %692, %715 : vector<2x128xf32>
    %c1_229 = arith.constant 1 : index
    %c0_230 = arith.constant 0 : index
    %c0_231 = arith.constant 0 : index
    %717 = vector.load %arg5[%c1_229, %c0_230, %c0_231] : memref<2x128x128xf32, #tpu.memory_space<vmem>>, vector<1x128x128xf32>
    %718 = vector.shape_cast %717 : vector<1x128x128xf32> to vector<128x128xf32>
    %cst_232 = arith.constant dense<0.000000e+00> : vector<2x128xf32>
    %719 = tpu.matmul %672, %718, %cst_232 {dimension_numbers = #tpu.dot_dimension_numbers<[1], [0], [0], [1], [0, 0, 1, 1], [], []>} : vector<2x128xf32>, vector<128x128xf32>, vector<2x128xf32> -> vector<2x128xf32>
    %720 = arith.index_cast %arg0 : i32 to index
    %c3_233 = arith.constant 3 : index
    %721 = memref.load %arg2[%720, %c3_233] : memref<2x20xf32, #tpu.memory_space<smem>>
    %722 = vector.broadcast %721 : f32 to vector<2x128xf32>
    %723 = arith.mulf %722, %719 : vector<2x128xf32>
    %724 = arith.addf %701, %723 : vector<2x128xf32>
    %725 = arith.index_cast %arg0 : i32 to index
    %c8_234 = arith.constant 8 : index
    %726 = memref.load %arg2[%725, %c8_234] : memref<2x20xf32, #tpu.memory_space<smem>>
    %727 = vector.broadcast %726 : f32 to vector<2x128xf32>
    %728 = arith.mulf %727, %719 : vector<2x128xf32>
    %729 = arith.addf %706, %728 : vector<2x128xf32>
    %730 = arith.index_cast %arg0 : i32 to index
    %c13_235 = arith.constant 13 : index
    %731 = memref.load %arg2[%730, %c13_235] : memref<2x20xf32, #tpu.memory_space<smem>>
    %732 = vector.broadcast %731 : f32 to vector<2x128xf32>
    %733 = arith.mulf %732, %719 : vector<2x128xf32>
    %734 = arith.addf %711, %733 : vector<2x128xf32>
    %735 = arith.index_cast %arg0 : i32 to index
    %c18_236 = arith.constant 18 : index
    %736 = memref.load %arg2[%735, %c18_236] : memref<2x20xf32, #tpu.memory_space<smem>>
    %737 = vector.broadcast %736 : f32 to vector<2x128xf32>
    %738 = arith.mulf %737, %719 : vector<2x128xf32>
    %739 = arith.addf %716, %738 : vector<2x128xf32>
    %cst_237 = arith.constant dense<0.000000e+00> : vector<2x128xf32>
    %740 = tpu.matmul %719, %718, %cst_237 {dimension_numbers = #tpu.dot_dimension_numbers<[1], [0], [0], [1], [0, 0, 1, 1], [], []>} : vector<2x128xf32>, vector<128x128xf32>, vector<2x128xf32> -> vector<2x128xf32>
    %cst_238 = arith.constant 2.000000e+00 : f32
    %741 = vector.broadcast %cst_238 : f32 to vector<2x128xf32>
    %742 = arith.mulf %741, %740 : vector<2x128xf32>
    %743 = arith.subf %742, %672 : vector<2x128xf32>
    %744 = arith.index_cast %arg0 : i32 to index
    %c4_239 = arith.constant 4 : index
    %745 = memref.load %arg2[%744, %c4_239] : memref<2x20xf32, #tpu.memory_space<smem>>
    %746 = vector.broadcast %745 : f32 to vector<2x128xf32>
    %747 = arith.mulf %746, %743 : vector<2x128xf32>
    %748 = arith.addf %724, %747 : vector<2x128xf32>
    %749 = arith.index_cast %arg0 : i32 to index
    %c9_240 = arith.constant 9 : index
    %750 = memref.load %arg2[%749, %c9_240] : memref<2x20xf32, #tpu.memory_space<smem>>
    %751 = vector.broadcast %750 : f32 to vector<2x128xf32>
    %752 = arith.mulf %751, %743 : vector<2x128xf32>
    %753 = arith.addf %729, %752 : vector<2x128xf32>
    %754 = arith.index_cast %arg0 : i32 to index
    %c14_241 = arith.constant 14 : index
    %755 = memref.load %arg2[%754, %c14_241] : memref<2x20xf32, #tpu.memory_space<smem>>
    %756 = vector.broadcast %755 : f32 to vector<2x128xf32>
    %757 = arith.mulf %756, %743 : vector<2x128xf32>
    %758 = arith.addf %734, %757 : vector<2x128xf32>
    %759 = arith.index_cast %arg0 : i32 to index
    %c19_242 = arith.constant 19 : index
    %760 = memref.load %arg2[%759, %c19_242] : memref<2x20xf32, #tpu.memory_space<smem>>
    %761 = vector.broadcast %760 : f32 to vector<2x128xf32>
    %762 = arith.mulf %761, %743 : vector<2x128xf32>
    %763 = arith.addf %739, %762 : vector<2x128xf32>
    %764 = tpu.concatenate %748, %753, %758, %763 in 0 : vector<2x128xf32>, vector<2x128xf32>, vector<2x128xf32>, vector<2x128xf32> -> vector<8x128xf32>
    %765 = vector.shape_cast %764 : vector<8x128xf32> to vector<2x512xf32>
    %c0_243 = arith.constant 0 : index
    %c0_244 = arith.constant 0 : index
    %766 = vector.load %arg6[%c0_243, %c0_244] : memref<512x256xf32, #tpu.memory_space<vmem>>, vector<512x256xf32>
    %cst_245 = arith.constant dense<0.000000e+00> : vector<2x256xf32>
    %767 = tpu.matmul %765, %766, %cst_245 {dimension_numbers = #tpu.dot_dimension_numbers<[1], [0], [0], [1], [0, 0, 1, 1], [], []>} : vector<2x512xf32>, vector<512x256xf32>, vector<2x256xf32> -> vector<2x256xf32>
    %768 = vector.shape_cast %767 : vector<2x256xf32> to vector<2x2x128xf32>
    %769 = vector.extract_strided_slice %768 {offsets = [0, 0, 0], sizes = [1, 2, 128], strides = [1, 1, 1]} : vector<2x2x128xf32> to vector<1x2x128xf32>
    %770 = vector.shape_cast %769 : vector<1x2x128xf32> to vector<2x128xf32>
    %771 = vector.extract_strided_slice %653 {offsets = [0, 0], sizes = [2, 128], strides = [1, 1]} : vector<4x128xf32> to vector<2x128xf32>
    %772 = arith.addf %770, %771 : vector<2x128xf32>
    %773 = arith.negf %772 : vector<2x128xf32>
    %774 = math.exp %773 : vector<2x128xf32>
    %cst_246 = arith.constant 1.000000e+00 : f32
    %775 = vector.broadcast %cst_246 : f32 to vector<2x128xf32>
    %776 = arith.addf %775, %774 : vector<2x128xf32>
    %777 = arith.divf %775, %776 : vector<2x128xf32>
    %778 = vector.extract_strided_slice %768 {offsets = [1, 0, 0], sizes = [1, 2, 128], strides = [1, 1, 1]} : vector<2x2x128xf32> to vector<1x2x128xf32>
    %779 = vector.shape_cast %778 : vector<1x2x128xf32> to vector<2x128xf32>
    %780 = vector.extract_strided_slice %653 {offsets = [2, 0], sizes = [2, 128], strides = [1, 1]} : vector<4x128xf32> to vector<2x128xf32>
    %781 = arith.addf %779, %780 : vector<2x128xf32>
    %782 = arith.negf %781 : vector<2x128xf32>
    %783 = math.exp %782 : vector<2x128xf32>
    %cst_247 = arith.constant 1.000000e+00 : f32
    %784 = vector.broadcast %cst_247 : f32 to vector<2x128xf32>
    %785 = arith.addf %784, %783 : vector<2x128xf32>
    %786 = arith.divf %784, %785 : vector<2x128xf32>
    %787 = arith.mulf %777, %651 : vector<2x128xf32>
    %788 = arith.index_cast %arg0 : i32 to index
    %c10_248 = arith.constant 10 : index
    %789 = memref.load %arg2[%788, %c10_248] : memref<2x20xf32, #tpu.memory_space<smem>>
    %790 = vector.broadcast %789 : f32 to vector<2x128xf32>
    %791 = arith.mulf %790, %787 : vector<2x128xf32>
    %792 = arith.index_cast %arg0 : i32 to index
    %c15_249 = arith.constant 15 : index
    %793 = memref.load %arg2[%792, %c15_249] : memref<2x20xf32, #tpu.memory_space<smem>>
    %794 = vector.broadcast %793 : f32 to vector<2x128xf32>
    %795 = arith.mulf %794, %787 : vector<2x128xf32>
    %c0_250 = arith.constant 0 : index
    %c0_251 = arith.constant 0 : index
    %c0_252 = arith.constant 0 : index
    %796 = vector.load %arg5[%c0_250, %c0_251, %c0_252] : memref<2x128x128xf32, #tpu.memory_space<vmem>>, vector<1x128x128xf32>
    %797 = vector.shape_cast %796 : vector<1x128x128xf32> to vector<128x128xf32>
    %cst_253 = arith.constant dense<0.000000e+00> : vector<2x128xf32>
    %798 = tpu.matmul %787, %797, %cst_253 {dimension_numbers = #tpu.dot_dimension_numbers<[1], [0], [0], [1], [0, 0, 1, 1], [], []>} : vector<2x128xf32>, vector<128x128xf32>, vector<2x128xf32> -> vector<2x128xf32>
    %799 = arith.index_cast %arg0 : i32 to index
    %c11_254 = arith.constant 11 : index
    %800 = memref.load %arg2[%799, %c11_254] : memref<2x20xf32, #tpu.memory_space<smem>>
    %801 = vector.broadcast %800 : f32 to vector<2x128xf32>
    %802 = arith.mulf %801, %798 : vector<2x128xf32>
    %803 = arith.addf %791, %802 : vector<2x128xf32>
    %804 = arith.index_cast %arg0 : i32 to index
    %c16_255 = arith.constant 16 : index
    %805 = memref.load %arg2[%804, %c16_255] : memref<2x20xf32, #tpu.memory_space<smem>>
    %806 = vector.broadcast %805 : f32 to vector<2x128xf32>
    %807 = arith.mulf %806, %798 : vector<2x128xf32>
    %808 = arith.addf %795, %807 : vector<2x128xf32>
    %cst_256 = arith.constant dense<0.000000e+00> : vector<2x128xf32>
    %809 = tpu.matmul %798, %797, %cst_256 {dimension_numbers = #tpu.dot_dimension_numbers<[1], [0], [0], [1], [0, 0, 1, 1], [], []>} : vector<2x128xf32>, vector<128x128xf32>, vector<2x128xf32> -> vector<2x128xf32>
    %cst_257 = arith.constant 2.000000e+00 : f32
    %810 = vector.broadcast %cst_257 : f32 to vector<2x128xf32>
    %811 = arith.mulf %810, %809 : vector<2x128xf32>
    %812 = arith.subf %811, %787 : vector<2x128xf32>
    %813 = arith.index_cast %arg0 : i32 to index
    %c12_258 = arith.constant 12 : index
    %814 = memref.load %arg2[%813, %c12_258] : memref<2x20xf32, #tpu.memory_space<smem>>
    %815 = vector.broadcast %814 : f32 to vector<2x128xf32>
    %816 = arith.mulf %815, %812 : vector<2x128xf32>
    %817 = arith.addf %803, %816 : vector<2x128xf32>
    %818 = arith.index_cast %arg0 : i32 to index
    %c17_259 = arith.constant 17 : index
    %819 = memref.load %arg2[%818, %c17_259] : memref<2x20xf32, #tpu.memory_space<smem>>
    %820 = vector.broadcast %819 : f32 to vector<2x128xf32>
    %821 = arith.mulf %820, %812 : vector<2x128xf32>
    %822 = arith.addf %808, %821 : vector<2x128xf32>
    %c1_260 = arith.constant 1 : index
    %c0_261 = arith.constant 0 : index
    %c0_262 = arith.constant 0 : index
    %823 = vector.load %arg5[%c1_260, %c0_261, %c0_262] : memref<2x128x128xf32, #tpu.memory_space<vmem>>, vector<1x128x128xf32>
    %824 = vector.shape_cast %823 : vector<1x128x128xf32> to vector<128x128xf32>
    %cst_263 = arith.constant dense<0.000000e+00> : vector<2x128xf32>
    %825 = tpu.matmul %798, %824, %cst_263 {dimension_numbers = #tpu.dot_dimension_numbers<[1], [0], [0], [1], [0, 0, 1, 1], [], []>} : vector<2x128xf32>, vector<128x128xf32>, vector<2x128xf32> -> vector<2x128xf32>
    %826 = arith.index_cast %arg0 : i32 to index
    %c13_264 = arith.constant 13 : index
    %827 = memref.load %arg2[%826, %c13_264] : memref<2x20xf32, #tpu.memory_space<smem>>
    %828 = vector.broadcast %827 : f32 to vector<2x128xf32>
    %829 = arith.mulf %828, %825 : vector<2x128xf32>
    %830 = arith.addf %817, %829 : vector<2x128xf32>
    %831 = arith.index_cast %arg0 : i32 to index
    %c18_265 = arith.constant 18 : index
    %832 = memref.load %arg2[%831, %c18_265] : memref<2x20xf32, #tpu.memory_space<smem>>
    %833 = vector.broadcast %832 : f32 to vector<2x128xf32>
    %834 = arith.mulf %833, %825 : vector<2x128xf32>
    %835 = arith.addf %822, %834 : vector<2x128xf32>
    %cst_266 = arith.constant dense<0.000000e+00> : vector<2x128xf32>
    %836 = tpu.matmul %825, %824, %cst_266 {dimension_numbers = #tpu.dot_dimension_numbers<[1], [0], [0], [1], [0, 0, 1, 1], [], []>} : vector<2x128xf32>, vector<128x128xf32>, vector<2x128xf32> -> vector<2x128xf32>
    %cst_267 = arith.constant 2.000000e+00 : f32
    %837 = vector.broadcast %cst_267 : f32 to vector<2x128xf32>
    %838 = arith.mulf %837, %836 : vector<2x128xf32>
    %839 = arith.subf %838, %798 : vector<2x128xf32>
    %840 = arith.index_cast %arg0 : i32 to index
    %c14_268 = arith.constant 14 : index
    %841 = memref.load %arg2[%840, %c14_268] : memref<2x20xf32, #tpu.memory_space<smem>>
    %842 = vector.broadcast %841 : f32 to vector<2x128xf32>
    %843 = arith.mulf %842, %839 : vector<2x128xf32>
    %844 = arith.addf %830, %843 : vector<2x128xf32>
    %845 = arith.index_cast %arg0 : i32 to index
    %c19_269 = arith.constant 19 : index
    %846 = memref.load %arg2[%845, %c19_269] : memref<2x20xf32, #tpu.memory_space<smem>>
    %847 = vector.broadcast %846 : f32 to vector<2x128xf32>
    %848 = arith.mulf %847, %839 : vector<2x128xf32>
    %849 = arith.addf %835, %848 : vector<2x128xf32>
    %850 = tpu.concatenate %844, %849 in 0 : vector<2x128xf32>, vector<2x128xf32> -> vector<4x128xf32>
    %851 = vector.shape_cast %850 : vector<4x128xf32> to vector<1x512xf32>
    %c0_270 = arith.constant 0 : index
    %c0_271 = arith.constant 0 : index
    %852 = vector.load %arg6[%c0_270, %c0_271] : memref<512x256xf32, #tpu.memory_space<vmem>>, vector<512x256xf32>
    %cst_272 = arith.constant dense<0.000000e+00> : vector<1x256xf32>
    %853 = tpu.matmul %851, %852, %cst_272 {dimension_numbers = #tpu.dot_dimension_numbers<[1], [0], [0], [1], [0, 0, 1, 1], [], []>} : vector<1x512xf32>, vector<512x256xf32>, vector<1x256xf32> -> vector<1x256xf32>
    %854 = vector.shape_cast %853 : vector<1x256xf32> to vector<2x128xf32>
    %855 = vector.extract_strided_slice %653 {offsets = [2, 0], sizes = [2, 128], strides = [1, 1]} : vector<4x128xf32> to vector<2x128xf32>
    %856 = arith.addf %854, %855 : vector<2x128xf32>
    %857 = math.tanh %856 : vector<2x128xf32>
    %858 = arith.mulf %786, %651 : vector<2x128xf32>
    %cst_273 = arith.constant 1.000000e+00 : f32
    %859 = vector.broadcast %cst_273 : f32 to vector<2x128xf32>
    %860 = arith.subf %859, %786 : vector<2x128xf32>
    %861 = arith.mulf %860, %857 : vector<2x128xf32>
    %862 = arith.addf %858, %861 : vector<2x128xf32>
    %c0_274 = arith.constant 0 : index
    %c0_275 = arith.constant 0 : index
    %863 = vector.load %arg8[%c0_274, %c0_275] : memref<2x128xf32, #tpu.memory_space<vmem>>, vector<2x128xf32>
    tpu.vector_store %arg8[%c0_274, %c0_275], %862 {strides = array<i32>} : memref<2x128xf32, #tpu.memory_space<vmem>>, vector<2x128xf32>,
    %c0_276 = arith.constant 0 : index
    %c3_277 = arith.constant 3 : index
    %c0_278 = arith.constant 0 : index
    %c0_279 = arith.constant 0 : index
    %864 = vector.load %arg7[%c0_276, %c3_277, %c0_278, %c0_279] : memref<1x4x2x128xf32, #tpu.memory_space<vmem>>, vector<1x1x2x128xf32>
    %865 = vector.shape_cast %864 : vector<1x1x2x128xf32> to vector<2x128xf32>
    %866 = vector.shape_cast %862 : vector<2x128xf32> to vector<1x1x2x128xf32>
    tpu.vector_store %arg7[%c0_276, %c3_277, %c0_278, %c0_279], %866 {strides = array<i32>} : memref<1x4x2x128xf32, #tpu.memory_space<vmem>>, vector<1x1x2x128xf32>,
    return
  }
  func.func @transform_0(%arg0: i32, %arg1: i32) -> (i32, i32) {
    %c0_i32 = arith.constant 0 : i32
    %c0_i32_0 = arith.constant 0 : i32
    %c0_i32_1 = arith.constant 0 : i32
    return %c0_i32, %c0_i32_0 : i32, i32
  }
  func.func @transform_1(%arg0: i32, %arg1: i32) -> (i32, i32, i32, i32) {
    %c0_i32 = arith.constant 0 : i32
    %c0_i32_0 = arith.constant 0 : i32
    %c0_i32_1 = arith.constant 0 : i32
    return %arg0, %arg1, %c0_i32, %c0_i32_0 : i32, i32, i32, i32
  }
  func.func @transform_2(%arg0: i32, %arg1: i32) -> (i32, i32, i32) {
    %c0_i32 = arith.constant 0 : i32
    %c0_i32_0 = arith.constant 0 : i32
    %c0_i32_1 = arith.constant 0 : i32
    return %arg0, %c0_i32, %c0_i32_0 : i32, i32, i32
  }
  func.func @transform_3(%arg0: i32, %arg1: i32) -> (i32, i32, i32) {
    %c0_i32 = arith.constant 0 : i32
    %c0_i32_0 = arith.constant 0 : i32
    %c0_i32_1 = arith.constant 0 : i32
    %c0_i32_2 = arith.constant 0 : i32
    return %c0_i32, %c0_i32_0, %c0_i32_1 : i32, i32, i32
  }
  func.func @transform_4(%arg0: i32, %arg1: i32) -> (i32, i32) {
    %c0_i32 = arith.constant 0 : i32
    %c0_i32_0 = arith.constant 0 : i32
    %c0_i32_1 = arith.constant 0 : i32
    return %c0_i32, %c0_i32_0 : i32, i32
  }
  func.func @transform_5(%arg0: i32, %arg1: i32) -> (i32, i32, i32, i32) {
    %c0_i32 = arith.constant 0 : i32
    %c0_i32_0 = arith.constant 0 : i32
    %c0_i32_1 = arith.constant 0 : i32
    return %arg0, %arg1, %c0_i32, %c0_i32_0 : i32, i32, i32, i32
  }
}

</mosaic_0001>

<llo_original>
// kernel: tpu_custom_call.1
$region0: #{tpu_custom_call.1}
  #allocation0 [shape = 'u32[]', space=smem, size = 0x4, offset = 0x4, fixed_abs, tag = 'smem constant byte address 0x4 - core index']
  #allocation1 [shape = 'u32[72,128]{1,0:T(1,128)}', space=vmem, size = 0x9000, scoped, tag = 'internal scratch']
  #allocation2 [shape = 'f32[2,128]{1,0:T(2,128)}', space=vmem, size = 0x400, scoped, tag = 'scratch operand']
  %s0 = inlined_call_operand.hbm [shape: f32[2,20], index: 0, kind: input, shape index: {}]
  %s1 = inlined_call_operand.hbm [shape: f32[2,8,4,128], index: 1, kind: input, shape index: {}]
  %s2 = inlined_call_operand.hbm [shape: f32[2,2,128], index: 2, kind: input, shape index: {}]
  %s3 = inlined_call_operand.hbm [shape: f32[2,128,128], index: 3, kind: input, shape index: {}]
  %s4 = inlined_call_operand.hbm [shape: f32[512,256], index: 4, kind: input, shape index: {}]
  %s5 = inlined_call_operand.hbm [shape: f32[2,8,2,128], index: 5, kind: output, shape index: {}]
  %s6 = sld [smem:[#allocation0]]
  $region77: #{tpu_custom_call.1} parent=0
    _
  %s8 = ssub.s32 1, %s6
  %s9 = scalar_select 0, %s8, %s6
  $region1: #{tpu_custom_call.1} parent=0
    #allocation3 [shape = 'u8[1024]{0}', space=smem, size = 0x400, scoped, tag = 'input window, operand 0, single buffered']
    #allocation4 [shape = 's32[2]{0}', space=sflag, size = 0x8, scoped, tag = 'scoped memory for tpu_custom_call.1']
    #allocation5 [shape = 's32[2]{0}', space=sflag, size = 0x8, scoped, tag = 'scoped memory for tpu_custom_call.1']
    #allocation6 [shape = 's32[2]{0}', space=sflag, size = 0x8, scoped, tag = 'scoped memory for tpu_custom_call.1']
    #allocation7 [shape = 'u8[16384]{0}', space=vmem, size = 0x4000, scoped, tag = 'input window, operand 1']
    #allocation8 [shape = 'u8[2048]{0}', space=vmem, size = 0x800, scoped, tag = 'input window, operand 2']
    #allocation9 [shape = 's32[2]{0}', space=sflag, size = 0x8, scoped, tag = 'scoped memory for tpu_custom_call.1']
    #allocation10 [shape = 'u8[131072]{0}', space=vmem, size = 0x20000, scoped, tag = 'input window, operand 3, single buffered']
    #allocation11 [shape = 'u8[524288]{0}', space=vmem, size = 0x80000, scoped, tag = 'input window, operand 4, single buffered']
    #allocation12 [shape = 's32[1]{0}', space=sflag, size = 0x4, scoped, tag = 'scoped memory for tpu_custom_call.1']
    #allocation13 [shape = 'u8[8192]{0}', space=vmem, size = 0x2000, scoped, tag = 'output window, operand 0']
    %10 = vsyncpa [#allocation6], 0
    %11 = vsyncpa [#allocation4], 0
    %s12 = scalar_lea.sflag [#allocation4], 1
    %13 = vsyncpa %s12, 0
    %14 = vsyncpa [#allocation9], 0
    %s15 = scalar_lea.sflag [#allocation9], 1
    %16 = vsyncpa %s15, 0
    %17 = vsyncpa [#allocation12], 0
    %18 = vsyncpa [#allocation5], 0
    %s19 = scalar_lea.sflag [#allocation5], 1
    %20 = vsyncpa %s19, 0
    loop: start=0, step=1, limit=6
    $region2: #{tpu_custom_call.1} parent=1 // loop_pre_header
      _
    $region3: #{tpu_custom_call.1} parent=1 // loop_header
      %s22 = sphi 0, %s26
      %p23 = scmp.ge.s32.totalorder %s22, 6
      %s29 = sphi 0, %s41
      %s30 = sphi 0, %s37
      %s31 = sphi 0, %s29
      %s32 = sphi 0, %s30
      %s33 = sphi 0, %s31
      %s34 = sphi 0, %s32
      %s42 = sphi 0, %s42
      %s44 = sphi 0, %s42
      %s45 = sphi 0, %s44
      %s59 = sphi 0, %s45
      %s67 = sphi 0, %s69
      %s70 = sphi 0, %s67
      %s71 = sphi 0, %s70
      %s87 = sphi 0, %s71
      %s93 = sphi 0, %s95
      %s96 = sphi 0, %s93
      %s97 = sphi 0, %s96
      %s113 = sphi 0, %s97
      %s117 = sphi 0, %s117
      %s119 = sphi 0, %s117
      %s120 = sphi 0, %s119
      %s134 = sphi 0, %s120
      %s138 = sphi 0, %s138
      %s140 = sphi 0, %s138
      %s141 = sphi 0, %s140
      %s155 = sphi 0, %s141
      %s163 = sphi 0, %s165
      %s166 = sphi 0, %s163
      %s167 = sphi 0, %s166
      %s183 = sphi 0, %s167
    $region4: #{tpu_custom_call.1} parent=1 // loop_header_branch
      %25 = sbr.rel (%p23) target = $region8
    $region5: #{tpu_custom_call.1} parent=1 // loop_body
      %s27 = ssub.s32 %s22, 1
      %s28 = ssub.s32 %s22, 2
      %s35 = sadd.s32 1, %s30
      %p36 = scmp.ge.s32.totalorder %s35, 2
      %s37 = scalar_select %p36, 0, %s35
      %s38 = sadd.s32 1, %s29
      %s39 = scalar_select %p36, %s38, %s29
      %p40 = scmp.ge.s32.totalorder %s39, 2
      %s41 = scalar_select %p40, 0, %s39
      %s43 = sadd.s32 %s42, 1
      %p46 = scmp.eq.s32.totalorder %s22, 3
      %p47 = scmp.ne.s32.totalorder %s42, %s44
      %p48 = scmp.eq.s32.totalorder %s22, 0
      %p49 = por %p47, %p48
      %p50 = scmp.ne.s32.totalorder %s42, %s44
      %p51 = scmp.eq.s32.totalorder %s27, 3
      %p52 = por %p50, %p51
      %p53 = scmp.ne.s32.totalorder %s44, %s45
      %p54 = scmp.eq.s32.totalorder %s27, 0
      %p55 = por %p53, %p54
      %p56 = scmp.ne.s32.totalorder %s44, %s45
      %p57 = scmp.eq.s32.totalorder %s28, 3
      %p58 = por %p56, %p57
      %p60 = scmp.ne.s32.totalorder %s45, %s59
      %p61 = scmp.eq.s32.totalorder %s28, 0
      %p62 = por %p60, %p61
      %s63 = ssub.s32 %s29, %s41
      %s64 = ssub.s32 %s30, %s37
      %s65 = sor.u32 %s63, %s64
      %p66 = scmp.eq.s32.totalorder %s65, 0
      %s68 = sadd.s32 %s67, 1
      %s69 = scalar_select %p66, %s67, %s68
      %p72 = pneg %p66
      %p73 = scmp.eq.s32.totalorder %s22, 3
      %p74 = por %p72, %p73
      %p75 = scmp.ne.s32.totalorder %s67, %s70
      %p76 = scmp.eq.s32.totalorder %s22, 0
      %p77 = por %p75, %p76
      %p78 = scmp.ne.s32.totalorder %s67, %s70
      %p79 = scmp.eq.s32.totalorder %s27, 3
      %p80 = por %p78, %p79
      %p81 = scmp.ne.s32.totalorder %s70, %s71
      %p82 = scmp.eq.s32.totalorder %s27, 0
      %p83 = por %p81, %p82
      %p84 = scmp.ne.s32.totalorder %s70, %s71
      %p85 = scmp.eq.s32.totalorder %s28, 3
      %p86 = por %p84, %p85
      %p88 = scmp.ne.s32.totalorder %s71, %s87
      %p89 = scmp.eq.s32.totalorder %s28, 0
      %p90 = por %p88, %p89
      %s91 = ssub.s32 %s29, %s41
      %p92 = scmp.eq.s32.totalorder %s91, 0
      %s94 = sadd.s32 %s93, 1
      %s95 = scalar_select %p92, %s93, %s94
      %p98 = pneg %p92
      %p99 = scmp.eq.s32.totalorder %s22, 3
      %p100 = por %p98, %p99
      %p101 = scmp.ne.s32.totalorder %s93, %s96
      %p102 = scmp.eq.s32.totalorder %s22, 0
      %p103 = por %p101, %p102
      %p104 = scmp.ne.s32.totalorder %s93, %s96
      %p105 = scmp.eq.s32.totalorder %s27, 3
      %p106 = por %p104, %p105
      %p107 = scmp.ne.s32.totalorder %s96, %s97
      %p108 = scmp.eq.s32.totalorder %s27, 0
      %p109 = por %p107, %p108
      %p110 = scmp.ne.s32.totalorder %s96, %s97
      %p111 = scmp.eq.s32.totalorder %s28, 3
      %p112 = por %p110, %p111
      %p114 = scmp.ne.s32.totalorder %s97, %s113
      %p115 = scmp.eq.s32.totalorder %s28, 0
      %p116 = por %p114, %p115
      %s118 = sadd.s32 %s117, 1
      %p121 = scmp.eq.s32.totalorder %s22, 3
      %p122 = scmp.ne.s32.totalorder %s117, %s119
      %p123 = scmp.eq.s32.totalorder %s22, 0
      %p124 = por %p122, %p123
      %p125 = scmp.ne.s32.totalorder %s117, %s119
      %p126 = scmp.eq.s32.totalorder %s27, 3
      %p127 = por %p125, %p126
      %p128 = scmp.ne.s32.totalorder %s119, %s120
      %p129 = scmp.eq.s32.totalorder %s27, 0
      %p130 = por %p128, %p129
      %p131 = scmp.ne.s32.totalorder %s119, %s120
      %p132 = scmp.eq.s32.totalorder %s28, 3
      %p133 = por %p131, %p132
      %p135 = scmp.ne.s32.totalorder %s120, %s134
      %p136 = scmp.eq.s32.totalorder %s28, 0
      %p137 = por %p135, %p136
      %s139 = sadd.s32 %s138, 1
      %p142 = scmp.eq.s32.totalorder %s22, 3
      %p143 = scmp.ne.s32.totalorder %s138, %s140
      %p144 = scmp.eq.s32.totalorder %s22, 0
      %p145 = por %p143, %p144
      %p146 = scmp.ne.s32.totalorder %s138, %s140
      %p147 = scmp.eq.s32.totalorder %s27, 3
      %p148 = por %p146, %p147
      %p149 = scmp.ne.s32.totalorder %s140, %s141
      %p150 = scmp.eq.s32.totalorder %s27, 0
      %p151 = por %p149, %p150
      %p152 = scmp.ne.s32.totalorder %s140, %s141
      %p153 = scmp.eq.s32.totalorder %s28, 3
      %p154 = por %p152, %p153
      %p156 = scmp.ne.s32.totalorder %s141, %s155
      %p157 = scmp.eq.s32.totalorder %s28, 0
      %p158 = por %p156, %p157
      %s159 = ssub.s32 %s29, %s41
      %s160 = ssub.s32 %s30, %s37
      %s161 = sor.u32 %s159, %s160
      %p162 = scmp.eq.s32.totalorder %s161, 0
      %s164 = sadd.s32 %s163, 1
      %s165 = scalar_select %p162, %s163, %s164
      %p168 = pneg %p162
      %p169 = scmp.eq.s32.totalorder %s22, 3
      %p170 = por %p168, %p169
      %p171 = scmp.ne.s32.totalorder %s163, %s166
      %p172 = scmp.eq.s32.totalorder %s22, 0
      %p173 = por %p171, %p172
      %p174 = scmp.ne.s32.totalorder %s163, %s166
      %p175 = scmp.eq.s32.totalorder %s27, 3
      %p176 = por %p174, %p175
      %p177 = scmp.ne.s32.totalorder %s166, %s167
      %p178 = scmp.eq.s32.totalorder %s27, 0
      %p179 = por %p177, %p178
      %p180 = scmp.ne.s32.totalorder %s166, %s167
      %p181 = scmp.eq.s32.totalorder %s28, 3
      %p182 = por %p180, %p181
      %p184 = scmp.ne.s32.totalorder %s167, %s183
      %p185 = scmp.eq.s32.totalorder %s28, 0
      %p186 = por %p184, %p185
      %p187 = scmp.le.s32.totalorder 1, %s22
      %p188 = scmp.lt.s32.totalorder %s22, 5
      %p189 = pnand %p187, %p188
      %p190 = pneg %p189
      // Predicated region
      $region9: #{tpu_custom_call.1} parent=5 // pred_check
        _
      $region10: #{tpu_custom_call.1} parent=5 // pred_check_branch
        %192 = sbr.rel (%p189) target = $region12
      $region11: #{tpu_custom_call.1} parent=5 // pred_region
        %s193 = ssub.s32 %s22, 1
        // Predicated region
        $region13: #{tpu_custom_call.1} parent=11 // pred_check
          %p194 = pneg %p55
        $region14: #{tpu_custom_call.1} parent=11 // pred_check_branch
          %196 = sbr.rel (%p194) target = $region16
        $region15: #{tpu_custom_call.1} parent=11 // pred_region
          %198 = vsyncadd [#allocation6], 0
          %s200 = sshll.u32 %s0, 4
          %s201 = int_to_ptr.hbm [resolvable:$true] %s200
          %203 = dma.hbm_to_smem %s201, 32, [#allocation3], [#allocation6]
        $region16: #{tpu_custom_call.1} parent=11 // pred_fallthru
          _
        // Predicated region
        $region17: #{tpu_custom_call.1} parent=11 // pred_check
          %p204 = pneg %p130
        $region18: #{tpu_custom_call.1} parent=11 // pred_check_branch
          %206 = sbr.rel (%p204) target = $region20
        $region19: #{tpu_custom_call.1} parent=11 // pred_region
          %208 = vsyncadd [#allocation9], 0
          %s209 = sshll.u32 %s3, 4
          %s210 = int_to_ptr.hbm [resolvable:$true] %s209
          %s211 = sshll.u32 [#allocation10], 4
          %s212 = int_to_ptr.vmem [resolvable:$true] %s211
          %217 = dma.hbm_to_vmem [thread:$0]  %s210, 4096, %s212, [#allocation9], 128, 128, 8
        $region20: #{tpu_custom_call.1} parent=11 // pred_fallthru
          _
        // Predicated region
        $region21: #{tpu_custom_call.1} parent=11 // pred_check
          %p218 = pneg %p151
        $region22: #{tpu_custom_call.1} parent=11 // pred_check_branch
          %220 = sbr.rel (%p218) target = $region24
        $region23: #{tpu_custom_call.1} parent=11 // pred_region
          %222 = vsyncadd [#allocation12], 0
          %s223 = sshll.u32 %s4, 4
          %s224 = int_to_ptr.hbm [resolvable:$true] %s223
          %s225 = sshll.u32 [#allocation11], 4
          %s226 = int_to_ptr.vmem [resolvable:$true] %s225
          %231 = dma.hbm_to_vmem [thread:$0]  %s224, 16384, %s226, [#allocation12], 256, 256, 16
        $region24: #{tpu_custom_call.1} parent=11 // pred_fallthru
          _
      $region12: #{tpu_custom_call.1} parent=5 // pred_fallthru
        _
      %p232 = scmp.lt.s32.totalorder %s22, 4
      // Predicated region
      $region25: #{tpu_custom_call.1} parent=5 // pred_check
        %p233 = pneg %p232
      $region26: #{tpu_custom_call.1} parent=5 // pred_check_branch
        %235 = sbr.rel (%p233) target = $region28
      $region27: #{tpu_custom_call.1} parent=5 // pred_region
        // Predicated region
        $region29: #{tpu_custom_call.1} parent=27 // pred_check
          %p236 = pneg %p77
        $region30: #{tpu_custom_call.1} parent=27 // pred_check_branch
          %238 = sbr.rel (%p236) target = $region32
        $region31: #{tpu_custom_call.1} parent=27 // pred_region
          %s239 = sand.u32 %s67, 1
          %s240 = scalar_lea.sflag [#allocation4], %s239
          %s241 = sand.u32 %s67, 1
          %s242 = smul.addr %s241, 16
          %s243 = scalar_lea.vmem [#allocation7], %s242
          %s244 = smul.u32 4, %s30
          %246 = vsyncadd %s240, 0
          %s247 = smul.addr %s29, 8
          %s248 = sadd.s32 %s244, %s247
          %s249 = smul.addr %s248, 4
          %s250 = scalar_lea.hbm %s1, %s249
          %s251 = sshll.u32 %s250, 4
          %s252 = int_to_ptr.hbm [resolvable:$true] %s251
          %s253 = sshll.u32 %s243, 4
          %s254 = int_to_ptr.vmem [resolvable:$true] %s253
          %259 = dma.hbm_to_vmem [thread:$0]  %s252, 256, %s254, %s240, 64, 64, 4
        $region32: #{tpu_custom_call.1} parent=27 // pred_fallthru
          _
        // Predicated region
        $region33: #{tpu_custom_call.1} parent=27 // pred_check
          %p260 = pneg %p103
        $region34: #{tpu_custom_call.1} parent=27 // pred_check_branch
          %262 = sbr.rel (%p260) target = $region36
        $region35: #{tpu_custom_call.1} parent=27 // pred_region
          %s263 = sand.u32 %s22, 1
          %s264 = scalar_lea.sflag [#allocation9], %s263
          %s265 = sand.u32 %s93, 1
          %s266 = smul.addr %s265, 2
          %s267 = scalar_lea.vmem [#allocation8], %s266
          %269 = vsyncadd %s264, 0
          %s270 = smul.addr %s29, 2
          %s271 = scalar_lea.hbm %s2, %s270
          %s273 = sshll.u32 %s271, 4
          %s274 = int_to_ptr.hbm [resolvable:$true] %s273
          %s275 = sshll.u32 %s267, 4
          %s276 = int_to_ptr.vmem [resolvable:$true] %s275
          %278 = dma.hbm_to_vmem [thread:$0]  %s274, 32, %s276, %s264
        $region36: #{tpu_custom_call.1} parent=27 // pred_fallthru
          _
      $region28: #{tpu_custom_call.1} parent=5 // pred_fallthru
        _
      %p279 = scmp.le.s32.totalorder 1, %s22
      %p280 = scmp.lt.s32.totalorder %s22, 5
      %p281 = pnand %p279, %p280
      %p282 = pneg %p281
      // Predicated region
      $region37: #{tpu_custom_call.1} parent=5 // pred_check
        _
      $region38: #{tpu_custom_call.1} parent=5 // pred_check_branch
        %284 = sbr.rel (%p281) target = $region40
      $region39: #{tpu_custom_call.1} parent=5 // pred_region
        %s285 = ssub.s32 %s22, 1
        // Predicated region
        $region41: #{tpu_custom_call.1} parent=39 // pred_check
          %p286 = pneg %p55
        $region42: #{tpu_custom_call.1} parent=39 // pred_check_branch
          %288 = sbr.rel (%p286) target = $region44
        $region43: #{tpu_custom_call.1} parent=39 // pred_region
          %290 = dma.done [#allocation6], 32
        $region44: #{tpu_custom_call.1} parent=39 // pred_fallthru
          _
        %s291 = sand.u32 %s70, 1
        %s292 = scalar_lea.sflag [#allocation4], %s291
        %s293 = sand.u32 %s70, 1
        %s294 = smul.addr %s293, 16
        %s295 = scalar_lea.vmem [#allocation7], %s294
        // Predicated region
        $region45: #{tpu_custom_call.1} parent=39 // pred_check
          %p296 = pneg %p83
        $region46: #{tpu_custom_call.1} parent=39 // pred_check_branch
          %298 = sbr.rel (%p296) target = $region48
        $region47: #{tpu_custom_call.1} parent=39 // pred_region
          %300 = dma.done %s292, 256
        $region48: #{tpu_custom_call.1} parent=39 // pred_fallthru
          _
        %s301 = sand.u32 %s27, 1
        %s302 = scalar_lea.sflag [#allocation9], %s301
        %s303 = sand.u32 %s96, 1
        %s304 = smul.addr %s303, 2
        %s305 = scalar_lea.vmem [#allocation8], %s304
        // Predicated region
        $region49: #{tpu_custom_call.1} parent=39 // pred_check
          %p306 = pneg %p109
        $region50: #{tpu_custom_call.1} parent=39 // pred_check_branch
          %308 = sbr.rel (%p306) target = $region52
        $region51: #{tpu_custom_call.1} parent=39 // pred_region
          %310 = dma.done %s302, 32
        $region52: #{tpu_custom_call.1} parent=39 // pred_fallthru
          _
        // Predicated region
        $region53: #{tpu_custom_call.1} parent=39 // pred_check
          %p311 = pneg %p130
        $region54: #{tpu_custom_call.1} parent=39 // pred_check_branch
          %313 = sbr.rel (%p311) target = $region56
        $region55: #{tpu_custom_call.1} parent=39 // pred_region
          %315 = dma.done [#allocation9], 4096
        $region56: #{tpu_custom_call.1} parent=39 // pred_fallthru
          _
        // Predicated region
        $region57: #{tpu_custom_call.1} parent=39 // pred_check
          %p316 = pneg %p151
        $region58: #{tpu_custom_call.1} parent=39 // pred_check_branch
          %318 = sbr.rel (%p316) target = $region60
        $region59: #{tpu_custom_call.1} parent=39 // pred_region
          %320 = dma.done [#allocation12], 16384
        $region60: #{tpu_custom_call.1} parent=39 // pred_fallthru
          _
        %321 = sfence
        %p322 = pneg %p55
        %p323 = pneg %p52
        %s324 = sand.u32 %s70, 1
        %s325 = scalar_lea.sflag [#allocation4], %s324
        %s326 = sand.u32 %s70, 1
        %s327 = smul.addr %s326, 16
        %s328 = scalar_lea.vmem [#allocation7], %s327
        %p329 = pneg %p83
        %p330 = pneg %p80
        %s331 = sand.u32 %s27, 1
        %s332 = scalar_lea.sflag [#allocation9], %s331
        %s333 = sand.u32 %s96, 1
        %s334 = smul.addr %s333, 2
        %s335 = scalar_lea.vmem [#allocation8], %s334
        %p336 = pneg %p109
        %p337 = pneg %p106
        %p338 = pneg %p130
        %p339 = pneg %p127
        %p340 = pneg %p151
        %p341 = pneg %p148
        %p342 = pneg %p179
        %p343 = pneg %p176
        %s344 = sand.u32 %s166, 1
        %s345 = scalar_lea.sflag [#allocation5], %s344
        %s346 = sand.u32 %s166, 1
        %s347 = smul.addr %s346, 8
        %s348 = scalar_lea.vmem [#allocation13], %s347
        %s349 = smul.u32 4, %s32
        %s350 = smul.u32 4, %s32
        %p351 = scmp.eq.s32.totalorder %s32, 0
        // Predicated region
        $region61: #{tpu_custom_call.1} parent=39 // pred_check
          %p352 = pneg %p351
        $region62: #{tpu_custom_call.1} parent=39 // pred_check_branch
          %354 = sbr.rel (%p352) target = $region64
        $region63: #{tpu_custom_call.1} parent=39 // pred_region
          %v355 = vld [vmem:[%s305] sm:$0x3]
          %356 = vst [vmem:[#allocation2] sm:$0x3] %v355
        $region64: #{tpu_custom_call.1} parent=39 // pred_fallthru
          _
        %v357 = vld [vmem:[#allocation2] sm:$0x3]
        %v358 = vld [vmem:[%s295] sm:$0xf]
        %s359 = smul.u32 %s31, 128
        %s360 = sld [smem:[#allocation3 + %s359]]
        %v361 = vstv %s360
        %v362 = vmul.f32 %v361, %v357
        %s363 = sadd.s32 %s359, 5
        %s364 = sld [smem:[#allocation3 + %s363]]
        %v365 = vstv %s364
        %v366 = vmul.f32 %v365, %v357
        %s367 = sadd.s32 %s359, 10
        %s368 = sld [smem:[#allocation3 + %s367]]
        %v369 = vstv %s368
        %v370 = vmul.f32 %v369, %v357
        %s371 = sadd.s32 %s359, 15
        %s372 = sld [smem:[#allocation3 + %s371]]
        %v373 = vstv %s372
        %v374 = vmul.f32 %v373, %v357
        %v375 = vld [vmem:[#allocation10] sm:$0xff]
        %v376 = vld [vmem:[#allocation10 + $0x8] sm:$0xff]
        %v377 = vld [vmem:[#allocation10 + $0x10] sm:$0xff]
        %v378 = vld [vmem:[#allocation10 + $0x18] sm:$0xff]
        %v379 = vld [vmem:[#allocation10 + $0x20] sm:$0xff]
        %v380 = vld [vmem:[#allocation10 + $0x28] sm:$0xff]
        %v381 = vld [vmem:[#allocation10 + $0x30] sm:$0xff]
        %v382 = vld [vmem:[#allocation10 + $0x38] sm:$0xff]
        %v383 = vld [vmem:[#allocation10 + $0x40] sm:$0xff]
        %v384 = vld [vmem:[#allocation10 + $0x48] sm:$0xff]
        %v385 = vld [vmem:[#allocation10 + $0x50] sm:$0xff]
        %v386 = vld [vmem:[#allocation10 + $0x58] sm:$0xff]
        %v387 = vld [vmem:[#allocation10 + $0x60] sm:$0xff]
        %v388 = vld [vmem:[#allocation10 + $0x68] sm:$0xff]
        %v389 = vld [vmem:[#allocation10 + $0x70] sm:$0xff]
        %v390 = vld [vmem:[#allocation10 + $0x78] sm:$0xff]
        %391 = vmatpush.msra.mxu0 %v390
        %392 = vmatpush.msra.mxu0 %v389
        %393 = vmatpush.msra.mxu0 %v388
        %394 = vmatpush.msra.mxu0 %v387
        %395 = vmatpush.msra.mxu0 %v386
        %396 = vmatpush.msra.mxu0 %v385
        %397 = vmatpush.msra.mxu0 %v384
        %398 = vmatpush.msra.mxu0 %v383
        %399 = vmatpush.msra.mxu0 %v382
        %400 = vmatpush.msra.mxu0 %v381
        %401 = vmatpush.msra.mxu0 %v380
        %402 = vmatpush.msra.mxu0 %v379
        %403 = vmatpush.msra.mxu0 %v378
        %404 = vmatpush.msra.mxu0 %v377
        %405 = vmatpush.msra.mxu0 %v376
        %406 = vmatpush.msra.mxu0 %v375
        %407 = vmatmul.f32.gmra.mxu0 %v357
        %v408 = vpop.f32.mrf.mxu0
        %v409 = vadd.f32 0.0, %v408
        %410 = vdwg.mxu0
        %s411 = sadd.s32 %s359, 1
        %s412 = sld [smem:[#allocation3 + %s411]]
        %v413 = vstv %s412
        %v414 = vmul.f32 %v413, %v409
        %v415 = vadd.f32 %v362, %v414
        %s416 = sadd.s32 %s359, 6
        %s417 = sld [smem:[#allocation3 + %s416]]
        %v418 = vstv %s417
        %v419 = vmul.f32 %v418, %v409
        %v420 = vadd.f32 %v366, %v419
        %s421 = sadd.s32 %s359, 11
        %s422 = sld [smem:[#allocation3 + %s421]]
        %v423 = vstv %s422
        %v424 = vmul.f32 %v423, %v409
        %v425 = vadd.f32 %v370, %v424
        %s426 = sadd.s32 %s359, 16
        %s427 = sld [smem:[#allocation3 + %s426]]
        %v428 = vstv %s427
        %v429 = vmul.f32 %v428, %v409
        %v430 = vadd.f32 %v374, %v429
        %431 = vmatpush.msra.mxu0 %v390
        %432 = vmatpush.msra.mxu0 %v389
        %433 = vmatpush.msra.mxu0 %v388
        %434 = vmatpush.msra.mxu0 %v387
        %435 = vmatpush.msra.mxu0 %v386
        %436 = vmatpush.msra.mxu0 %v385
        %437 = vmatpush.msra.mxu0 %v384
        %438 = vmatpush.msra.mxu0 %v383
        %439 = vmatpush.msra.mxu0 %v382
        %440 = vmatpush.msra.mxu0 %v381
        %441 = vmatpush.msra.mxu0 %v380
        %442 = vmatpush.msra.mxu0 %v379
        %443 = vmatpush.msra.mxu0 %v378
        %444 = vmatpush.msra.mxu0 %v377
        %445 = vmatpush.msra.mxu0 %v376
        %446 = vmatpush.msra.mxu0 %v375
        %447 = vmatmul.f32.gmra.mxu0 %v409
        %v448 = vpop.f32.mrf.mxu0
        %v449 = vadd.f32 0.0, %v448
        %450 = vdwg.mxu0
        %v451 = vmul.f32 %v449, 2.0
        %v452 = vsub.f32 %v451, %v357
        %s453 = sadd.s32 %s359, 2
        %s454 = sld [smem:[#allocation3 + %s453]]
        %v455 = vstv %s454
        %v456 = vmul.f32 %v455, %v452
        %v457 = vadd.f32 %v415, %v456
        %s458 = sadd.s32 %s359, 7
        %s459 = sld [smem:[#allocation3 + %s458]]
        %v460 = vstv %s459
        %v461 = vmul.f32 %v460, %v452
        %v462 = vadd.f32 %v420, %v461
        %s463 = sadd.s32 %s359, 12
        %s464 = sld [smem:[#allocation3 + %s463]]
        %v465 = vstv %s464
        %v466 = vmul.f32 %v465, %v452
        %v467 = vadd.f32 %v425, %v466
        %s468 = sadd.s32 %s359, 17
        %s469 = sld [smem:[#allocation3 + %s468]]
        %v470 = vstv %s469
        %v471 = vmul.f32 %v470, %v452
        %v472 = vadd.f32 %v430, %v471
        %s473 = scalar_lea.vmem [#allocation10], 128
        %v474 = vld [vmem:[%s473] sm:$0xff]
        %v475 = vld [vmem:[%s473 + $0x8] sm:$0xff]
        %v476 = vld [vmem:[%s473 + $0x10] sm:$0xff]
        %v477 = vld [vmem:[%s473 + $0x18] sm:$0xff]
        %v478 = vld [vmem:[%s473 + $0x20] sm:$0xff]
        %v479 = vld [vmem:[%s473 + $0x28] sm:$0xff]
        %v480 = vld [vmem:[%s473 + $0x30] sm:$0xff]
        %v481 = vld [vmem:[%s473 + $0x38] sm:$0xff]
        %v482 = vld [vmem:[%s473 + $0x40] sm:$0xff]
        %v483 = vld [vmem:[%s473 + $0x48] sm:$0xff]
        %v484 = vld [vmem:[%s473 + $0x50] sm:$0xff]
        %v485 = vld [vmem:[%s473 + $0x58] sm:$0xff]
        %v486 = vld [vmem:[%s473 + $0x60] sm:$0xff]
        %v487 = vld [vmem:[%s473 + $0x68] sm:$0xff]
        %v488 = vld [vmem:[%s473 + $0x70] sm:$0xff]
        %v489 = vld [vmem:[%s473 + $0x78] sm:$0xff]
        %490 = vmatpush.msra.mxu0 %v489
        %491 = vmatpush.msra.mxu0 %v488
        %492 = vmatpush.msra.mxu0 %v487
        %493 = vmatpush.msra.mxu0 %v486
        %494 = vmatpush.msra.mxu0 %v485
        %495 = vmatpush.msra.mxu0 %v484
        %496 = vmatpush.msra.mxu0 %v483
        %497 = vmatpush.msra.mxu0 %v482
        %498 = vmatpush.msra.mxu0 %v481
        %499 = vmatpush.msra.mxu0 %v480
        %500 = vmatpush.msra.mxu0 %v479
        %501 = vmatpush.msra.mxu0 %v478
        %502 = vmatpush.msra.mxu0 %v477
        %503 = vmatpush.msra.mxu0 %v476
        %504 = vmatpush.msra.mxu0 %v475
        %505 = vmatpush.msra.mxu0 %v474
        %506 = vmatmul.f32.gmra.mxu0 %v409
        %v507 = vpop.f32.mrf.mxu0
        %v508 = vadd.f32 0.0, %v507
        %509 = vdwg.mxu0
        %s510 = sadd.s32 %s359, 3
        %s511 = sld [smem:[#allocation3 + %s510]]
        %v512 = vstv %s511
        %v513 = vmul.f32 %v512, %v508
        %v514 = vadd.f32 %v457, %v513
        %s515 = sadd.s32 %s359, 8
        %s516 = sld [smem:[#allocation3 + %s515]]
        %v517 = vstv %s516
        %v518 = vmul.f32 %v517, %v508
        %v519 = vadd.f32 %v462, %v518
        %s520 = sadd.s32 %s359, 13
        %s521 = sld [smem:[#allocation3 + %s520]]
        %v522 = vstv %s521
        %v523 = vmul.f32 %v522, %v508
        %v524 = vadd.f32 %v467, %v523
        %s525 = sadd.s32 %s359, 18
        %s526 = sld [smem:[#allocation3 + %s525]]
        %v527 = vstv %s526
        %v528 = vmul.f32 %v527, %v508
        %v529 = vadd.f32 %v472, %v528
        %530 = vmatpush.msra.mxu0 %v489
        %531 = vmatpush.msra.mxu0 %v488
        %532 = vmatpush.msra.mxu0 %v487
        %533 = vmatpush.msra.mxu0 %v486
        %534 = vmatpush.msra.mxu0 %v485
        %535 = vmatpush.msra.mxu0 %v484
        %536 = vmatpush.msra.mxu0 %v483
        %537 = vmatpush.msra.mxu0 %v482
        %538 = vmatpush.msra.mxu0 %v481
        %539 = vmatpush.msra.mxu0 %v480
        %540 = vmatpush.msra.mxu0 %v479
        %541 = vmatpush.msra.mxu0 %v478
        %542 = vmatpush.msra.mxu0 %v477
        %543 = vmatpush.msra.mxu0 %v476
        %544 = vmatpush.msra.mxu0 %v475
        %545 = vmatpush.msra.mxu0 %v474
        %546 = vmatmul.f32.gmra.mxu0 %v508
        %v547 = vpop.f32.mrf.mxu0
        %v548 = vadd.f32 0.0, %v547
        %549 = vdwg.mxu0
        %v550 = vmul.f32 %v548, 2.0
        %v551 = vsub.f32 %v550, %v409
        %s552 = sadd.s32 %s359, 4
        %s553 = sld [smem:[#allocation3 + %s552]]
        %v554 = vstv %s553
        %v555 = vmul.f32 %v554, %v551
        %v556 = vadd.f32 %v514, %v555
        %s557 = sadd.s32 %s359, 9
        %s558 = sld [smem:[#allocation3 + %s557]]
        %v559 = vstv %s558
        %v560 = vmul.f32 %v559, %v551
        %v561 = vadd.f32 %v519, %v560
        %s562 = sadd.s32 %s359, 14
        %s563 = sld [smem:[#allocation3 + %s562]]
        %v564 = vstv %s563
        %v565 = vmul.f32 %v564, %v551
        %v566 = vadd.f32 %v524, %v565
        %s567 = sadd.s32 %s359, 19
        %s568 = sld [smem:[#allocation3 + %s567]]
        %v569 = vstv %s568
        %v570 = vmul.f32 %v569, %v551
        %v571 = vadd.f32 %v529, %v570
        %v573 = vrot.slane %v561, 6
        %v576 = vrot.slane %v566, 4
        %v579 = vrot.slane %v571, 2
        %vm581 = vcmask 1041408
        %v582 = vsel %vm581, %v556, %v573
        %vm583 = vcmask 1043456
        %v584 = vsel %vm583, %v582, %v576
        %vm585 = vcmask 1045504
        %v586 = vsel %vm585, %v584, %v579
        %v588 = vunpack.c.l.s4 1935823168
        %v589 = vunpack.c.0.s8 %v588
        %v590 = vperm.slane %v586, %v589
        %v591 = vld [vmem:[#allocation11] sm:$0xff]
        %v592 = vld [vmem:[#allocation11 + $0x8] sm:$0xff]
        %v593 = vld [vmem:[#allocation11 + $0x10] sm:$0xff]
        %v594 = vld [vmem:[#allocation11 + $0x18] sm:$0xff]
        %v595 = vld [vmem:[#allocation11 + $0x20] sm:$0xff]
        %v596 = vld [vmem:[#allocation11 + $0x28] sm:$0xff]
        %v597 = vld [vmem:[#allocation11 + $0x30] sm:$0xff]
        %v598 = vld [vmem:[#allocation11 + $0x38] sm:$0xff]
        %v599 = vld [vmem:[#allocation11 + $0x40] sm:$0xff]
        %v600 = vld [vmem:[#allocation11 + $0x48] sm:$0xff]
        %v601 = vld [vmem:[#allocation11 + $0x50] sm:$0xff]
        %v602 = vld [vmem:[#allocation11 + $0x58] sm:$0xff]
        %v603 = vld [vmem:[#allocation11 + $0x60] sm:$0xff]
        %v604 = vld [vmem:[#allocation11 + $0x68] sm:$0xff]
        %v605 = vld [vmem:[#allocation11 + $0x70] sm:$0xff]
        %v606 = vld [vmem:[#allocation11 + $0x78] sm:$0xff]
        %v607 = vld [vmem:[#allocation11 + $0x80] sm:$0xff]
        %v608 = vld [vmem:[#allocation11 + $0x88] sm:$0xff]
        %v609 = vld [vmem:[#allocation11 + $0x90] sm:$0xff]
        %v610 = vld [vmem:[#allocation11 + $0x98] sm:$0xff]
        %v611 = vld [vmem:[#allocation11 + $0xa0] sm:$0xff]
        %v612 = vld [vmem:[#allocation11 + $0xa8] sm:$0xff]
        %v613 = vld [vmem:[#allocation11 + $0xb0] sm:$0xff]
        %v614 = vld [vmem:[#allocation11 + $0xb8] sm:$0xff]
        %v615 = vld [vmem:[#allocation11 + $0xc0] sm:$0xff]
        %v616 = vld [vmem:[#allocation11 + $0xc8] sm:$0xff]
        %v617 = vld [vmem:[#allocation11 + $0xd0] sm:$0xff]
        %v618 = vld [vmem:[#allocation11 + $0xd8] sm:$0xff]
        %v619 = vld [vmem:[#allocation11 + $0xe0] sm:$0xff]
        %v620 = vld [vmem:[#allocation11 + $0xe8] sm:$0xff]
        %v621 = vld [vmem:[#allocation11 + $0xf0] sm:$0xff]
        %v622 = vld [vmem:[#allocation11 + $0xf8] sm:$0xff]
        %v623 = vld [vmem:[#allocation11 + $0x100] sm:$0xff]
        %v624 = vld [vmem:[#allocation11 + $0x108] sm:$0xff]
        %v625 = vld [vmem:[#allocation11 + $0x110] sm:$0xff]
        %v626 = vld [vmem:[#allocation11 + $0x118] sm:$0xff]
        %v627 = vld [vmem:[#allocation11 + $0x120] sm:$0xff]
        %v628 = vld [vmem:[#allocation11 + $0x128] sm:$0xff]
        %v629 = vld [vmem:[#allocation11 + $0x130] sm:$0xff]
        %v630 = vld [vmem:[#allocation11 + $0x138] sm:$0xff]
        %v631 = vld [vmem:[#allocation11 + $0x140] sm:$0xff]
        %v632 = vld [vmem:[#allocation11 + $0x148] sm:$0xff]
        %v633 = vld [vmem:[#allocation11 + $0x150] sm:$0xff]
        %v634 = vld [vmem:[#allocation11 + $0x158] sm:$0xff]
        %v635 = vld [vmem:[#allocation11 + $0x160] sm:$0xff]
        %v636 = vld [vmem:[#allocation11 + $0x168] sm:$0xff]
        %v637 = vld [vmem:[#allocation11 + $0x170] sm:$0xff]
        %v638 = vld [vmem:[#allocation11 + $0x178] sm:$0xff]
        %v639 = vld [vmem:[#allocation11 + $0x180] sm:$0xff]
        %v640 = vld [vmem:[#allocation11 + $0x188] sm:$0xff]
        %v641 = vld [vmem:[#allocation11 + $0x190] sm:$0xff]
        %v642 = vld [vmem:[#allocation11 + $0x198] sm:$0xff]
        %v643 = vld [vmem:[#allocation11 + $0x1a0] sm:$0xff]
        %v644 = vld [vmem:[#allocation11 + $0x1a8] sm:$0xff]
        %v645 = vld [vmem:[#allocation11 + $0x1b0] sm:$0xff]
        %v646 = vld [vmem:[#allocation11 + $0x1b8] sm:$0xff]
        %v647 = vld [vmem:[#allocation11 + $0x1c0] sm:$0xff]
        %v648 = vld [vmem:[#allocation11 + $0x1c8] sm:$0xff]
        %v649 = vld [vmem:[#allocation11 + $0x1d0] sm:$0xff]
        %v650 = vld [vmem:[#allocation11 + $0x1d8] sm:$0xff]
        %v651 = vld [vmem:[#allocation11 + $0x1e0] sm:$0xff]
        %v652 = vld [vmem:[#allocation11 + $0x1e8] sm:$0xff]
        %v653 = vld [vmem:[#allocation11 + $0x1f0] sm:$0xff]
        %v654 = vld [vmem:[#allocation11 + $0x1f8] sm:$0xff]
        %v655 = vld [vmem:[#allocation11 + $0x200] sm:$0xff]
        %v656 = vld [vmem:[#allocation11 + $0x208] sm:$0xff]
        %v657 = vld [vmem:[#allocation11 + $0x210] sm:$0xff]
        %v658 = vld [vmem:[#allocation11 + $0x218] sm:$0xff]
        %v659 = vld [vmem:[#allocation11 + $0x220] sm:$0xff]
        %v660 = vld [vmem:[#allocation11 + $0x228] sm:$0xff]
        %v661 = vld [vmem:[#allocation11 + $0x230] sm:$0xff]
        %v662 = vld [vmem:[#allocation11 + $0x238] sm:$0xff]
        %v663 = vld [vmem:[#allocation11 + $0x240] sm:$0xff]
        %v664 = vld [vmem:[#allocation11 + $0x248] sm:$0xff]
        %v665 = vld [vmem:[#allocation11 + $0x250] sm:$0xff]
        %v666 = vld [vmem:[#allocation11 + $0x258] sm:$0xff]
        %v667 = vld [vmem:[#allocation11 + $0x260] sm:$0xff]
        %v668 = vld [vmem:[#allocation11 + $0x268] sm:$0xff]
        %v669 = vld [vmem:[#allocation11 + $0x270] sm:$0xff]
        %v670 = vld [vmem:[#allocation11 + $0x278] sm:$0xff]
        %v671 = vld [vmem:[#allocation11 + $0x280] sm:$0xff]
        %v672 = vld [vmem:[#allocation11 + $0x288] sm:$0xff]
        %v673 = vld [vmem:[#allocation11 + $0x290] sm:$0xff]
        %v674 = vld [vmem:[#allocation11 + $0x298] sm:$0xff]
        %v675 = vld [vmem:[#allocation11 + $0x2a0] sm:$0xff]
        %v676 = vld [vmem:[#allocation11 + $0x2a8] sm:$0xff]
        %v677 = vld [vmem:[#allocation11 + $0x2b0] sm:$0xff]
        %v678 = vld [vmem:[#allocation11 + $0x2b8] sm:$0xff]
        %v679 = vld [vmem:[#allocation11 + $0x2c0] sm:$0xff]
        %v680 = vld [vmem:[#allocation11 + $0x2c8] sm:$0xff]
        %v681 = vld [vmem:[#allocation11 + $0x2d0] sm:$0xff]
        %v682 = vld [vmem:[#allocation11 + $0x2d8] sm:$0xff]
        %v683 = vld [vmem:[#allocation11 + $0x2e0] sm:$0xff]
        %v684 = vld [vmem:[#allocation11 + $0x2e8] sm:$0xff]
        %v685 = vld [vmem:[#allocation11 + $0x2f0] sm:$0xff]
        %v686 = vld [vmem:[#allocation11 + $0x2f8] sm:$0xff]
        %v687 = vld [vmem:[#allocation11 + $0x300] sm:$0xff]
        %v688 = vld [vmem:[#allocation11 + $0x308] sm:$0xff]
        %v689 = vld [vmem:[#allocation11 + $0x310] sm:$0xff]
        %v690 = vld [vmem:[#allocation11 + $0x318] sm:$0xff]
        %v691 = vld [vmem:[#allocation11 + $0x320] sm:$0xff]
        %v692 = vld [vmem:[#allocation11 + $0x328] sm:$0xff]
        %v693 = vld [vmem:[#allocation11 + $0x330] sm:$0xff]
        %v694 = vld [vmem:[#allocation11 + $0x338] sm:$0xff]
        %v695 = vld [vmem:[#allocation11 + $0x340] sm:$0xff]
        %v696 = vld [vmem:[#allocation11 + $0x348] sm:$0xff]
        %v697 = vld [vmem:[#allocation11 + $0x350] sm:$0xff]
        %v698 = vld [vmem:[#allocation11 + $0x358] sm:$0xff]
        %v699 = vld [vmem:[#allocation11 + $0x360] sm:$0xff]
        %v700 = vld [vmem:[#allocation11 + $0x368] sm:$0xff]
        %v701 = vld [vmem:[#allocation11 + $0x370] sm:$0xff]
        %v702 = vld [vmem:[#allocation11 + $0x378] sm:$0xff]
        %v703 = vld [vmem:[#allocation11 + $0x380] sm:$0xff]
        %v704 = vld [vmem:[#allocation11 + $0x388] sm:$0xff]
        %v705 = vld [vmem:[#allocation11 + $0x390] sm:$0xff]
        %v706 = vld [vmem:[#allocation11 + $0x398] sm:$0xff]
        %v707 = vld [vmem:[#allocation11 + $0x3a0] sm:$0xff]
        %v708 = vld [vmem:[#allocation11 + $0x3a8] sm:$0xff]
        %v709 = vld [vmem:[#allocation11 + $0x3b0] sm:$0xff]
        %v710 = vld [vmem:[#allocation11 + $0x3b8] sm:$0xff]
        %v711 = vld [vmem:[#allocation11 + $0x3c0] sm:$0xff]
        %v712 = vld [vmem:[#allocation11 + $0x3c8] sm:$0xff]
        %v713 = vld [vmem:[#allocation11 + $0x3d0] sm:$0xff]
        %v714 = vld [vmem:[#allocation11 + $0x3d8] sm:$0xff]
        %v715 = vld [vmem:[#allocation11 + $0x3e0] sm:$0xff]
        %v716 = vld [vmem:[#allocation11 + $0x3e8] sm:$0xff]
        %v717 = vld [vmem:[#allocation11 + $0x3f0] sm:$0xff]
        %v718 = vld [vmem:[#allocation11 + $0x3f8] sm:$0xff]
        %720 = vst [vmem:[#allocation1] ss:$4 sm:$0xff] %v590
        %v721 = vld.sshfl [vmem:[#allocation1] sm:$0xff pattern:$0x73625140]
        %v722 = vld.sshfl [vmem:[#allocation1 + $0x8] sm:$0xff pattern:$0x73625140]
        %v723 = vld.sshfl [vmem:[#allocation1 + $0x10] sm:$0xff pattern:$0x73625140]
        %v724 = vld.sshfl [vmem:[#allocation1 + $0x18] sm:$0xff pattern:$0x73625140]
        %729 = vmatpush.msra.mxu0 %v621
        %730 = vmatpush.msra.mxu0 %v619
        %731 = vmatpush.msra.mxu0 %v617
        %732 = vmatpush.msra.mxu0 %v615
        %733 = vmatpush.msra.mxu0 %v613
        %734 = vmatpush.msra.mxu0 %v611
        %735 = vmatpush.msra.mxu0 %v609
        %736 = vmatpush.msra.mxu0 %v607
        %737 = vmatpush.msra.mxu0 %v605
        %738 = vmatpush.msra.mxu0 %v603
        %739 = vmatpush.msra.mxu0 %v601
        %740 = vmatpush.msra.mxu0 %v599
        %741 = vmatpush.msra.mxu0 %v597
        %742 = vmatpush.msra.mxu0 %v595
        %743 = vmatpush.msra.mxu0 %v593
        %744 = vmatpush.msra.mxu0 %v591
        %745 = vmatmul.f32.gmra.mxu0 %v721
        %v746 = vpop.f32.mrf.mxu0
        %v747 = vadd.f32 0.0, %v746
        %748 = vdwg.mxu0
        %749 = vmatpush.msra.mxu0 %v653
        %750 = vmatpush.msra.mxu0 %v651
        %751 = vmatpush.msra.mxu0 %v649
        %752 = vmatpush.msra.mxu0 %v647
        %753 = vmatpush.msra.mxu0 %v645
        %754 = vmatpush.msra.mxu0 %v643
        %755 = vmatpush.msra.mxu0 %v641
        %756 = vmatpush.msra.mxu0 %v639
        %757 = vmatpush.msra.mxu0 %v637
        %758 = vmatpush.msra.mxu0 %v635
        %759 = vmatpush.msra.mxu0 %v633
        %760 = vmatpush.msra.mxu0 %v631
        %761 = vmatpush.msra.mxu0 %v629
        %762 = vmatpush.msra.mxu0 %v627
        %763 = vmatpush.msra.mxu0 %v625
        %764 = vmatpush.msra.mxu0 %v623
        %765 = vmatmul.f32.gmra.mxu0 %v722
        %v766 = vpop.f32.mrf.mxu0
        %v767 = vadd.f32 %v747, %v766
        %768 = vdwg.mxu0
        %769 = vmatpush.msra.mxu0 %v685
        %770 = vmatpush.msra.mxu0 %v683
        %771 = vmatpush.msra.mxu0 %v681
        %772 = vmatpush.msra.mxu0 %v679
        %773 = vmatpush.msra.mxu0 %v677
        %774 = vmatpush.msra.mxu0 %v675
        %775 = vmatpush.msra.mxu0 %v673
        %776 = vmatpush.msra.mxu0 %v671
        %777 = vmatpush.msra.mxu0 %v669
        %778 = vmatpush.msra.mxu0 %v667
        %779 = vmatpush.msra.mxu0 %v665
        %780 = vmatpush.msra.mxu0 %v663
        %781 = vmatpush.msra.mxu0 %v661
        %782 = vmatpush.msra.mxu0 %v659
        %783 = vmatpush.msra.mxu0 %v657
        %784 = vmatpush.msra.mxu0 %v655
        %785 = vmatmul.f32.gmra.mxu0 %v723
        %v786 = vpop.f32.mrf.mxu0
        %v787 = vadd.f32 %v767, %v786
        %788 = vdwg.mxu0
        %789 = vmatpush.msra.mxu0 %v717
        %790 = vmatpush.msra.mxu0 %v715
        %791 = vmatpush.msra.mxu0 %v713
        %792 = vmatpush.msra.mxu0 %v711
        %793 = vmatpush.msra.mxu0 %v709
        %794 = vmatpush.msra.mxu0 %v707
        %795 = vmatpush.msra.mxu0 %v705
        %796 = vmatpush.msra.mxu0 %v703
        %797 = vmatpush.msra.mxu0 %v701
        %798 = vmatpush.msra.mxu0 %v699
        %799 = vmatpush.msra.mxu0 %v697
        %800 = vmatpush.msra.mxu0 %v695
        %801 = vmatpush.msra.mxu0 %v693
        %802 = vmatpush.msra.mxu0 %v691
        %803 = vmatpush.msra.mxu0 %v689
        %804 = vmatpush.msra.mxu0 %v687
        %805 = vmatmul.f32.gmra.mxu0 %v724
        %v806 = vpop.f32.mrf.mxu0
        %v807 = vadd.f32 %v787, %v806
        %808 = vdwg.mxu0
        %809 = vmatpush.msra.mxu0 %v622
        %810 = vmatpush.msra.mxu0 %v620
        %811 = vmatpush.msra.mxu0 %v618
        %812 = vmatpush.msra.mxu0 %v616
        %813 = vmatpush.msra.mxu0 %v614
        %814 = vmatpush.msra.mxu0 %v612
        %815 = vmatpush.msra.mxu0 %v610
        %816 = vmatpush.msra.mxu0 %v608
        %817 = vmatpush.msra.mxu0 %v606
        %818 = vmatpush.msra.mxu0 %v604
        %819 = vmatpush.msra.mxu0 %v602
        %820 = vmatpush.msra.mxu0 %v600
        %821 = vmatpush.msra.mxu0 %v598
        %822 = vmatpush.msra.mxu0 %v596
        %823 = vmatpush.msra.mxu0 %v594
        %824 = vmatpush.msra.mxu0 %v592
        %825 = vmatmul.f32.gmra.mxu0 %v721
        %v826 = vpop.f32.mrf.mxu0
        %v827 = vadd.f32 0.0, %v826
        %828 = vdwg.mxu0
        %829 = vmatpush.msra.mxu0 %v654
        %830 = vmatpush.msra.mxu0 %v652
        %831 = vmatpush.msra.mxu0 %v650
        %832 = vmatpush.msra.mxu0 %v648
        %833 = vmatpush.msra.mxu0 %v646
        %834 = vmatpush.msra.mxu0 %v644
        %835 = vmatpush.msra.mxu0 %v642
        %836 = vmatpush.msra.mxu0 %v640
        %837 = vmatpush.msra.mxu0 %v638
        %838 = vmatpush.msra.mxu0 %v636
        %839 = vmatpush.msra.mxu0 %v634
        %840 = vmatpush.msra.mxu0 %v632
        %841 = vmatpush.msra.mxu0 %v630
        %842 = vmatpush.msra.mxu0 %v628
        %843 = vmatpush.msra.mxu0 %v626
        %844 = vmatpush.msra.mxu0 %v624
        %845 = vmatmul.f32.gmra.mxu0 %v722
        %v846 = vpop.f32.mrf.mxu0
        %v847 = vadd.f32 %v827, %v846
        %848 = vdwg.mxu0
        %849 = vmatpush.msra.mxu0 %v686
        %850 = vmatpush.msra.mxu0 %v684
        %851 = vmatpush.msra.mxu0 %v682
        %852 = vmatpush.msra.mxu0 %v680
        %853 = vmatpush.msra.mxu0 %v678
        %854 = vmatpush.msra.mxu0 %v676
        %855 = vmatpush.msra.mxu0 %v674
        %856 = vmatpush.msra.mxu0 %v672
        %857 = vmatpush.msra.mxu0 %v670
        %858 = vmatpush.msra.mxu0 %v668
        %859 = vmatpush.msra.mxu0 %v666
        %860 = vmatpush.msra.mxu0 %v664
        %861 = vmatpush.msra.mxu0 %v662
        %862 = vmatpush.msra.mxu0 %v660
        %863 = vmatpush.msra.mxu0 %v658
        %864 = vmatpush.msra.mxu0 %v656
        %865 = vmatmul.f32.gmra.mxu0 %v723
        %v866 = vpop.f32.mrf.mxu0
        %v867 = vadd.f32 %v847, %v866
        %868 = vdwg.mxu0
        %869 = vmatpush.msra.mxu0 %v718
        %870 = vmatpush.msra.mxu0 %v716
        %871 = vmatpush.msra.mxu0 %v714
        %872 = vmatpush.msra.mxu0 %v712
        %873 = vmatpush.msra.mxu0 %v710
        %874 = vmatpush.msra.mxu0 %v708
        %875 = vmatpush.msra.mxu0 %v706
        %876 = vmatpush.msra.mxu0 %v704
        %877 = vmatpush.msra.mxu0 %v702
        %878 = vmatpush.msra.mxu0 %v700
        %879 = vmatpush.msra.mxu0 %v698
        %880 = vmatpush.msra.mxu0 %v696
        %881 = vmatpush.msra.mxu0 %v694
        %882 = vmatpush.msra.mxu0 %v692
        %883 = vmatpush.msra.mxu0 %v690
        %884 = vmatpush.msra.mxu0 %v688
        %885 = vmatmul.f32.gmra.mxu0 %v724
        %v886 = vpop.f32.mrf.mxu0
        %v887 = vadd.f32 %v867, %v886
        %888 = vdwg.mxu0
        %v889 = vrot.slane %v887, 4
        %vm890 = vcmask 1047556
        %v891 = vsel %vm890, %v889, %v807
        %v893 = vunpack.c.l.s4 1934713408
        %v894 = vunpack.c.0.s8 %v893
        %v895 = vperm.slane %v891, %v894
        %v896 = vrot.slane %v895, 4
        %v897 = vsel %vm890, 0.0, %v896
        %v898 = vadd.f32 %v895, %v358
        %v899 = vxor.u32 %v898, 2147483648
        %v900 = vmul.f32 %v899, 1.442695
        %v901 = vpow.pop %v900
        %v902 = vadd.f32 %v901, 1.0
        %v903 = vrcp.pop %v902
        %v904 = vmul.f32 %v902, %v903
        %v905 = vsub.f32 1.0, %v904
        %v906 = vmul.f32 %v903, %v905
        %v907 = vadd.f32 %v903, %v906
        %vm908 = vweird.f32 %v902
        %vm909 = vweird.f32 %v903
        %vm910 = vmor %vm908, %vm909
        %v911 = vsel %vm910, %v903, %v907
        %v912 = vand.u32 2147483647, %v902
        %vm913 = vcmp.eq.f32.partialorder %v912, 8.507059e+37
        %v914 = vand.u32 %v902, 2147483648
        %v915 = vor.u32 1.1754944e-38, %v914
        %v916 = vsel %vm913, %v915, %v911
        %v917 = vmul.f32 1.0, %v916
        %v919 = vrot.slane %v358, 2
        %v921 = vadd.f32 %v897, %v919
        %v922 = vxor.u32 %v921, 2147483648
        %v923 = vmul.f32 %v922, 1.442695
        %v924 = vpow.pop %v923
        %v925 = vadd.f32 %v924, 1.0
        %v926 = vrcp.pop %v925
        %v927 = vmul.f32 %v925, %v926
        %v928 = vsub.f32 1.0, %v927
        %v929 = vmul.f32 %v926, %v928
        %v930 = vadd.f32 %v926, %v929
        %vm931 = vweird.f32 %v925
        %vm932 = vweird.f32 %v926
        %vm933 = vmor %vm931, %vm932
        %v934 = vsel %vm933, %v926, %v930
        %v935 = vand.u32 2147483647, %v925
        %vm936 = vcmp.eq.f32.partialorder %v935, 8.507059e+37
        %v937 = vand.u32 %v925, 2147483648
        %v938 = vor.u32 1.1754944e-38, %v937
        %v939 = vsel %vm936, %v938, %v934
        %v940 = vmul.f32 1.0, %v939
        %v941 = vmul.f32 %v917, %v357
        %v942 = vmul.f32 %v369, %v941
        %v943 = vmul.f32 %v373, %v941
        %944 = vmatpush.msra.mxu0 %v390
        %945 = vmatpush.msra.mxu0 %v389
        %946 = vmatpush.msra.mxu0 %v388
        %947 = vmatpush.msra.mxu0 %v387
        %948 = vmatpush.msra.mxu0 %v386
        %949 = vmatpush.msra.mxu0 %v385
        %950 = vmatpush.msra.mxu0 %v384
        %951 = vmatpush.msra.mxu0 %v383
        %952 = vmatpush.msra.mxu0 %v382
        %953 = vmatpush.msra.mxu0 %v381
        %954 = vmatpush.msra.mxu0 %v380
        %955 = vmatpush.msra.mxu0 %v379
        %956 = vmatpush.msra.mxu0 %v378
        %957 = vmatpush.msra.mxu0 %v377
        %958 = vmatpush.msra.mxu0 %v376
        %959 = vmatpush.msra.mxu0 %v375
        %960 = vmatmul.f32.gmra.mxu0 %v941
        %v961 = vpop.f32.mrf.mxu0
        %v962 = vadd.f32 0.0, %v961
        %963 = vdwg.mxu0
        %v964 = vmul.f32 %v423, %v962
        %v965 = vadd.f32 %v942, %v964
        %v966 = vmul.f32 %v428, %v962
        %v967 = vadd.f32 %v943, %v966
        %968 = vmatpush.msra.mxu0 %v390
        %969 = vmatpush.msra.mxu0 %v389
        %970 = vmatpush.msra.mxu0 %v388
        %971 = vmatpush.msra.mxu0 %v387
        %972 = vmatpush.msra.mxu0 %v386
        %973 = vmatpush.msra.mxu0 %v385
        %974 = vmatpush.msra.mxu0 %v384
        %975 = vmatpush.msra.mxu0 %v383
        %976 = vmatpush.msra.mxu0 %v382
        %977 = vmatpush.msra.mxu0 %v381
        %978 = vmatpush.msra.mxu0 %v380
        %979 = vmatpush.msra.mxu0 %v379
        %980 = vmatpush.msra.mxu0 %v378
        %981 = vmatpush.msra.mxu0 %v377
        %982 = vmatpush.msra.mxu0 %v376
        %983 = vmatpush.msra.mxu0 %v375
        %984 = vmatmul.f32.gmra.mxu0 %v962
        %v985 = vpop.f32.mrf.mxu0
        %v986 = vadd.f32 0.0, %v985
        %987 = vdwg.mxu0
        %v988 = vmul.f32 %v986, 2.0
        %v989 = vsub.f32 %v988, %v941
        %v990 = vmul.f32 %v465, %v989
        %v991 = vadd.f32 %v965, %v990
        %v992 = vmul.f32 %v470, %v989
        %v993 = vadd.f32 %v967, %v992
        %994 = vmatpush.msra.mxu0 %v489
        %995 = vmatpush.msra.mxu0 %v488
        %996 = vmatpush.msra.mxu0 %v487
        %997 = vmatpush.msra.mxu0 %v486
        %998 = vmatpush.msra.mxu0 %v485
        %999 = vmatpush.msra.mxu0 %v484
        %1000 = vmatpush.msra.mxu0 %v483
        %1001 = vmatpush.msra.mxu0 %v482
        %1002 = vmatpush.msra.mxu0 %v481
        %1003 = vmatpush.msra.mxu0 %v480
        %1004 = vmatpush.msra.mxu0 %v479
        %1005 = vmatpush.msra.mxu0 %v478
        %1006 = vmatpush.msra.mxu0 %v477
        %1007 = vmatpush.msra.mxu0 %v476
        %1008 = vmatpush.msra.mxu0 %v475
        %1009 = vmatpush.msra.mxu0 %v474
        %1010 = vmatmul.f32.gmra.mxu0 %v962
        %v1011 = vpop.f32.mrf.mxu0
        %v1012 = vadd.f32 0.0, %v1011
        %1013 = vdwg.mxu0
        %v1014 = vmul.f32 %v522, %v1012
        %v1015 = vadd.f32 %v991, %v1014
        %v1016 = vmul.f32 %v527, %v1012
        %v1017 = vadd.f32 %v993, %v1016
        %1018 = vmatpush.msra.mxu0 %v489
        %1019 = vmatpush.msra.mxu0 %v488
        %1020 = vmatpush.msra.mxu0 %v487
        %1021 = vmatpush.msra.mxu0 %v486
        %1022 = vmatpush.msra.mxu0 %v485
        %1023 = vmatpush.msra.mxu0 %v484
        %1024 = vmatpush.msra.mxu0 %v483
        %1025 = vmatpush.msra.mxu0 %v482
        %1026 = vmatpush.msra.mxu0 %v481
        %1027 = vmatpush.msra.mxu0 %v480
        %1028 = vmatpush.msra.mxu0 %v479
        %1029 = vmatpush.msra.mxu0 %v478
        %1030 = vmatpush.msra.mxu0 %v477
        %1031 = vmatpush.msra.mxu0 %v476
        %1032 = vmatpush.msra.mxu0 %v475
        %1033 = vmatpush.msra.mxu0 %v474
        %1034 = vmatmul.f32.gmra.mxu0 %v1012
        %v1035 = vpop.f32.mrf.mxu0
        %v1036 = vadd.f32 0.0, %v1035
        %1037 = vdwg.mxu0
        %v1038 = vmul.f32 %v1036, 2.0
        %v1039 = vsub.f32 %v1038, %v962
        %v1040 = vmul.f32 %v564, %v1039
        %v1041 = vadd.f32 %v1015, %v1040
        %v1042 = vmul.f32 %v569, %v1039
        %v1043 = vadd.f32 %v1017, %v1042
        %v1045 = vrot.slane %v1043, 6
        %v1047 = vsel %vm581, %v1041, %v1045
        %v1049 = vunpack.c.l.s4 1935823168
        %v1050 = vunpack.c.0.s8 %v1049
        %v1051 = vperm.slane %v1047, %v1050
        %v1053 = vperm.slane %v1051, 0
        %v1054 = vperm.slane %v1051, 2
        %v1055 = vperm.slane %v1051, 4
        %v1056 = vperm.slane %v1051, 6
        %1061 = vmatpush.msra.mxu0 %v621
        %1062 = vmatpush.msra.mxu0 %v619
        %1063 = vmatpush.msra.mxu0 %v617
        %1064 = vmatpush.msra.mxu0 %v615
        %1065 = vmatpush.msra.mxu0 %v613
        %1066 = vmatpush.msra.mxu0 %v611
        %1067 = vmatpush.msra.mxu0 %v609
        %1068 = vmatpush.msra.mxu0 %v607
        %1069 = vmatpush.msra.mxu0 %v605
        %1070 = vmatpush.msra.mxu0 %v603
        %1071 = vmatpush.msra.mxu0 %v601
        %1072 = vmatpush.msra.mxu0 %v599
        %1073 = vmatpush.msra.mxu0 %v597
        %1074 = vmatpush.msra.mxu0 %v595
        %1075 = vmatpush.msra.mxu0 %v593
        %1076 = vmatpush.msra.mxu0 %v591
        %1077 = vmatmul.f32.gmra.mxu0 %v1053
        %v1078 = vpop.f32.mrf.mxu0
        %v1079 = vadd.f32 0.0, %v1078
        %1080 = vdwg.mxu0
        %1081 = vmatpush.msra.mxu0 %v653
        %1082 = vmatpush.msra.mxu0 %v651
        %1083 = vmatpush.msra.mxu0 %v649
        %1084 = vmatpush.msra.mxu0 %v647
        %1085 = vmatpush.msra.mxu0 %v645
        %1086 = vmatpush.msra.mxu0 %v643
        %1087 = vmatpush.msra.mxu0 %v641
        %1088 = vmatpush.msra.mxu0 %v639
        %1089 = vmatpush.msra.mxu0 %v637
        %1090 = vmatpush.msra.mxu0 %v635
        %1091 = vmatpush.msra.mxu0 %v633
        %1092 = vmatpush.msra.mxu0 %v631
        %1093 = vmatpush.msra.mxu0 %v629
        %1094 = vmatpush.msra.mxu0 %v627
        %1095 = vmatpush.msra.mxu0 %v625
        %1096 = vmatpush.msra.mxu0 %v623
        %1097 = vmatmul.f32.gmra.mxu0 %v1054
        %v1098 = vpop.f32.mrf.mxu0
        %v1099 = vadd.f32 %v1079, %v1098
        %1100 = vdwg.mxu0
        %1101 = vmatpush.msra.mxu0 %v685
        %1102 = vmatpush.msra.mxu0 %v683
        %1103 = vmatpush.msra.mxu0 %v681
        %1104 = vmatpush.msra.mxu0 %v679
        %1105 = vmatpush.msra.mxu0 %v677
        %1106 = vmatpush.msra.mxu0 %v675
        %1107 = vmatpush.msra.mxu0 %v673
        %1108 = vmatpush.msra.mxu0 %v671
        %1109 = vmatpush.msra.mxu0 %v669
        %1110 = vmatpush.msra.mxu0 %v667
        %1111 = vmatpush.msra.mxu0 %v665
        %1112 = vmatpush.msra.mxu0 %v663
        %1113 = vmatpush.msra.mxu0 %v661
        %1114 = vmatpush.msra.mxu0 %v659
        %1115 = vmatpush.msra.mxu0 %v657
        %1116 = vmatpush.msra.mxu0 %v655
        %1117 = vmatmul.f32.gmra.mxu0 %v1055
        %v1118 = vpop.f32.mrf.mxu0
        %v1119 = vadd.f32 %v1099, %v1118
        %1120 = vdwg.mxu0
        %1121 = vmatpush.msra.mxu0 %v717
        %1122 = vmatpush.msra.mxu0 %v715
        %1123 = vmatpush.msra.mxu0 %v713
        %1124 = vmatpush.msra.mxu0 %v711
        %1125 = vmatpush.msra.mxu0 %v709
        %1126 = vmatpush.msra.mxu0 %v707
        %1127 = vmatpush.msra.mxu0 %v705
        %1128 = vmatpush.msra.mxu0 %v703
        %1129 = vmatpush.msra.mxu0 %v701
        %1130 = vmatpush.msra.mxu0 %v699
        %1131 = vmatpush.msra.mxu0 %v697
        %1132 = vmatpush.msra.mxu0 %v695
        %1133 = vmatpush.msra.mxu0 %v693
        %1134 = vmatpush.msra.mxu0 %v691
        %1135 = vmatpush.msra.mxu0 %v689
        %1136 = vmatpush.msra.mxu0 %v687
        %1137 = vmatmul.f32.gmra.mxu0 %v1056
        %v1138 = vpop.f32.mrf.mxu0
        %v1139 = vadd.f32 %v1119, %v1138
        %1140 = vdwg.mxu0
        %1141 = vmatpush.msra.mxu0 %v622
        %1142 = vmatpush.msra.mxu0 %v620
        %1143 = vmatpush.msra.mxu0 %v618
        %1144 = vmatpush.msra.mxu0 %v616
        %1145 = vmatpush.msra.mxu0 %v614
        %1146 = vmatpush.msra.mxu0 %v612
        %1147 = vmatpush.msra.mxu0 %v610
        %1148 = vmatpush.msra.mxu0 %v608
        %1149 = vmatpush.msra.mxu0 %v606
        %1150 = vmatpush.msra.mxu0 %v604
        %1151 = vmatpush.msra.mxu0 %v602
        %1152 = vmatpush.msra.mxu0 %v600
        %1153 = vmatpush.msra.mxu0 %v598
        %1154 = vmatpush.msra.mxu0 %v596
        %1155 = vmatpush.msra.mxu0 %v594
        %1156 = vmatpush.msra.mxu0 %v592
        %1157 = vmatmul.f32.gmra.mxu0 %v1053
        %v1158 = vpop.f32.mrf.mxu0
        %v1159 = vadd.f32 0.0, %v1158
        %1160 = vdwg.mxu0
        %1161 = vmatpush.msra.mxu0 %v654
        %1162 = vmatpush.msra.mxu0 %v652
        %1163 = vmatpush.msra.mxu0 %v650
        %1164 = vmatpush.msra.mxu0 %v648
        %1165 = vmatpush.msra.mxu0 %v646
        %1166 = vmatpush.msra.mxu0 %v644
        %1167 = vmatpush.msra.mxu0 %v642
        %1168 = vmatpush.msra.mxu0 %v640
        %1169 = vmatpush.msra.mxu0 %v638
        %1170 = vmatpush.msra.mxu0 %v636
        %1171 = vmatpush.msra.mxu0 %v634
        %1172 = vmatpush.msra.mxu0 %v632
        %1173 = vmatpush.msra.mxu0 %v630
        %1174 = vmatpush.msra.mxu0 %v628
        %1175 = vmatpush.msra.mxu0 %v626
        %1176 = vmatpush.msra.mxu0 %v624
        %1177 = vmatmul.f32.gmra.mxu0 %v1054
        %v1178 = vpop.f32.mrf.mxu0
        %v1179 = vadd.f32 %v1159, %v1178
        %1180 = vdwg.mxu0
        %1181 = vmatpush.msra.mxu0 %v686
        %1182 = vmatpush.msra.mxu0 %v684
        %1183 = vmatpush.msra.mxu0 %v682
        %1184 = vmatpush.msra.mxu0 %v680
        %1185 = vmatpush.msra.mxu0 %v678
        %1186 = vmatpush.msra.mxu0 %v676
        %1187 = vmatpush.msra.mxu0 %v674
        %1188 = vmatpush.msra.mxu0 %v672
        %1189 = vmatpush.msra.mxu0 %v670
        %1190 = vmatpush.msra.mxu0 %v668
        %1191 = vmatpush.msra.mxu0 %v666
        %1192 = vmatpush.msra.mxu0 %v664
        %1193 = vmatpush.msra.mxu0 %v662
        %1194 = vmatpush.msra.mxu0 %v660
        %1195 = vmatpush.msra.mxu0 %v658
        %1196 = vmatpush.msra.mxu0 %v656
        %1197 = vmatmul.f32.gmra.mxu0 %v1055
        %v1198 = vpop.f32.mrf.mxu0
        %v1199 = vadd.f32 %v1179, %v1198
        %1200 = vdwg.mxu0
        %1201 = vmatpush.msra.mxu0 %v718
        %1202 = vmatpush.msra.mxu0 %v716
        %1203 = vmatpush.msra.mxu0 %v714
        %1204 = vmatpush.msra.mxu0 %v712
        %1205 = vmatpush.msra.mxu0 %v710
        %1206 = vmatpush.msra.mxu0 %v708
        %1207 = vmatpush.msra.mxu0 %v706
        %1208 = vmatpush.msra.mxu0 %v704
        %1209 = vmatpush.msra.mxu0 %v702
        %1210 = vmatpush.msra.mxu0 %v700
        %1211 = vmatpush.msra.mxu0 %v698
        %1212 = vmatpush.msra.mxu0 %v696
        %1213 = vmatpush.msra.mxu0 %v694
        %1214 = vmatpush.msra.mxu0 %v692
        %1215 = vmatpush.msra.mxu0 %v690
        %1216 = vmatpush.msra.mxu0 %v688
        %1217 = vmatmul.f32.gmra.mxu0 %v1056
        %v1218 = vpop.f32.mrf.mxu0
        %v1219 = vadd.f32 %v1199, %v1218
        %1220 = vdwg.mxu0
        %v1223 = vrot.slane %v1219, 4
        %v1224 = vsel %vm583, %v1139, %v1223
        %v1227 = vunpack.c.l.s4 1935823168
        %v1228 = vunpack.c.0.s8 %v1227
        %v1229 = vperm.slane %v1224, %v1228
        %v1230 = vadd.f32 %v1229, %v919
        %v1231 = vtanh.pop %v1230
        %v1232 = vmul.f32 %v940, %v357
        %v1233 = vsub.f32 1.0, %v940
        %v1234 = vmul.f32 %v1233, %v1231
        %v1235 = vadd.f32 %v1232, %v1234
        %1236 = vst [vmem:[#allocation2] sm:$0x3] %v1235
        %1237 = vst [vmem:[%s348] sm:$0x3] %v1235
        %v1238 = vld [vmem:[#allocation2] sm:$0x3]
        %s1239 = scalar_lea.vmem %s295, 4 [#allocation7]
        %v1240 = vld [vmem:[%s1239] sm:$0xf]
        %s1241 = sld [smem:[#allocation3 + %s359]]
        %v1242 = vstv %s1241
        %v1243 = vmul.f32 %v1242, %v1238
        %s1244 = sld [smem:[#allocation3 + %s363]]
        %v1245 = vstv %s1244
        %v1246 = vmul.f32 %v1245, %v1238
        %s1247 = sld [smem:[#allocation3 + %s367]]
        %v1248 = vstv %s1247
        %v1249 = vmul.f32 %v1248, %v1238
        %s1250 = sld [smem:[#allocation3 + %s371]]
        %v1251 = vstv %s1250
        %v1252 = vmul.f32 %v1251, %v1238
        %v1253 = vld [vmem:[#allocation10] sm:$0xff]
        %v1254 = vld [vmem:[#allocation10 + $0x8] sm:$0xff]
        %v1255 = vld [vmem:[#allocation10 + $0x10] sm:$0xff]
        %v1256 = vld [vmem:[#allocation10 + $0x18] sm:$0xff]
        %v1257 = vld [vmem:[#allocation10 + $0x20] sm:$0xff]
        %v1258 = vld [vmem:[#allocation10 + $0x28] sm:$0xff]
        %v1259 = vld [vmem:[#allocation10 + $0x30] sm:$0xff]
        %v1260 = vld [vmem:[#allocation10 + $0x38] sm:$0xff]
        %v1261 = vld [vmem:[#allocation10 + $0x40] sm:$0xff]
        %v1262 = vld [vmem:[#allocation10 + $0x48] sm:$0xff]
        %v1263 = vld [vmem:[#allocation10 + $0x50] sm:$0xff]
        %v1264 = vld [vmem:[#allocation10 + $0x58] sm:$0xff]
        %v1265 = vld [vmem:[#allocation10 + $0x60] sm:$0xff]
        %v1266 = vld [vmem:[#allocation10 + $0x68] sm:$0xff]
        %v1267 = vld [vmem:[#allocation10 + $0x70] sm:$0xff]
        %v1268 = vld [vmem:[#allocation10 + $0x78] sm:$0xff]
        %1269 = vmatpush.msra.mxu0 %v1268
        %1270 = vmatpush.msra.mxu0 %v1267
        %1271 = vmatpush.msra.mxu0 %v1266
        %1272 = vmatpush.msra.mxu0 %v1265
        %1273 = vmatpush.msra.mxu0 %v1264
        %1274 = vmatpush.msra.mxu0 %v1263
        %1275 = vmatpush.msra.mxu0 %v1262
        %1276 = vmatpush.msra.mxu0 %v1261
        %1277 = vmatpush.msra.mxu0 %v1260
        %1278 = vmatpush.msra.mxu0 %v1259
        %1279 = vmatpush.msra.mxu0 %v1258
        %1280 = vmatpush.msra.mxu0 %v1257
        %1281 = vmatpush.msra.mxu0 %v1256
        %1282 = vmatpush.msra.mxu0 %v1255
        %1283 = vmatpush.msra.mxu0 %v1254
        %1284 = vmatpush.msra.mxu0 %v1253
        %1285 = vmatmul.f32.gmra.mxu0 %v1238
        %v1286 = vpop.f32.mrf.mxu0
        %v1287 = vadd.f32 0.0, %v1286
        %1288 = vdwg.mxu0
        %s1289 = sld [smem:[#allocation3 + %s411]]
        %v1290 = vstv %s1289
        %v1291 = vmul.f32 %v1290, %v1287
        %v1292 = vadd.f32 %v1243, %v1291
        %s1293 = sld [smem:[#allocation3 + %s416]]
        %v1294 = vstv %s1293
        %v1295 = vmul.f32 %v1294, %v1287
        %v1296 = vadd.f32 %v1246, %v1295
        %s1297 = sld [smem:[#allocation3 + %s421]]
        %v1298 = vstv %s1297
        %v1299 = vmul.f32 %v1298, %v1287
        %v1300 = vadd.f32 %v1249, %v1299
        %s1301 = sld [smem:[#allocation3 + %s426]]
        %v1302 = vstv %s1301
        %v1303 = vmul.f32 %v1302, %v1287
        %v1304 = vadd.f32 %v1252, %v1303
        %1305 = vmatpush.msra.mxu0 %v1268
        %1306 = vmatpush.msra.mxu0 %v1267
        %1307 = vmatpush.msra.mxu0 %v1266
        %1308 = vmatpush.msra.mxu0 %v1265
        %1309 = vmatpush.msra.mxu0 %v1264
        %1310 = vmatpush.msra.mxu0 %v1263
        %1311 = vmatpush.msra.mxu0 %v1262
        %1312 = vmatpush.msra.mxu0 %v1261
        %1313 = vmatpush.msra.mxu0 %v1260
        %1314 = vmatpush.msra.mxu0 %v1259
        %1315 = vmatpush.msra.mxu0 %v1258
        %1316 = vmatpush.msra.mxu0 %v1257
        %1317 = vmatpush.msra.mxu0 %v1256
        %1318 = vmatpush.msra.mxu0 %v1255
        %1319 = vmatpush.msra.mxu0 %v1254
        %1320 = vmatpush.msra.mxu0 %v1253
        %1321 = vmatmul.f32.gmra.mxu0 %v1287
        %v1322 = vpop.f32.mrf.mxu0
        %v1323 = vadd.f32 0.0, %v1322
        %1324 = vdwg.mxu0
        %v1325 = vmul.f32 %v1323, 2.0
        %v1326 = vsub.f32 %v1325, %v1238
        %s1327 = sld [smem:[#allocation3 + %s453]]
        %v1328 = vstv %s1327
        %v1329 = vmul.f32 %v1328, %v1326
        %v1330 = vadd.f32 %v1292, %v1329
        %s1331 = sld [smem:[#allocation3 + %s458]]
        %v1332 = vstv %s1331
        %v1333 = vmul.f32 %v1332, %v1326
        %v1334 = vadd.f32 %v1296, %v1333
        %s1335 = sld [smem:[#allocation3 + %s463]]
        %v1336 = vstv %s1335
        %v1337 = vmul.f32 %v1336, %v1326
        %v1338 = vadd.f32 %v1300, %v1337
        %s1339 = sld [smem:[#allocation3 + %s468]]
        %v1340 = vstv %s1339
        %v1341 = vmul.f32 %v1340, %v1326
        %v1342 = vadd.f32 %v1304, %v1341
        %v1343 = vld [vmem:[%s473] sm:$0xff]
        %v1344 = vld [vmem:[%s473 + $0x8] sm:$0xff]
        %v1345 = vld [vmem:[%s473 + $0x10] sm:$0xff]
        %v1346 = vld [vmem:[%s473 + $0x18] sm:$0xff]
        %v1347 = vld [vmem:[%s473 + $0x20] sm:$0xff]
        %v1348 = vld [vmem:[%s473 + $0x28] sm:$0xff]
        %v1349 = vld [vmem:[%s473 + $0x30] sm:$0xff]
        %v1350 = vld [vmem:[%s473 + $0x38] sm:$0xff]
        %v1351 = vld [vmem:[%s473 + $0x40] sm:$0xff]
        %v1352 = vld [vmem:[%s473 + $0x48] sm:$0xff]
        %v1353 = vld [vmem:[%s473 + $0x50] sm:$0xff]
        %v1354 = vld [vmem:[%s473 + $0x58] sm:$0xff]
        %v1355 = vld [vmem:[%s473 + $0x60] sm:$0xff]
        %v1356 = vld [vmem:[%s473 + $0x68] sm:$0xff]
        %v1357 = vld [vmem:[%s473 + $0x70] sm:$0xff]
        %v1358 = vld [vmem:[%s473 + $0x78] sm:$0xff]
        %1359 = vmatpush.msra.mxu0 %v1358
        %1360 = vmatpush.msra.mxu0 %v1357
        %1361 = vmatpush.msra.mxu0 %v1356
        %1362 = vmatpush.msra.mxu0 %v1355
        %1363 = vmatpush.msra.mxu0 %v1354
        %1364 = vmatpush.msra.mxu0 %v1353
        %1365 = vmatpush.msra.mxu0 %v1352
        %1366 = vmatpush.msra.mxu0 %v1351
        %1367 = vmatpush.msra.mxu0 %v1350
        %1368 = vmatpush.msra.mxu0 %v1349
        %1369 = vmatpush.msra.mxu0 %v1348
        %1370 = vmatpush.msra.mxu0 %v1347
        %1371 = vmatpush.msra.mxu0 %v1346
        %1372 = vmatpush.msra.mxu0 %v1345
        %1373 = vmatpush.msra.mxu0 %v1344
        %1374 = vmatpush.msra.mxu0 %v1343
        %1375 = vmatmul.f32.gmra.mxu0 %v1287
        %v1376 = vpop.f32.mrf.mxu0
        %v1377 = vadd.f32 0.0, %v1376
        %1378 = vdwg.mxu0
        %s1379 = sld [smem:[#allocation3 + %s510]]
        %v1380 = vstv %s1379
        %v1381 = vmul.f32 %v1380, %v1377
        %v1382 = vadd.f32 %v1330, %v1381
        %s1383 = sld [smem:[#allocation3 + %s515]]
        %v1384 = vstv %s1383
        %v1385 = vmul.f32 %v1384, %v1377
        %v1386 = vadd.f32 %v1334, %v1385
        %s1387 = sld [smem:[#allocation3 + %s520]]
        %v1388 = vstv %s1387
        %v1389 = vmul.f32 %v1388, %v1377
        %v1390 = vadd.f32 %v1338, %v1389
        %s1391 = sld [smem:[#allocation3 + %s525]]
        %v1392 = vstv %s1391
        %v1393 = vmul.f32 %v1392, %v1377
        %v1394 = vadd.f32 %v1342, %v1393
        %1395 = vmatpush.msra.mxu0 %v1358
        %1396 = vmatpush.msra.mxu0 %v1357
        %1397 = vmatpush.msra.mxu0 %v1356
        %1398 = vmatpush.msra.mxu0 %v1355
        %1399 = vmatpush.msra.mxu0 %v1354
        %1400 = vmatpush.msra.mxu0 %v1353
        %1401 = vmatpush.msra.mxu0 %v1352
        %1402 = vmatpush.msra.mxu0 %v1351
        %1403 = vmatpush.msra.mxu0 %v1350
        %1404 = vmatpush.msra.mxu0 %v1349
        %1405 = vmatpush.msra.mxu0 %v1348
        %1406 = vmatpush.msra.mxu0 %v1347
        %1407 = vmatpush.msra.mxu0 %v1346
        %1408 = vmatpush.msra.mxu0 %v1345
        %1409 = vmatpush.msra.mxu0 %v1344
        %1410 = vmatpush.msra.mxu0 %v1343
        %1411 = vmatmul.f32.gmra.mxu0 %v1377
        %v1412 = vpop.f32.mrf.mxu0
        %v1413 = vadd.f32 0.0, %v1412
        %1414 = vdwg.mxu0
        %v1415 = vmul.f32 %v1413, 2.0
        %v1416 = vsub.f32 %v1415, %v1287
        %s1417 = sld [smem:[#allocation3 + %s552]]
        %v1418 = vstv %s1417
        %v1419 = vmul.f32 %v1418, %v1416
        %v1420 = vadd.f32 %v1382, %v1419
        %s1421 = sld [smem:[#allocation3 + %s557]]
        %v1422 = vstv %s1421
        %v1423 = vmul.f32 %v1422, %v1416
        %v1424 = vadd.f32 %v1386, %v1423
        %s1425 = sld [smem:[#allocation3 + %s562]]
        %v1426 = vstv %s1425
        %v1427 = vmul.f32 %v1426, %v1416
        %v1428 = vadd.f32 %v1390, %v1427
        %s1429 = sld [smem:[#allocation3 + %s567]]
        %v1430 = vstv %s1429
        %v1431 = vmul.f32 %v1430, %v1416
        %v1432 = vadd.f32 %v1394, %v1431
        %v1434 = vrot.slane %v1424, 6
        %v1437 = vrot.slane %v1428, 4
        %v1440 = vrot.slane %v1432, 2
        %v1442 = vsel %vm581, %v1420, %v1434
        %v1443 = vsel %vm583, %v1442, %v1437
        %v1444 = vsel %vm585, %v1443, %v1440
        %v1446 = vunpack.c.l.s4 1935823168
        %v1447 = vunpack.c.0.s8 %v1446
        %v1448 = vperm.slane %v1444, %v1447
        %v1449 = vld [vmem:[#allocation11] sm:$0xff]
        %v1450 = vld [vmem:[#allocation11 + $0x8] sm:$0xff]
        %v1451 = vld [vmem:[#allocation11 + $0x10] sm:$0xff]
        %v1452 = vld [vmem:[#allocation11 + $0x18] sm:$0xff]
        %v1453 = vld [vmem:[#allocation11 + $0x20] sm:$0xff]
        %v1454 = vld [vmem:[#allocation11 + $0x28] sm:$0xff]
        %v1455 = vld [vmem:[#allocation11 + $0x30] sm:$0xff]
        %v1456 = vld [vmem:[#allocation11 + $0x38] sm:$0xff]
        %v1457 = vld [vmem:[#allocation11 + $0x40] sm:$0xff]
        %v1458 = vld [vmem:[#allocation11 + $0x48] sm:$0xff]
        %v1459 = vld [vmem:[#allocation11 + $0x50] sm:$0xff]
        %v1460 = vld [vmem:[#allocation11 + $0x58] sm:$0xff]
        %v1461 = vld [vmem:[#allocation11 + $0x60] sm:$0xff]
        %v1462 = vld [vmem:[#allocation11 + $0x68] sm:$0xff]
        %v1463 = vld [vmem:[#allocation11 + $0x70] sm:$0xff]
        %v1464 = vld [vmem:[#allocation11 + $0x78] sm:$0xff]
        %v1465 = vld [vmem:[#allocation11 + $0x80] sm:$0xff]
        %v1466 = vld [vmem:[#allocation11 + $0x88] sm:$0xff]
        %v1467 = vld [vmem:[#allocation11 + $0x90] sm:$0xff]
        %v1468 = vld [vmem:[#allocation11 + $0x98] sm:$0xff]
        %v1469 = vld [vmem:[#allocation11 + $0xa0] sm:$0xff]
        %v1470 = vld [vmem:[#allocation11 + $0xa8] sm:$0xff]
        %v1471 = vld [vmem:[#allocation11 + $0xb0] sm:$0xff]
        %v1472 = vld [vmem:[#allocation11 + $0xb8] sm:$0xff]
        %v1473 = vld [vmem:[#allocation11 + $0xc0] sm:$0xff]
        %v1474 = vld [vmem:[#allocation11 + $0xc8] sm:$0xff]
        %v1475 = vld [vmem:[#allocation11 + $0xd0] sm:$0xff]
        %v1476 = vld [vmem:[#allocation11 + $0xd8] sm:$0xff]
        %v1477 = vld [vmem:[#allocation11 + $0xe0] sm:$0xff]
        %v1478 = vld [vmem:[#allocation11 + $0xe8] sm:$0xff]
        %v1479 = vld [vmem:[#allocation11 + $0xf0] sm:$0xff]
        %v1480 = vld [vmem:[#allocation11 + $0xf8] sm:$0xff]
        %v1481 = vld [vmem:[#allocation11 + $0x100] sm:$0xff]
        %v1482 = vld [vmem:[#allocation11 + $0x108] sm:$0xff]
        %v1483 = vld [vmem:[#allocation11 + $0x110] sm:$0xff]
        %v1484 = vld [vmem:[#allocation11 + $0x118] sm:$0xff]
        %v1485 = vld [vmem:[#allocation11 + $0x120] sm:$0xff]
        %v1486 = vld [vmem:[#allocation11 + $0x128] sm:$0xff]
        %v1487 = vld [vmem:[#allocation11 + $0x130] sm:$0xff]
        %v1488 = vld [vmem:[#allocation11 + $0x138] sm:$0xff]
        %v1489 = vld [vmem:[#allocation11 + $0x140] sm:$0xff]
        %v1490 = vld [vmem:[#allocation11 + $0x148] sm:$0xff]
        %v1491 = vld [vmem:[#allocation11 + $0x150] sm:$0xff]
        %v1492 = vld [vmem:[#allocation11 + $0x158] sm:$0xff]
        %v1493 = vld [vmem:[#allocation11 + $0x160] sm:$0xff]
        %v1494 = vld [vmem:[#allocation11 + $0x168] sm:$0xff]
        %v1495 = vld [vmem:[#allocation11 + $0x170] sm:$0xff]
        %v1496 = vld [vmem:[#allocation11 + $0x178] sm:$0xff]
        %v1497 = vld [vmem:[#allocation11 + $0x180] sm:$0xff]
        %v1498 = vld [vmem:[#allocation11 + $0x188] sm:$0xff]
        %v1499 = vld [vmem:[#allocation11 + $0x190] sm:$0xff]
        %v1500 = vld [vmem:[#allocation11 + $0x198] sm:$0xff]
        %v1501 = vld [vmem:[#allocation11 + $0x1a0] sm:$0xff]
        %v1502 = vld [vmem:[#allocation11 + $0x1a8] sm:$0xff]
        %v1503 = vld [vmem:[#allocation11 + $0x1b0] sm:$0xff]
        %v1504 = vld [vmem:[#allocation11 + $0x1b8] sm:$0xff]
        %v1505 = vld [vmem:[#allocation11 + $0x1c0] sm:$0xff]
        %v1506 = vld [vmem:[#allocation11 + $0x1c8] sm:$0xff]
        %v1507 = vld [vmem:[#allocation11 + $0x1d0] sm:$0xff]
        %v1508 = vld [vmem:[#allocation11 + $0x1d8] sm:$0xff]
        %v1509 = vld [vmem:[#allocation11 + $0x1e0] sm:$0xff]
        %v1510 = vld [vmem:[#allocation11 + $0x1e8] sm:$0xff]
        %v1511 = vld [vmem:[#allocation11 + $0x1f0] sm:$0xff]
        %v1512 = vld [vmem:[#allocation11 + $0x1f8] sm:$0xff]
        %v1513 = vld [vmem:[#allocation11 + $0x200] sm:$0xff]
        %v1514 = vld [vmem:[#allocation11 + $0x208] sm:$0xff]
        %v1515 = vld [vmem:[#allocation11 + $0x210] sm:$0xff]
        %v1516 = vld [vmem:[#allocation11 + $0x218] sm:$0xff]
        %v1517 = vld [vmem:[#allocation11 + $0x220] sm:$0xff]
        %v1518 = vld [vmem:[#allocation11 + $0x228] sm:$0xff]
        %v1519 = vld [vmem:[#allocation11 + $0x230] sm:$0xff]
        %v1520 = vld [vmem:[#allocation11 + $0x238] sm:$0xff]
        %v1521 = vld [vmem:[#allocation11 + $0x240] sm:$0xff]
        %v1522 = vld [vmem:[#allocation11 + $0x248] sm:$0xff]
        %v1523 = vld [vmem:[#allocation11 + $0x250] sm:$0xff]
        %v1524 = vld [vmem:[#allocation11 + $0x258] sm:$0xff]
        %v1525 = vld [vmem:[#allocation11 + $0x260] sm:$0xff]
        %v1526 = vld [vmem:[#allocation11 + $0x268] sm:$0xff]
        %v1527 = vld [vmem:[#allocation11 + $0x270] sm:$0xff]
        %v1528 = vld [vmem:[#allocation11 + $0x278] sm:$0xff]
        %v1529 = vld [vmem:[#allocation11 + $0x280] sm:$0xff]
        %v1530 = vld [vmem:[#allocation11 + $0x288] sm:$0xff]
        %v1531 = vld [vmem:[#allocation11 + $0x290] sm:$0xff]
        %v1532 = vld [vmem:[#allocation11 + $0x298] sm:$0xff]
        %v1533 = vld [vmem:[#allocation11 + $0x2a0] sm:$0xff]
        %v1534 = vld [vmem:[#allocation11 + $0x2a8] sm:$0xff]
        %v1535 = vld [vmem:[#allocation11 + $0x2b0] sm:$0xff]
        %v1536 = vld [vmem:[#allocation11 + $0x2b8] sm:$0xff]
        %v1537 = vld [vmem:[#allocation11 + $0x2c0] sm:$0xff]
        %v1538 = vld [vmem:[#allocation11 + $0x2c8] sm:$0xff]
        %v1539 = vld [vmem:[#allocation11 + $0x2d0] sm:$0xff]
        %v1540 = vld [vmem:[#allocation11 + $0x2d8] sm:$0xff]
        %v1541 = vld [vmem:[#allocation11 + $0x2e0] sm:$0xff]
        %v1542 = vld [vmem:[#allocation11 + $0x2e8] sm:$0xff]
        %v1543 = vld [vmem:[#allocation11 + $0x2f0] sm:$0xff]
        %v1544 = vld [vmem:[#allocation11 + $0x2f8] sm:$0xff]
        %v1545 = vld [vmem:[#allocation11 + $0x300] sm:$0xff]
        %v1546 = vld [vmem:[#allocation11 + $0x308] sm:$0xff]
        %v1547 = vld [vmem:[#allocation11 + $0x310] sm:$0xff]
        %v1548 = vld [vmem:[#allocation11 + $0x318] sm:$0xff]
        %v1549 = vld [vmem:[#allocation11 + $0x320] sm:$0xff]
        %v1550 = vld [vmem:[#allocation11 + $0x328] sm:$0xff]
        %v1551 = vld [vmem:[#allocation11 + $0x330] sm:$0xff]
        %v1552 = vld [vmem:[#allocation11 + $0x338] sm:$0xff]
        %v1553 = vld [vmem:[#allocation11 + $0x340] sm:$0xff]
        %v1554 = vld [vmem:[#allocation11 + $0x348] sm:$0xff]
        %v1555 = vld [vmem:[#allocation11 + $0x350] sm:$0xff]
        %v1556 = vld [vmem:[#allocation11 + $0x358] sm:$0xff]
        %v1557 = vld [vmem:[#allocation11 + $0x360] sm:$0xff]
        %v1558 = vld [vmem:[#allocation11 + $0x368] sm:$0xff]
        %v1559 = vld [vmem:[#allocation11 + $0x370] sm:$0xff]
        %v1560 = vld [vmem:[#allocation11 + $0x378] sm:$0xff]
        %v1561 = vld [vmem:[#allocation11 + $0x380] sm:$0xff]
        %v1562 = vld [vmem:[#allocation11 + $0x388] sm:$0xff]
        %v1563 = vld [vmem:[#allocation11 + $0x390] sm:$0xff]
        %v1564 = vld [vmem:[#allocation11 + $0x398] sm:$0xff]
        %v1565 = vld [vmem:[#allocation11 + $0x3a0] sm:$0xff]
        %v1566 = vld [vmem:[#allocation11 + $0x3a8] sm:$0xff]
        %v1567 = vld [vmem:[#allocation11 + $0x3b0] sm:$0xff]
        %v1568 = vld [vmem:[#allocation11 + $0x3b8] sm:$0xff]
        %v1569 = vld [vmem:[#allocation11 + $0x3c0] sm:$0xff]
        %v1570 = vld [vmem:[#allocation11 + $0x3c8] sm:$0xff]
        %v1571 = vld [vmem:[#allocation11 + $0x3d0] sm:$0xff]
        %v1572 = vld [vmem:[#allocation11 + $0x3d8] sm:$0xff]
        %v1573 = vld [vmem:[#allocation11 + $0x3e0] sm:$0xff]
        %v1574 = vld [vmem:[#allocation11 + $0x3e8] sm:$0xff]
        %v1575 = vld [vmem:[#allocation11 + $0x3f0] sm:$0xff]
        %v1576 = vld [vmem:[#allocation11 + $0x3f8] sm:$0xff]
        %1578 = vst [vmem:[#allocation1] ss:$4 sm:$0xff] %v1448
        %v1579 = vld.sshfl [vmem:[#allocation1] sm:$0xff pattern:$0x73625140]
        %v1580 = vld.sshfl [vmem:[#allocation1 + $0x8] sm:$0xff pattern:$0x73625140]
        %v1581 = vld.sshfl [vmem:[#allocation1 + $0x10] sm:$0xff pattern:$0x73625140]
        %v1582 = vld.sshfl [vmem:[#allocation1 + $0x18] sm:$0xff pattern:$0x73625140]
        %1587 = vmatpush.msra.mxu0 %v1479
        %1588 = vmatpush.msra.mxu0 %v1477
        %1589 = vmatpush.msra.mxu0 %v1475
        %1590 = vmatpush.msra.mxu0 %v1473
        %1591 = vmatpush.msra.mxu0 %v1471
        %1592 = vmatpush.msra.mxu0 %v1469
        %1593 = vmatpush.msra.mxu0 %v1467
        %1594 = vmatpush.msra.mxu0 %v1465
        %1595 = vmatpush.msra.mxu0 %v1463
        %1596 = vmatpush.msra.mxu0 %v1461
        %1597 = vmatpush.msra.mxu0 %v1459
        %1598 = vmatpush.msra.mxu0 %v1457
        %1599 = vmatpush.msra.mxu0 %v1455
        %1600 = vmatpush.msra.mxu0 %v1453
        %1601 = vmatpush.msra.mxu0 %v1451
        %1602 = vmatpush.msra.mxu0 %v1449
        %1603 = vmatmul.f32.gmra.mxu0 %v1579
        %v1604 = vpop.f32.mrf.mxu0
        %v1605 = vadd.f32 0.0, %v1604
        %1606 = vdwg.mxu0
        %1607 = vmatpush.msra.mxu0 %v1511
        %1608 = vmatpush.msra.mxu0 %v1509
        %1609 = vmatpush.msra.mxu0 %v1507
        %1610 = vmatpush.msra.mxu0 %v1505
        %1611 = vmatpush.msra.mxu0 %v1503
        %1612 = vmatpush.msra.mxu0 %v1501
        %1613 = vmatpush.msra.mxu0 %v1499
        %1614 = vmatpush.msra.mxu0 %v1497
        %1615 = vmatpush.msra.mxu0 %v1495
        %1616 = vmatpush.msra.mxu0 %v1493
        %1617 = vmatpush.msra.mxu0 %v1491
        %1618 = vmatpush.msra.mxu0 %v1489
        %1619 = vmatpush.msra.mxu0 %v1487
        %1620 = vmatpush.msra.mxu0 %v1485
        %1621 = vmatpush.msra.mxu0 %v1483
        %1622 = vmatpush.msra.mxu0 %v1481
        %1623 = vmatmul.f32.gmra.mxu0 %v1580
        %v1624 = vpop.f32.mrf.mxu0
        %v1625 = vadd.f32 %v1605, %v1624
        %1626 = vdwg.mxu0
        %1627 = vmatpush.msra.mxu0 %v1543
        %1628 = vmatpush.msra.mxu0 %v1541
        %1629 = vmatpush.msra.mxu0 %v1539
        %1630 = vmatpush.msra.mxu0 %v1537
        %1631 = vmatpush.msra.mxu0 %v1535
        %1632 = vmatpush.msra.mxu0 %v1533
        %1633 = vmatpush.msra.mxu0 %v1531
        %1634 = vmatpush.msra.mxu0 %v1529
        %1635 = vmatpush.msra.mxu0 %v1527
        %1636 = vmatpush.msra.mxu0 %v1525
        %1637 = vmatpush.msra.mxu0 %v1523
        %1638 = vmatpush.msra.mxu0 %v1521
        %1639 = vmatpush.msra.mxu0 %v1519
        %1640 = vmatpush.msra.mxu0 %v1517
        %1641 = vmatpush.msra.mxu0 %v1515
        %1642 = vmatpush.msra.mxu0 %v1513
        %1643 = vmatmul.f32.gmra.mxu0 %v1581
        %v1644 = vpop.f32.mrf.mxu0
        %v1645 = vadd.f32 %v1625, %v1644
        %1646 = vdwg.mxu0
        %1647 = vmatpush.msra.mxu0 %v1575
        %1648 = vmatpush.msra.mxu0 %v1573
        %1649 = vmatpush.msra.mxu0 %v1571
        %1650 = vmatpush.msra.mxu0 %v1569
        %1651 = vmatpush.msra.mxu0 %v1567
        %1652 = vmatpush.msra.mxu0 %v1565
        %1653 = vmatpush.msra.mxu0 %v1563
        %1654 = vmatpush.msra.mxu0 %v1561
        %1655 = vmatpush.msra.mxu0 %v1559
        %1656 = vmatpush.msra.mxu0 %v1557
        %1657 = vmatpush.msra.mxu0 %v1555
        %1658 = vmatpush.msra.mxu0 %v1553
        %1659 = vmatpush.msra.mxu0 %v1551
        %1660 = vmatpush.msra.mxu0 %v1549
        %1661 = vmatpush.msra.mxu0 %v1547
        %1662 = vmatpush.msra.mxu0 %v1545
        %1663 = vmatmul.f32.gmra.mxu0 %v1582
        %v1664 = vpop.f32.mrf.mxu0
        %v1665 = vadd.f32 %v1645, %v1664
        %1666 = vdwg.mxu0
        %1667 = vmatpush.msra.mxu0 %v1480
        %1668 = vmatpush.msra.mxu0 %v1478
        %1669 = vmatpush.msra.mxu0 %v1476
        %1670 = vmatpush.msra.mxu0 %v1474
        %1671 = vmatpush.msra.mxu0 %v1472
        %1672 = vmatpush.msra.mxu0 %v1470
        %1673 = vmatpush.msra.mxu0 %v1468
        %1674 = vmatpush.msra.mxu0 %v1466
        %1675 = vmatpush.msra.mxu0 %v1464
        %1676 = vmatpush.msra.mxu0 %v1462
        %1677 = vmatpush.msra.mxu0 %v1460
        %1678 = vmatpush.msra.mxu0 %v1458
        %1679 = vmatpush.msra.mxu0 %v1456
        %1680 = vmatpush.msra.mxu0 %v1454
        %1681 = vmatpush.msra.mxu0 %v1452
        %1682 = vmatpush.msra.mxu0 %v1450
        %1683 = vmatmul.f32.gmra.mxu0 %v1579
        %v1684 = vpop.f32.mrf.mxu0
        %v1685 = vadd.f32 0.0, %v1684
        %1686 = vdwg.mxu0
        %1687 = vmatpush.msra.mxu0 %v1512
        %1688 = vmatpush.msra.mxu0 %v1510
        %1689 = vmatpush.msra.mxu0 %v1508
        %1690 = vmatpush.msra.mxu0 %v1506
        %1691 = vmatpush.msra.mxu0 %v1504
        %1692 = vmatpush.msra.mxu0 %v1502
        %1693 = vmatpush.msra.mxu0 %v1500
        %1694 = vmatpush.msra.mxu0 %v1498
        %1695 = vmatpush.msra.mxu0 %v1496
        %1696 = vmatpush.msra.mxu0 %v1494
        %1697 = vmatpush.msra.mxu0 %v1492
        %1698 = vmatpush.msra.mxu0 %v1490
        %1699 = vmatpush.msra.mxu0 %v1488
        %1700 = vmatpush.msra.mxu0 %v1486
        %1701 = vmatpush.msra.mxu0 %v1484
        %1702 = vmatpush.msra.mxu0 %v1482
        %1703 = vmatmul.f32.gmra.mxu0 %v1580
        %v1704 = vpop.f32.mrf.mxu0
        %v1705 = vadd.f32 %v1685, %v1704
        %1706 = vdwg.mxu0
        %1707 = vmatpush.msra.mxu0 %v1544
        %1708 = vmatpush.msra.mxu0 %v1542
        %1709 = vmatpush.msra.mxu0 %v1540
        %1710 = vmatpush.msra.mxu0 %v1538
        %1711 = vmatpush.msra.mxu0 %v1536
        %1712 = vmatpush.msra.mxu0 %v1534
        %1713 = vmatpush.msra.mxu0 %v1532
        %1714 = vmatpush.msra.mxu0 %v1530
        %1715 = vmatpush.msra.mxu0 %v1528
        %1716 = vmatpush.msra.mxu0 %v1526
        %1717 = vmatpush.msra.mxu0 %v1524
        %1718 = vmatpush.msra.mxu0 %v1522
        %1719 = vmatpush.msra.mxu0 %v1520
        %1720 = vmatpush.msra.mxu0 %v1518
        %1721 = vmatpush.msra.mxu0 %v1516
        %1722 = vmatpush.msra.mxu0 %v1514
        %1723 = vmatmul.f32.gmra.mxu0 %v1581
        %v1724 = vpop.f32.mrf.mxu0
        %v1725 = vadd.f32 %v1705, %v1724
        %1726 = vdwg.mxu0
        %1727 = vmatpush.msra.mxu0 %v1576
        %1728 = vmatpush.msra.mxu0 %v1574
        %1729 = vmatpush.msra.mxu0 %v1572
        %1730 = vmatpush.msra.mxu0 %v1570
        %1731 = vmatpush.msra.mxu0 %v1568
        %1732 = vmatpush.msra.mxu0 %v1566
        %1733 = vmatpush.msra.mxu0 %v1564
        %1734 = vmatpush.msra.mxu0 %v1562
        %1735 = vmatpush.msra.mxu0 %v1560
        %1736 = vmatpush.msra.mxu0 %v1558
        %1737 = vmatpush.msra.mxu0 %v1556
        %1738 = vmatpush.msra.mxu0 %v1554
        %1739 = vmatpush.msra.mxu0 %v1552
        %1740 = vmatpush.msra.mxu0 %v1550
        %1741 = vmatpush.msra.mxu0 %v1548
        %1742 = vmatpush.msra.mxu0 %v1546
        %1743 = vmatmul.f32.gmra.mxu0 %v1582
        %v1744 = vpop.f32.mrf.mxu0
        %v1745 = vadd.f32 %v1725, %v1744
        %1746 = vdwg.mxu0
        %v1747 = vrot.slane %v1745, 4
        %v1748 = vsel %vm890, %v1747, %v1665
        %v1750 = vunpack.c.l.s4 1934713408
        %v1751 = vunpack.c.0.s8 %v1750
        %v1752 = vperm.slane %v1748, %v1751
        %v1753 = vrot.slane %v1752, 4
        %v1754 = vsel %vm890, 0.0, %v1753
        %v1755 = vadd.f32 %v1752, %v1240
        %v1756 = vxor.u32 %v1755, 2147483648
        %v1757 = vmul.f32 %v1756, 1.442695
        %v1758 = vpow.pop %v1757
        %v1759 = vadd.f32 %v1758, 1.0
        %v1760 = vrcp.pop %v1759
        %v1761 = vmul.f32 %v1759, %v1760
        %v1762 = vsub.f32 1.0, %v1761
        %v1763 = vmul.f32 %v1760, %v1762
        %v1764 = vadd.f32 %v1760, %v1763
        %vm1765 = vweird.f32 %v1759
        %vm1766 = vweird.f32 %v1760
        %vm1767 = vmor %vm1765, %vm1766
        %v1768 = vsel %vm1767, %v1760, %v1764
        %v1769 = vand.u32 2147483647, %v1759
        %vm1770 = vcmp.eq.f32.partialorder %v1769, 8.507059e+37
        %v1771 = vand.u32 %v1759, 2147483648
        %v1772 = vor.u32 1.1754944e-38, %v1771
        %v1773 = vsel %vm1770, %v1772, %v1768
        %v1774 = vmul.f32 1.0, %v1773
        %v1776 = vrot.slane %v1240, 2
        %v1778 = vadd.f32 %v1754, %v1776
        %v1779 = vxor.u32 %v1778, 2147483648
        %v1780 = vmul.f32 %v1779, 1.442695
        %v1781 = vpow.pop %v1780
        %v1782 = vadd.f32 %v1781, 1.0
        %v1783 = vrcp.pop %v1782
        %v1784 = vmul.f32 %v1782, %v1783
        %v1785 = vsub.f32 1.0, %v1784
        %v1786 = vmul.f32 %v1783, %v1785
        %v1787 = vadd.f32 %v1783, %v1786
        %vm1788 = vweird.f32 %v1782
        %vm1789 = vweird.f32 %v1783
        %vm1790 = vmor %vm1788, %vm1789
        %v1791 = vsel %vm1790, %v1783, %v1787
        %v1792 = vand.u32 2147483647, %v1782
        %vm1793 = vcmp.eq.f32.partialorder %v1792, 8.507059e+37
        %v1794 = vand.u32 %v1782, 2147483648
        %v1795 = vor.u32 1.1754944e-38, %v1794
        %v1796 = vsel %vm1793, %v1795, %v1791
        %v1797 = vmul.f32 1.0, %v1796
        %v1798 = vmul.f32 %v1774, %v1238
        %v1799 = vmul.f32 %v1248, %v1798
        %v1800 = vmul.f32 %v1251, %v1798
        %1801 = vmatpush.msra.mxu0 %v1268
        %1802 = vmatpush.msra.mxu0 %v1267
        %1803 = vmatpush.msra.mxu0 %v1266
        %1804 = vmatpush.msra.mxu0 %v1265
        %1805 = vmatpush.msra.mxu0 %v1264
        %1806 = vmatpush.msra.mxu0 %v1263
        %1807 = vmatpush.msra.mxu0 %v1262
        %1808 = vmatpush.msra.mxu0 %v1261
        %1809 = vmatpush.msra.mxu0 %v1260
        %1810 = vmatpush.msra.mxu0 %v1259
        %1811 = vmatpush.msra.mxu0 %v1258
        %1812 = vmatpush.msra.mxu0 %v1257
        %1813 = vmatpush.msra.mxu0 %v1256
        %1814 = vmatpush.msra.mxu0 %v1255
        %1815 = vmatpush.msra.mxu0 %v1254
        %1816 = vmatpush.msra.mxu0 %v1253
        %1817 = vmatmul.f32.gmra.mxu0 %v1798
        %v1818 = vpop.f32.mrf.mxu0
        %v1819 = vadd.f32 0.0, %v1818
        %1820 = vdwg.mxu0
        %v1821 = vmul.f32 %v1298, %v1819
        %v1822 = vadd.f32 %v1799, %v1821
        %v1823 = vmul.f32 %v1302, %v1819
        %v1824 = vadd.f32 %v1800, %v1823
        %1825 = vmatpush.msra.mxu0 %v1268
        %1826 = vmatpush.msra.mxu0 %v1267
        %1827 = vmatpush.msra.mxu0 %v1266
        %1828 = vmatpush.msra.mxu0 %v1265
        %1829 = vmatpush.msra.mxu0 %v1264
        %1830 = vmatpush.msra.mxu0 %v1263
        %1831 = vmatpush.msra.mxu0 %v1262
        %1832 = vmatpush.msra.mxu0 %v1261
        %1833 = vmatpush.msra.mxu0 %v1260
        %1834 = vmatpush.msra.mxu0 %v1259
        %1835 = vmatpush.msra.mxu0 %v1258
        %1836 = vmatpush.msra.mxu0 %v1257
        %1837 = vmatpush.msra.mxu0 %v1256
        %1838 = vmatpush.msra.mxu0 %v1255
        %1839 = vmatpush.msra.mxu0 %v1254
        %1840 = vmatpush.msra.mxu0 %v1253
        %1841 = vmatmul.f32.gmra.mxu0 %v1819
        %v1842 = vpop.f32.mrf.mxu0
        %v1843 = vadd.f32 0.0, %v1842
        %1844 = vdwg.mxu0
        %v1845 = vmul.f32 %v1843, 2.0
        %v1846 = vsub.f32 %v1845, %v1798
        %v1847 = vmul.f32 %v1336, %v1846
        %v1848 = vadd.f32 %v1822, %v1847
        %v1849 = vmul.f32 %v1340, %v1846
        %v1850 = vadd.f32 %v1824, %v1849
        %1851 = vmatpush.msra.mxu0 %v1358
        %1852 = vmatpush.msra.mxu0 %v1357
        %1853 = vmatpush.msra.mxu0 %v1356
        %1854 = vmatpush.msra.mxu0 %v1355
        %1855 = vmatpush.msra.mxu0 %v1354
        %1856 = vmatpush.msra.mxu0 %v1353
        %1857 = vmatpush.msra.mxu0 %v1352
        %1858 = vmatpush.msra.mxu0 %v1351
        %1859 = vmatpush.msra.mxu0 %v1350
        %1860 = vmatpush.msra.mxu0 %v1349
        %1861 = vmatpush.msra.mxu0 %v1348
        %1862 = vmatpush.msra.mxu0 %v1347
        %1863 = vmatpush.msra.mxu0 %v1346
        %1864 = vmatpush.msra.mxu0 %v1345
        %1865 = vmatpush.msra.mxu0 %v1344
        %1866 = vmatpush.msra.mxu0 %v1343
        %1867 = vmatmul.f32.gmra.mxu0 %v1819
        %v1868 = vpop.f32.mrf.mxu0
        %v1869 = vadd.f32 0.0, %v1868
        %1870 = vdwg.mxu0
        %v1871 = vmul.f32 %v1388, %v1869
        %v1872 = vadd.f32 %v1848, %v1871
        %v1873 = vmul.f32 %v1392, %v1869
        %v1874 = vadd.f32 %v1850, %v1873
        %1875 = vmatpush.msra.mxu0 %v1358
        %1876 = vmatpush.msra.mxu0 %v1357
        %1877 = vmatpush.msra.mxu0 %v1356
        %1878 = vmatpush.msra.mxu0 %v1355
        %1879 = vmatpush.msra.mxu0 %v1354
        %1880 = vmatpush.msra.mxu0 %v1353
        %1881 = vmatpush.msra.mxu0 %v1352
        %1882 = vmatpush.msra.mxu0 %v1351
        %1883 = vmatpush.msra.mxu0 %v1350
        %1884 = vmatpush.msra.mxu0 %v1349
        %1885 = vmatpush.msra.mxu0 %v1348
        %1886 = vmatpush.msra.mxu0 %v1347
        %1887 = vmatpush.msra.mxu0 %v1346
        %1888 = vmatpush.msra.mxu0 %v1345
        %1889 = vmatpush.msra.mxu0 %v1344
        %1890 = vmatpush.msra.mxu0 %v1343
        %1891 = vmatmul.f32.gmra.mxu0 %v1869
        %v1892 = vpop.f32.mrf.mxu0
        %v1893 = vadd.f32 0.0, %v1892
        %1894 = vdwg.mxu0
        %v1895 = vmul.f32 %v1893, 2.0
        %v1896 = vsub.f32 %v1895, %v1819
        %v1897 = vmul.f32 %v1426, %v1896
        %v1898 = vadd.f32 %v1872, %v1897
        %v1899 = vmul.f32 %v1430, %v1896
        %v1900 = vadd.f32 %v1874, %v1899
        %v1902 = vrot.slane %v1900, 6
        %v1904 = vsel %vm581, %v1898, %v1902
        %v1906 = vunpack.c.l.s4 1935823168
        %v1907 = vunpack.c.0.s8 %v1906
        %v1908 = vperm.slane %v1904, %v1907
        %v1910 = vperm.slane %v1908, 0
        %v1911 = vperm.slane %v1908, 2
        %v1912 = vperm.slane %v1908, 4
        %v1913 = vperm.slane %v1908, 6
        %1918 = vmatpush.msra.mxu0 %v1479
        %1919 = vmatpush.msra.mxu0 %v1477
        %1920 = vmatpush.msra.mxu0 %v1475
        %1921 = vmatpush.msra.mxu0 %v1473
        %1922 = vmatpush.msra.mxu0 %v1471
        %1923 = vmatpush.msra.mxu0 %v1469
        %1924 = vmatpush.msra.mxu0 %v1467
        %1925 = vmatpush.msra.mxu0 %v1465
        %1926 = vmatpush.msra.mxu0 %v1463
        %1927 = vmatpush.msra.mxu0 %v1461
        %1928 = vmatpush.msra.mxu0 %v1459
        %1929 = vmatpush.msra.mxu0 %v1457
        %1930 = vmatpush.msra.mxu0 %v1455
        %1931 = vmatpush.msra.mxu0 %v1453
        %1932 = vmatpush.msra.mxu0 %v1451
        %1933 = vmatpush.msra.mxu0 %v1449
        %1934 = vmatmul.f32.gmra.mxu0 %v1910
        %v1935 = vpop.f32.mrf.mxu0
        %v1936 = vadd.f32 0.0, %v1935
        %1937 = vdwg.mxu0
        %1938 = vmatpush.msra.mxu0 %v1511
        %1939 = vmatpush.msra.mxu0 %v1509
        %1940 = vmatpush.msra.mxu0 %v1507
        %1941 = vmatpush.msra.mxu0 %v1505
        %1942 = vmatpush.msra.mxu0 %v1503
        %1943 = vmatpush.msra.mxu0 %v1501
        %1944 = vmatpush.msra.mxu0 %v1499
        %1945 = vmatpush.msra.mxu0 %v1497
        %1946 = vmatpush.msra.mxu0 %v1495
        %1947 = vmatpush.msra.mxu0 %v1493
        %1948 = vmatpush.msra.mxu0 %v1491
        %1949 = vmatpush.msra.mxu0 %v1489
        %1950 = vmatpush.msra.mxu0 %v1487
        %1951 = vmatpush.msra.mxu0 %v1485
        %1952 = vmatpush.msra.mxu0 %v1483
        %1953 = vmatpush.msra.mxu0 %v1481
        %1954 = vmatmul.f32.gmra.mxu0 %v1911
        %v1955 = vpop.f32.mrf.mxu0
        %v1956 = vadd.f32 %v1936, %v1955
        %1957 = vdwg.mxu0
        %1958 = vmatpush.msra.mxu0 %v1543
        %1959 = vmatpush.msra.mxu0 %v1541
        %1960 = vmatpush.msra.mxu0 %v1539
        %1961 = vmatpush.msra.mxu0 %v1537
        %1962 = vmatpush.msra.mxu0 %v1535
        %1963 = vmatpush.msra.mxu0 %v1533
        %1964 = vmatpush.msra.mxu0 %v1531
        %1965 = vmatpush.msra.mxu0 %v1529
        %1966 = vmatpush.msra.mxu0 %v1527
        %1967 = vmatpush.msra.mxu0 %v1525
        %1968 = vmatpush.msra.mxu0 %v1523
        %1969 = vmatpush.msra.mxu0 %v1521
        %1970 = vmatpush.msra.mxu0 %v1519
        %1971 = vmatpush.msra.mxu0 %v1517
        %1972 = vmatpush.msra.mxu0 %v1515
        %1973 = vmatpush.msra.mxu0 %v1513
        %1974 = vmatmul.f32.gmra.mxu0 %v1912
        %v1975 = vpop.f32.mrf.mxu0
        %v1976 = vadd.f32 %v1956, %v1975
        %1977 = vdwg.mxu0
        %1978 = vmatpush.msra.mxu0 %v1575
        %1979 = vmatpush.msra.mxu0 %v1573
        %1980 = vmatpush.msra.mxu0 %v1571
        %1981 = vmatpush.msra.mxu0 %v1569
        %1982 = vmatpush.msra.mxu0 %v1567
        %1983 = vmatpush.msra.mxu0 %v1565
        %1984 = vmatpush.msra.mxu0 %v1563
        %1985 = vmatpush.msra.mxu0 %v1561
        %1986 = vmatpush.msra.mxu0 %v1559
        %1987 = vmatpush.msra.mxu0 %v1557
        %1988 = vmatpush.msra.mxu0 %v1555
        %1989 = vmatpush.msra.mxu0 %v1553
        %1990 = vmatpush.msra.mxu0 %v1551
        %1991 = vmatpush.msra.mxu0 %v1549
        %1992 = vmatpush.msra.mxu0 %v1547
        %1993 = vmatpush.msra.mxu0 %v1545
        %1994 = vmatmul.f32.gmra.mxu0 %v1913
        %v1995 = vpop.f32.mrf.mxu0
        %v1996 = vadd.f32 %v1976, %v1995
        %1997 = vdwg.mxu0
        %1998 = vmatpush.msra.mxu0 %v1480
        %1999 = vmatpush.msra.mxu0 %v1478
        %2000 = vmatpush.msra.mxu0 %v1476
        %2001 = vmatpush.msra.mxu0 %v1474
        %2002 = vmatpush.msra.mxu0 %v1472
        %2003 = vmatpush.msra.mxu0 %v1470
        %2004 = vmatpush.msra.mxu0 %v1468
        %2005 = vmatpush.msra.mxu0 %v1466
        %2006 = vmatpush.msra.mxu0 %v1464
        %2007 = vmatpush.msra.mxu0 %v1462
        %2008 = vmatpush.msra.mxu0 %v1460
        %2009 = vmatpush.msra.mxu0 %v1458
        %2010 = vmatpush.msra.mxu0 %v1456
        %2011 = vmatpush.msra.mxu0 %v1454
        %2012 = vmatpush.msra.mxu0 %v1452
        %2013 = vmatpush.msra.mxu0 %v1450
        %2014 = vmatmul.f32.gmra.mxu0 %v1910
        %v2015 = vpop.f32.mrf.mxu0
        %v2016 = vadd.f32 0.0, %v2015
        %2017 = vdwg.mxu0
        %2018 = vmatpush.msra.mxu0 %v1512
        %2019 = vmatpush.msra.mxu0 %v1510
        %2020 = vmatpush.msra.mxu0 %v1508
        %2021 = vmatpush.msra.mxu0 %v1506
        %2022 = vmatpush.msra.mxu0 %v1504
        %2023 = vmatpush.msra.mxu0 %v1502
        %2024 = vmatpush.msra.mxu0 %v1500
        %2025 = vmatpush.msra.mxu0 %v1498
        %2026 = vmatpush.msra.mxu0 %v1496
        %2027 = vmatpush.msra.mxu0 %v1494
        %2028 = vmatpush.msra.mxu0 %v1492
        %2029 = vmatpush.msra.mxu0 %v1490
        %2030 = vmatpush.msra.mxu0 %v1488
        %2031 = vmatpush.msra.mxu0 %v1486
        %2032 = vmatpush.msra.mxu0 %v1484
        %2033 = vmatpush.msra.mxu0 %v1482
        %2034 = vmatmul.f32.gmra.mxu0 %v1911
        %v2035 = vpop.f32.mrf.mxu0
        %v2036 = vadd.f32 %v2016, %v2035
        %2037 = vdwg.mxu0
        %2038 = vmatpush.msra.mxu0 %v1544
        %2039 = vmatpush.msra.mxu0 %v1542
        %2040 = vmatpush.msra.mxu0 %v1540
        %2041 = vmatpush.msra.mxu0 %v1538
        %2042 = vmatpush.msra.mxu0 %v1536
        %2043 = vmatpush.msra.mxu0 %v1534
        %2044 = vmatpush.msra.mxu0 %v1532
        %2045 = vmatpush.msra.mxu0 %v1530
        %2046 = vmatpush.msra.mxu0 %v1528
        %2047 = vmatpush.msra.mxu0 %v1526
        %2048 = vmatpush.msra.mxu0 %v1524
        %2049 = vmatpush.msra.mxu0 %v1522
        %2050 = vmatpush.msra.mxu0 %v1520
        %2051 = vmatpush.msra.mxu0 %v1518
        %2052 = vmatpush.msra.mxu0 %v1516
        %2053 = vmatpush.msra.mxu0 %v1514
        %2054 = vmatmul.f32.gmra.mxu0 %v1912
        %v2055 = vpop.f32.mrf.mxu0
        %v2056 = vadd.f32 %v2036, %v2055
        %2057 = vdwg.mxu0
        %2058 = vmatpush.msra.mxu0 %v1576
        %2059 = vmatpush.msra.mxu0 %v1574
        %2060 = vmatpush.msra.mxu0 %v1572
        %2061 = vmatpush.msra.mxu0 %v1570
        %2062 = vmatpush.msra.mxu0 %v1568
        %2063 = vmatpush.msra.mxu0 %v1566
        %2064 = vmatpush.msra.mxu0 %v1564
        %2065 = vmatpush.msra.mxu0 %v1562
        %2066 = vmatpush.msra.mxu0 %v1560
        %2067 = vmatpush.msra.mxu0 %v1558
        %2068 = vmatpush.msra.mxu0 %v1556
        %2069 = vmatpush.msra.mxu0 %v1554
        %2070 = vmatpush.msra.mxu0 %v1552
        %2071 = vmatpush.msra.mxu0 %v1550
        %2072 = vmatpush.msra.mxu0 %v1548
        %2073 = vmatpush.msra.mxu0 %v1546
        %2074 = vmatmul.f32.gmra.mxu0 %v1913
        %v2075 = vpop.f32.mrf.mxu0
        %v2076 = vadd.f32 %v2056, %v2075
        %2077 = vdwg.mxu0
        %v2080 = vrot.slane %v2076, 4
        %v2081 = vsel %vm583, %v1996, %v2080
        %v2084 = vunpack.c.l.s4 1935823168
        %v2085 = vunpack.c.0.s8 %v2084
        %v2086 = vperm.slane %v2081, %v2085
        %v2087 = vadd.f32 %v2086, %v1776
        %v2088 = vtanh.pop %v2087
        %v2089 = vmul.f32 %v1797, %v1238
        %v2090 = vsub.f32 1.0, %v1797
        %v2091 = vmul.f32 %v2090, %v2088
        %v2092 = vadd.f32 %v2089, %v2091
        %2093 = vst [vmem:[#allocation2] sm:$0x3] %v2092
        %s2094 = scalar_lea.vmem %s348, 2 [#allocation13]
        %2095 = vst [vmem:[%s2094] sm:$0x3] %v2092
        %v2096 = vld [vmem:[#allocation2] sm:$0x3]
        %s2097 = scalar_lea.vmem %s295, 8 [#allocation7]
        %v2098 = vld [vmem:[%s2097] sm:$0xf]
        %s2099 = sld [smem:[#allocation3 + %s359]]
        %v2100 = vstv %s2099
        %v2101 = vmul.f32 %v2100, %v2096
        %s2102 = sld [smem:[#allocation3 + %s363]]
        %v2103 = vstv %s2102
        %v2104 = vmul.f32 %v2103, %v2096
        %s2105 = sld [smem:[#allocation3 + %s367]]
        %v2106 = vstv %s2105
        %v2107 = vmul.f32 %v2106, %v2096
        %s2108 = sld [smem:[#allocation3 + %s371]]
        %v2109 = vstv %s2108
        %v2110 = vmul.f32 %v2109, %v2096
        %v2111 = vld [vmem:[#allocation10] sm:$0xff]
        %v2112 = vld [vmem:[#allocation10 + $0x8] sm:$0xff]
        %v2113 = vld [vmem:[#allocation10 + $0x10] sm:$0xff]
        %v2114 = vld [vmem:[#allocation10 + $0x18] sm:$0xff]
        %v2115 = vld [vmem:[#allocation10 + $0x20] sm:$0xff]
        %v2116 = vld [vmem:[#allocation10 + $0x28] sm:$0xff]
        %v2117 = vld [vmem:[#allocation10 + $0x30] sm:$0xff]
        %v2118 = vld [vmem:[#allocation10 + $0x38] sm:$0xff]
        %v2119 = vld [vmem:[#allocation10 + $0x40] sm:$0xff]
        %v2120 = vld [vmem:[#allocation10 + $0x48] sm:$0xff]
        %v2121 = vld [vmem:[#allocation10 + $0x50] sm:$0xff]
        %v2122 = vld [vmem:[#allocation10 + $0x58] sm:$0xff]
        %v2123 = vld [vmem:[#allocation10 + $0x60] sm:$0xff]
        %v2124 = vld [vmem:[#allocation10 + $0x68] sm:$0xff]
        %v2125 = vld [vmem:[#allocation10 + $0x70] sm:$0xff]
        %v2126 = vld [vmem:[#allocation10 + $0x78] sm:$0xff]
        %2127 = vmatpush.msra.mxu0 %v2126
        %2128 = vmatpush.msra.mxu0 %v2125
        %2129 = vmatpush.msra.mxu0 %v2124
        %2130 = vmatpush.msra.mxu0 %v2123
        %2131 = vmatpush.msra.mxu0 %v2122
        %2132 = vmatpush.msra.mxu0 %v2121
        %2133 = vmatpush.msra.mxu0 %v2120
        %2134 = vmatpush.msra.mxu0 %v2119
        %2135 = vmatpush.msra.mxu0 %v2118
        %2136 = vmatpush.msra.mxu0 %v2117
        %2137 = vmatpush.msra.mxu0 %v2116
        %2138 = vmatpush.msra.mxu0 %v2115
        %2139 = vmatpush.msra.mxu0 %v2114
        %2140 = vmatpush.msra.mxu0 %v2113
        %2141 = vmatpush.msra.mxu0 %v2112
        %2142 = vmatpush.msra.mxu0 %v2111
        %2143 = vmatmul.f32.gmra.mxu0 %v2096
        %v2144 = vpop.f32.mrf.mxu0
        %v2145 = vadd.f32 0.0, %v2144
        %2146 = vdwg.mxu0
        %s2147 = sld [smem:[#allocation3 + %s411]]
        %v2148 = vstv %s2147
        %v2149 = vmul.f32 %v2148, %v2145
        %v2150 = vadd.f32 %v2101, %v2149
        %s2151 = sld [smem:[#allocation3 + %s416]]
        %v2152 = vstv %s2151
        %v2153 = vmul.f32 %v2152, %v2145
        %v2154 = vadd.f32 %v2104, %v2153
        %s2155 = sld [smem:[#allocation3 + %s421]]
        %v2156 = vstv %s2155
        %v2157 = vmul.f32 %v2156, %v2145
        %v2158 = vadd.f32 %v2107, %v2157
        %s2159 = sld [smem:[#allocation3 + %s426]]
        %v2160 = vstv %s2159
        %v2161 = vmul.f32 %v2160, %v2145
        %v2162 = vadd.f32 %v2110, %v2161
        %2163 = vmatpush.msra.mxu0 %v2126
        %2164 = vmatpush.msra.mxu0 %v2125
        %2165 = vmatpush.msra.mxu0 %v2124
        %2166 = vmatpush.msra.mxu0 %v2123
        %2167 = vmatpush.msra.mxu0 %v2122
        %2168 = vmatpush.msra.mxu0 %v2121
        %2169 = vmatpush.msra.mxu0 %v2120
        %2170 = vmatpush.msra.mxu0 %v2119
        %2171 = vmatpush.msra.mxu0 %v2118
        %2172 = vmatpush.msra.mxu0 %v2117
        %2173 = vmatpush.msra.mxu0 %v2116
        %2174 = vmatpush.msra.mxu0 %v2115
        %2175 = vmatpush.msra.mxu0 %v2114
        %2176 = vmatpush.msra.mxu0 %v2113
        %2177 = vmatpush.msra.mxu0 %v2112
        %2178 = vmatpush.msra.mxu0 %v2111
        %2179 = vmatmul.f32.gmra.mxu0 %v2145
        %v2180 = vpop.f32.mrf.mxu0
        %v2181 = vadd.f32 0.0, %v2180
        %2182 = vdwg.mxu0
        %v2183 = vmul.f32 %v2181, 2.0
        %v2184 = vsub.f32 %v2183, %v2096
        %s2185 = sld [smem:[#allocation3 + %s453]]
        %v2186 = vstv %s2185
        %v2187 = vmul.f32 %v2186, %v2184
        %v2188 = vadd.f32 %v2150, %v2187
        %s2189 = sld [smem:[#allocation3 + %s458]]
        %v2190 = vstv %s2189
        %v2191 = vmul.f32 %v2190, %v2184
        %v2192 = vadd.f32 %v2154, %v2191
        %s2193 = sld [smem:[#allocation3 + %s463]]
        %v2194 = vstv %s2193
        %v2195 = vmul.f32 %v2194, %v2184
        %v2196 = vadd.f32 %v2158, %v2195
        %s2197 = sld [smem:[#allocation3 + %s468]]
        %v2198 = vstv %s2197
        %v2199 = vmul.f32 %v2198, %v2184
        %v2200 = vadd.f32 %v2162, %v2199
        %v2201 = vld [vmem:[%s473] sm:$0xff]
        %v2202 = vld [vmem:[%s473 + $0x8] sm:$0xff]
        %v2203 = vld [vmem:[%s473 + $0x10] sm:$0xff]
        %v2204 = vld [vmem:[%s473 + $0x18] sm:$0xff]
        %v2205 = vld [vmem:[%s473 + $0x20] sm:$0xff]
        %v2206 = vld [vmem:[%s473 + $0x28] sm:$0xff]
        %v2207 = vld [vmem:[%s473 + $0x30] sm:$0xff]
        %v2208 = vld [vmem:[%s473 + $0x38] sm:$0xff]
        %v2209 = vld [vmem:[%s473 + $0x40] sm:$0xff]
        %v2210 = vld [vmem:[%s473 + $0x48] sm:$0xff]
        %v2211 = vld [vmem:[%s473 + $0x50] sm:$0xff]
        %v2212 = vld [vmem:[%s473 + $0x58] sm:$0xff]
        %v2213 = vld [vmem:[%s473 + $0x60] sm:$0xff]
        %v2214 = vld [vmem:[%s473 + $0x68] sm:$0xff]
        %v2215 = vld [vmem:[%s473 + $0x70] sm:$0xff]
        %v2216 = vld [vmem:[%s473 + $0x78] sm:$0xff]
        %2217 = vmatpush.msra.mxu0 %v2216
        %2218 = vmatpush.msra.mxu0 %v2215
        %2219 = vmatpush.msra.mxu0 %v2214
        %2220 = vmatpush.msra.mxu0 %v2213
        %2221 = vmatpush.msra.mxu0 %v2212
        %2222 = vmatpush.msra.mxu0 %v2211
        %2223 = vmatpush.msra.mxu0 %v2210
        %2224 = vmatpush.msra.mxu0 %v2209
        %2225 = vmatpush.msra.mxu0 %v2208
        %2226 = vmatpush.msra.mxu0 %v2207
        %2227 = vmatpush.msra.mxu0 %v2206
        %2228 = vmatpush.msra.mxu0 %v2205
        %2229 = vmatpush.msra.mxu0 %v2204
        %2230 = vmatpush.msra.mxu0 %v2203
        %2231 = vmatpush.msra.mxu0 %v2202
        %2232 = vmatpush.msra.mxu0 %v2201
        %2233 = vmatmul.f32.gmra.mxu0 %v2145
        %v2234 = vpop.f32.mrf.mxu0
        %v2235 = vadd.f32 0.0, %v2234
        %2236 = vdwg.mxu0
        %s2237 = sld [smem:[#allocation3 + %s510]]
        %v2238 = vstv %s2237
        %v2239 = vmul.f32 %v2238, %v2235
        %v2240 = vadd.f32 %v2188, %v2239
        %s2241 = sld [smem:[#allocation3 + %s515]]
        %v2242 = vstv %s2241
        %v2243 = vmul.f32 %v2242, %v2235
        %v2244 = vadd.f32 %v2192, %v2243
        %s2245 = sld [smem:[#allocation3 + %s520]]
        %v2246 = vstv %s2245
        %v2247 = vmul.f32 %v2246, %v2235
        %v2248 = vadd.f32 %v2196, %v2247
        %s2249 = sld [smem:[#allocation3 + %s525]]
        %v2250 = vstv %s2249
        %v2251 = vmul.f32 %v2250, %v2235
        %v2252 = vadd.f32 %v2200, %v2251
        %2253 = vmatpush.msra.mxu0 %v2216
        %2254 = vmatpush.msra.mxu0 %v2215
        %2255 = vmatpush.msra.mxu0 %v2214
        %2256 = vmatpush.msra.mxu0 %v2213
        %2257 = vmatpush.msra.mxu0 %v2212
        %2258 = vmatpush.msra.mxu0 %v2211
        %2259 = vmatpush.msra.mxu0 %v2210
        %2260 = vmatpush.msra.mxu0 %v2209
        %2261 = vmatpush.msra.mxu0 %v2208
        %2262 = vmatpush.msra.mxu0 %v2207
        %2263 = vmatpush.msra.mxu0 %v2206
        %2264 = vmatpush.msra.mxu0 %v2205
        %2265 = vmatpush.msra.mxu0 %v2204
        %2266 = vmatpush.msra.mxu0 %v2203
        %2267 = vmatpush.msra.mxu0 %v2202
        %2268 = vmatpush.msra.mxu0 %v2201
        %2269 = vmatmul.f32.gmra.mxu0 %v2235
        %v2270 = vpop.f32.mrf.mxu0
        %v2271 = vadd.f32 0.0, %v2270
        %2272 = vdwg.mxu0
        %v2273 = vmul.f32 %v2271, 2.0
        %v2274 = vsub.f32 %v2273, %v2145
        %s2275 = sld [smem:[#allocation3 + %s552]]
        %v2276 = vstv %s2275
        %v2277 = vmul.f32 %v2276, %v2274
        %v2278 = vadd.f32 %v2240, %v2277
        %s2279 = sld [smem:[#allocation3 + %s557]]
        %v2280 = vstv %s2279
        %v2281 = vmul.f32 %v2280, %v2274
        %v2282 = vadd.f32 %v2244, %v2281
        %s2283 = sld [smem:[#allocation3 + %s562]]
        %v2284 = vstv %s2283
        %v2285 = vmul.f32 %v2284, %v2274
        %v2286 = vadd.f32 %v2248, %v2285
        %s2287 = sld [smem:[#allocation3 + %s567]]
        %v2288 = vstv %s2287
        %v2289 = vmul.f32 %v2288, %v2274
        %v2290 = vadd.f32 %v2252, %v2289
        %v2292 = vrot.slane %v2282, 6
        %v2295 = vrot.slane %v2286, 4
        %v2298 = vrot.slane %v2290, 2
        %v2300 = vsel %vm581, %v2278, %v2292
        %v2301 = vsel %vm583, %v2300, %v2295
        %v2302 = vsel %vm585, %v2301, %v2298
        %v2304 = vunpack.c.l.s4 1935823168
        %v2305 = vunpack.c.0.s8 %v2304
        %v2306 = vperm.slane %v2302, %v2305
        %v2307 = vld [vmem:[#allocation11] sm:$0xff]
        %v2308 = vld [vmem:[#allocation11 + $0x8] sm:$0xff]
        %v2309 = vld [vmem:[#allocation11 + $0x10] sm:$0xff]
        %v2310 = vld [vmem:[#allocation11 + $0x18] sm:$0xff]
        %v2311 = vld [vmem:[#allocation11 + $0x20] sm:$0xff]
        %v2312 = vld [vmem:[#allocation11 + $0x28] sm:$0xff]
        %v2313 = vld [vmem:[#allocation11 + $0x30] sm:$0xff]
        %v2314 = vld [vmem:[#allocation11 + $0x38] sm:$0xff]
        %v2315 = vld [vmem:[#allocation11 + $0x40] sm:$0xff]
        %v2316 = vld [vmem:[#allocation11 + $0x48] sm:$0xff]
        %v2317 = vld [vmem:[#allocation11 + $0x50] sm:$0xff]
        %v2318 = vld [vmem:[#allocation11 + $0x58] sm:$0xff]
        %v2319 = vld [vmem:[#allocation11 + $0x60] sm:$0xff]
        %v2320 = vld [vmem:[#allocation11 + $0x68] sm:$0xff]
        %v2321 = vld [vmem:[#allocation11 + $0x70] sm:$0xff]
        %v2322 = vld [vmem:[#allocation11 + $0x78] sm:$0xff]
        %v2323 = vld [vmem:[#allocation11 + $0x80] sm:$0xff]
        %v2324 = vld [vmem:[#allocation11 + $0x88] sm:$0xff]
        %v2325 = vld [vmem:[#allocation11 + $0x90] sm:$0xff]
        %v2326 = vld [vmem:[#allocation11 + $0x98] sm:$0xff]
        %v2327 = vld [vmem:[#allocation11 + $0xa0] sm:$0xff]
        %v2328 = vld [vmem:[#allocation11 + $0xa8] sm:$0xff]
        %v2329 = vld [vmem:[#allocation11 + $0xb0] sm:$0xff]
        %v2330 = vld [vmem:[#allocation11 + $0xb8] sm:$0xff]
        %v2331 = vld [vmem:[#allocation11 + $0xc0] sm:$0xff]
        %v2332 = vld [vmem:[#allocation11 + $0xc8] sm:$0xff]
        %v2333 = vld [vmem:[#allocation11 + $0xd0] sm:$0xff]
        %v2334 = vld [vmem:[#allocation11 + $0xd8] sm:$0xff]
        %v2335 = vld [vmem:[#allocation11 + $0xe0] sm:$0xff]
        %v2336 = vld [vmem:[#allocation11 + $0xe8] sm:$0xff]
        %v2337 = vld [vmem:[#allocation11 + $0xf0] sm:$0xff]
        %v2338 = vld [vmem:[#allocation11 + $0xf8] sm:$0xff]
        %v2339 = vld [vmem:[#allocation11 + $0x100] sm:$0xff]
        %v2340 = vld [vmem:[#allocation11 + $0x108] sm:$0xff]
        %v2341 = vld [vmem:[#allocation11 + $0x110] sm:$0xff]
        %v2342 = vld [vmem:[#allocation11 + $0x118] sm:$0xff]
        %v2343 = vld [vmem:[#allocation11 + $0x120] sm:$0xff]
        %v2344 = vld [vmem:[#allocation11 + $0x128] sm:$0xff]
        %v2345 = vld [vmem:[#allocation11 + $0x130] sm:$0xff]
        %v2346 = vld [vmem:[#allocation11 + $0x138] sm:$0xff]
        %v2347 = vld [vmem:[#allocation11 + $0x140] sm:$0xff]
        %v2348 = vld [vmem:[#allocation11 + $0x148] sm:$0xff]
        %v2349 = vld [vmem:[#allocation11 + $0x150] sm:$0xff]
        %v2350 = vld [vmem:[#allocation11 + $0x158] sm:$0xff]
        %v2351 = vld [vmem:[#allocation11 + $0x160] sm:$0xff]
        %v2352 = vld [vmem:[#allocation11 + $0x168] sm:$0xff]
        %v2353 = vld [vmem:[#allocation11 + $0x170] sm:$0xff]
        %v2354 = vld [vmem:[#allocation11 + $0x178] sm:$0xff]
        %v2355 = vld [vmem:[#allocation11 + $0x180] sm:$0xff]
        %v2356 = vld [vmem:[#allocation11 + $0x188] sm:$0xff]
        %v2357 = vld [vmem:[#allocation11 + $0x190] sm:$0xff]
        %v2358 = vld [vmem:[#allocation11 + $0x198] sm:$0xff]
        %v2359 = vld [vmem:[#allocation11 + $0x1a0] sm:$0xff]
        %v2360 = vld [vmem:[#allocation11 + $0x1a8] sm:$0xff]
        %v2361 = vld [vmem:[#allocation11 + $0x1b0] sm:$0xff]
        %v2362 = vld [vmem:[#allocation11 + $0x1b8] sm:$0xff]
        %v2363 = vld [vmem:[#allocation11 + $0x1c0] sm:$0xff]
        %v2364 = vld [vmem:[#allocation11 + $0x1c8] sm:$0xff]
        %v2365 = vld [vmem:[#allocation11 + $0x1d0] sm:$0xff]
        %v2366 = vld [vmem:[#allocation11 + $0x1d8] sm:$0xff]
        %v2367 = vld [vmem:[#allocation11 + $0x1e0] sm:$0xff]
        %v2368 = vld [vmem:[#allocation11 + $0x1e8] sm:$0xff]
        %v2369 = vld [vmem:[#allocation11 + $0x1f0] sm:$0xff]
        %v2370 = vld [vmem:[#allocation11 + $0x1f8] sm:$0xff]
        %v2371 = vld [vmem:[#allocation11 + $0x200] sm:$0xff]
        %v2372 = vld [vmem:[#allocation11 + $0x208] sm:$0xff]
        %v2373 = vld [vmem:[#allocation11 + $0x210] sm:$0xff]
        %v2374 = vld [vmem:[#allocation11 + $0x218] sm:$0xff]
        %v2375 = vld [vmem:[#allocation11 + $0x220] sm:$0xff]
        %v2376 = vld [vmem:[#allocation11 + $0x228] sm:$0xff]
        %v2377 = vld [vmem:[#allocation11 + $0x230] sm:$0xff]
        %v2378 = vld [vmem:[#allocation11 + $0x238] sm:$0xff]
        %v2379 = vld [vmem:[#allocation11 + $0x240] sm:$0xff]
        %v2380 = vld [vmem:[#allocation11 + $0x248] sm:$0xff]
        %v2381 = vld [vmem:[#allocation11 + $0x250] sm:$0xff]
        %v2382 = vld [vmem:[#allocation11 + $0x258] sm:$0xff]
        %v2383 = vld [vmem:[#allocation11 + $0x260] sm:$0xff]
        %v2384 = vld [vmem:[#allocation11 + $0x268] sm:$0xff]
        %v2385 = vld [vmem:[#allocation11 + $0x270] sm:$0xff]
        %v2386 = vld [vmem:[#allocation11 + $0x278] sm:$0xff]
        %v2387 = vld [vmem:[#allocation11 + $0x280] sm:$0xff]
        %v2388 = vld [vmem:[#allocation11 + $0x288] sm:$0xff]
        %v2389 = vld [vmem:[#allocation11 + $0x290] sm:$0xff]
        %v2390 = vld [vmem:[#allocation11 + $0x298] sm:$0xff]
        %v2391 = vld [vmem:[#allocation11 + $0x2a0] sm:$0xff]
        %v2392 = vld [vmem:[#allocation11 + $0x2a8] sm:$0xff]
        %v2393 = vld [vmem:[#allocation11 + $0x2b0] sm:$0xff]
        %v2394 = vld [vmem:[#allocation11 + $0x2b8] sm:$0xff]
        %v2395 = vld [vmem:[#allocation11 + $0x2c0] sm:$0xff]
        %v2396 = vld [vmem:[#allocation11 + $0x2c8] sm:$0xff]
        %v2397 = vld [vmem:[#allocation11 + $0x2d0] sm:$0xff]
        %v2398 = vld [vmem:[#allocation11 + $0x2d8] sm:$0xff]
        %v2399 = vld [vmem:[#allocation11 + $0x2e0] sm:$0xff]
        %v2400 = vld [vmem:[#allocation11 + $0x2e8] sm:$0xff]
        %v2401 = vld [vmem:[#allocation11 + $0x2f0] sm:$0xff]
        %v2402 = vld [vmem:[#allocation11 + $0x2f8] sm:$0xff]
        %v2403 = vld [vmem:[#allocation11 + $0x300] sm:$0xff]
        %v2404 = vld [vmem:[#allocation11 + $0x308] sm:$0xff]
        %v2405 = vld [vmem:[#allocation11 + $0x310] sm:$0xff]
        %v2406 = vld [vmem:[#allocation11 + $0x318] sm:$0xff]
        %v2407 = vld [vmem:[#allocation11 + $0x320] sm:$0xff]
        %v2408 = vld [vmem:[#allocation11 + $0x328] sm:$0xff]
        %v2409 = vld [vmem:[#allocation11 + $0x330] sm:$0xff]
        %v2410 = vld [vmem:[#allocation11 + $0x338] sm:$0xff]
        %v2411 = vld [vmem:[#allocation11 + $0x340] sm:$0xff]
        %v2412 = vld [vmem:[#allocation11 + $0x348] sm:$0xff]
        %v2413 = vld [vmem:[#allocation11 + $0x350] sm:$0xff]
        %v2414 = vld [vmem:[#allocation11 + $0x358] sm:$0xff]
        %v2415 = vld [vmem:[#allocation11 + $0x360] sm:$0xff]
        %v2416 = vld [vmem:[#allocation11 + $0x368] sm:$0xff]
        %v2417 = vld [vmem:[#allocation11 + $0x370] sm:$0xff]
        %v2418 = vld [vmem:[#allocation11 + $0x378] sm:$0xff]
        %v2419 = vld [vmem:[#allocation11 + $0x380] sm:$0xff]
        %v2420 = vld [vmem:[#allocation11 + $0x388] sm:$0xff]
        %v2421 = vld [vmem:[#allocation11 + $0x390] sm:$0xff]
        %v2422 = vld [vmem:[#allocation11 + $0x398] sm:$0xff]
        %v2423 = vld [vmem:[#allocation11 + $0x3a0] sm:$0xff]
        %v2424 = vld [vmem:[#allocation11 + $0x3a8] sm:$0xff]
        %v2425 = vld [vmem:[#allocation11 + $0x3b0] sm:$0xff]
        %v2426 = vld [vmem:[#allocation11 + $0x3b8] sm:$0xff]
        %v2427 = vld [vmem:[#allocation11 + $0x3c0] sm:$0xff]
        %v2428 = vld [vmem:[#allocation11 + $0x3c8] sm:$0xff]
        %v2429 = vld [vmem:[#allocation11 + $0x3d0] sm:$0xff]
        %v2430 = vld [vmem:[#allocation11 + $0x3d8] sm:$0xff]
        %v2431 = vld [vmem:[#allocation11 + $0x3e0] sm:$0xff]
        %v2432 = vld [vmem:[#allocation11 + $0x3e8] sm:$0xff]
        %v2433 = vld [vmem:[#allocation11 + $0x3f0] sm:$0xff]
        %v2434 = vld [vmem:[#allocation11 + $0x3f8] sm:$0xff]
        %2436 = vst [vmem:[#allocation1] ss:$4 sm:$0xff] %v2306
        %v2437 = vld.sshfl [vmem:[#allocation1] sm:$0xff pattern:$0x73625140]
        %v2438 = vld.sshfl [vmem:[#allocation1 + $0x8] sm:$0xff pattern:$0x73625140]
        %v2439 = vld.sshfl [vmem:[#allocation1 + $0x10] sm:$0xff pattern:$0x73625140]
        %v2440 = vld.sshfl [vmem:[#allocation1 + $0x18] sm:$0xff pattern:$0x73625140]
        %2445 = vmatpush.msra.mxu0 %v2337
        %2446 = vmatpush.msra.mxu0 %v2335
        %2447 = vmatpush.msra.mxu0 %v2333
        %2448 = vmatpush.msra.mxu0 %v2331
        %2449 = vmatpush.msra.mxu0 %v2329
        %2450 = vmatpush.msra.mxu0 %v2327
        %2451 = vmatpush.msra.mxu0 %v2325
        %2452 = vmatpush.msra.mxu0 %v2323
        %2453 = vmatpush.msra.mxu0 %v2321
        %2454 = vmatpush.msra.mxu0 %v2319
        %2455 = vmatpush.msra.mxu0 %v2317
        %2456 = vmatpush.msra.mxu0 %v2315
        %2457 = vmatpush.msra.mxu0 %v2313
        %2458 = vmatpush.msra.mxu0 %v2311
        %2459 = vmatpush.msra.mxu0 %v2309
        %2460 = vmatpush.msra.mxu0 %v2307
        %2461 = vmatmul.f32.gmra.mxu0 %v2437
        %v2462 = vpop.f32.mrf.mxu0
        %v2463 = vadd.f32 0.0, %v2462
        %2464 = vdwg.mxu0
        %2465 = vmatpush.msra.mxu0 %v2369
        %2466 = vmatpush.msra.mxu0 %v2367
        %2467 = vmatpush.msra.mxu0 %v2365
        %2468 = vmatpush.msra.mxu0 %v2363
        %2469 = vmatpush.msra.mxu0 %v2361
        %2470 = vmatpush.msra.mxu0 %v2359
        %2471 = vmatpush.msra.mxu0 %v2357
        %2472 = vmatpush.msra.mxu0 %v2355
        %2473 = vmatpush.msra.mxu0 %v2353
        %2474 = vmatpush.msra.mxu0 %v2351
        %2475 = vmatpush.msra.mxu0 %v2349
        %2476 = vmatpush.msra.mxu0 %v2347
        %2477 = vmatpush.msra.mxu0 %v2345
        %2478 = vmatpush.msra.mxu0 %v2343
        %2479 = vmatpush.msra.mxu0 %v2341
        %2480 = vmatpush.msra.mxu0 %v2339
        %2481 = vmatmul.f32.gmra.mxu0 %v2438
        %v2482 = vpop.f32.mrf.mxu0
        %v2483 = vadd.f32 %v2463, %v2482
        %2484 = vdwg.mxu0
        %2485 = vmatpush.msra.mxu0 %v2401
        %2486 = vmatpush.msra.mxu0 %v2399
        %2487 = vmatpush.msra.mxu0 %v2397
        %2488 = vmatpush.msra.mxu0 %v2395
        %2489 = vmatpush.msra.mxu0 %v2393
        %2490 = vmatpush.msra.mxu0 %v2391
        %2491 = vmatpush.msra.mxu0 %v2389
        %2492 = vmatpush.msra.mxu0 %v2387
        %2493 = vmatpush.msra.mxu0 %v2385
        %2494 = vmatpush.msra.mxu0 %v2383
        %2495 = vmatpush.msra.mxu0 %v2381
        %2496 = vmatpush.msra.mxu0 %v2379
        %2497 = vmatpush.msra.mxu0 %v2377
        %2498 = vmatpush.msra.mxu0 %v2375
        %2499 = vmatpush.msra.mxu0 %v2373
        %2500 = vmatpush.msra.mxu0 %v2371
        %2501 = vmatmul.f32.gmra.mxu0 %v2439
        %v2502 = vpop.f32.mrf.mxu0
        %v2503 = vadd.f32 %v2483, %v2502
        %2504 = vdwg.mxu0
        %2505 = vmatpush.msra.mxu0 %v2433
        %2506 = vmatpush.msra.mxu0 %v2431
        %2507 = vmatpush.msra.mxu0 %v2429
        %2508 = vmatpush.msra.mxu0 %v2427
        %2509 = vmatpush.msra.mxu0 %v2425
        %2510 = vmatpush.msra.mxu0 %v2423
        %2511 = vmatpush.msra.mxu0 %v2421
        %2512 = vmatpush.msra.mxu0 %v2419
        %2513 = vmatpush.msra.mxu0 %v2417
        %2514 = vmatpush.msra.mxu0 %v2415
        %2515 = vmatpush.msra.mxu0 %v2413
        %2516 = vmatpush.msra.mxu0 %v2411
        %2517 = vmatpush.msra.mxu0 %v2409
        %2518 = vmatpush.msra.mxu0 %v2407
        %2519 = vmatpush.msra.mxu0 %v2405
        %2520 = vmatpush.msra.mxu0 %v2403
        %2521 = vmatmul.f32.gmra.mxu0 %v2440
        %v2522 = vpop.f32.mrf.mxu0
        %v2523 = vadd.f32 %v2503, %v2522
        %2524 = vdwg.mxu0
        %2525 = vmatpush.msra.mxu0 %v2338
        %2526 = vmatpush.msra.mxu0 %v2336
        %2527 = vmatpush.msra.mxu0 %v2334
        %2528 = vmatpush.msra.mxu0 %v2332
        %2529 = vmatpush.msra.mxu0 %v2330
        %2530 = vmatpush.msra.mxu0 %v2328
        %2531 = vmatpush.msra.mxu0 %v2326
        %2532 = vmatpush.msra.mxu0 %v2324
        %2533 = vmatpush.msra.mxu0 %v2322
        %2534 = vmatpush.msra.mxu0 %v2320
        %2535 = vmatpush.msra.mxu0 %v2318
        %2536 = vmatpush.msra.mxu0 %v2316
        %2537 = vmatpush.msra.mxu0 %v2314
        %2538 = vmatpush.msra.mxu0 %v2312
        %2539 = vmatpush.msra.mxu0 %v2310
        %2540 = vmatpush.msra.mxu0 %v2308
        %2541 = vmatmul.f32.gmra.mxu0 %v2437
        %v2542 = vpop.f32.mrf.mxu0
        %v2543 = vadd.f32 0.0, %v2542
        %2544 = vdwg.mxu0
        %2545 = vmatpush.msra.mxu0 %v2370
        %2546 = vmatpush.msra.mxu0 %v2368
        %2547 = vmatpush.msra.mxu0 %v2366
        %2548 = vmatpush.msra.mxu0 %v2364
        %2549 = vmatpush.msra.mxu0 %v2362
        %2550 = vmatpush.msra.mxu0 %v2360
        %2551 = vmatpush.msra.mxu0 %v2358
        %2552 = vmatpush.msra.mxu0 %v2356
        %2553 = vmatpush.msra.mxu0 %v2354
        %2554 = vmatpush.msra.mxu0 %v2352
        %2555 = vmatpush.msra.mxu0 %v2350
        %2556 = vmatpush.msra.mxu0 %v2348
        %2557 = vmatpush.msra.mxu0 %v2346
        %2558 = vmatpush.msra.mxu0 %v2344
        %2559 = vmatpush.msra.mxu0 %v2342
        %2560 = vmatpush.msra.mxu0 %v2340
        %2561 = vmatmul.f32.gmra.mxu0 %v2438
        %v2562 = vpop.f32.mrf.mxu0
        %v2563 = vadd.f32 %v2543, %v2562
        %2564 = vdwg.mxu0
        %2565 = vmatpush.msra.mxu0 %v2402
        %2566 = vmatpush.msra.mxu0 %v2400
        %2567 = vmatpush.msra.mxu0 %v2398
        %2568 = vmatpush.msra.mxu0 %v2396
        %2569 = vmatpush.msra.mxu0 %v2394
        %2570 = vmatpush.msra.mxu0 %v2392
        %2571 = vmatpush.msra.mxu0 %v2390
        %2572 = vmatpush.msra.mxu0 %v2388
        %2573 = vmatpush.msra.mxu0 %v2386
        %2574 = vmatpush.msra.mxu0 %v2384
        %2575 = vmatpush.msra.mxu0 %v2382
        %2576 = vmatpush.msra.mxu0 %v2380
        %2577 = vmatpush.msra.mxu0 %v2378
        %2578 = vmatpush.msra.mxu0 %v2376
        %2579 = vmatpush.msra.mxu0 %v2374
        %2580 = vmatpush.msra.mxu0 %v2372
        %2581 = vmatmul.f32.gmra.mxu0 %v2439
        %v2582 = vpop.f32.mrf.mxu0
        %v2583 = vadd.f32 %v2563, %v2582
        %2584 = vdwg.mxu0
        %2585 = vmatpush.msra.mxu0 %v2434
        %2586 = vmatpush.msra.mxu0 %v2432
        %2587 = vmatpush.msra.mxu0 %v2430
        %2588 = vmatpush.msra.mxu0 %v2428
        %2589 = vmatpush.msra.mxu0 %v2426
        %2590 = vmatpush.msra.mxu0 %v2424
        %2591 = vmatpush.msra.mxu0 %v2422
        %2592 = vmatpush.msra.mxu0 %v2420
        %2593 = vmatpush.msra.mxu0 %v2418
        %2594 = vmatpush.msra.mxu0 %v2416
        %2595 = vmatpush.msra.mxu0 %v2414
        %2596 = vmatpush.msra.mxu0 %v2412
        %2597 = vmatpush.msra.mxu0 %v2410
        %2598 = vmatpush.msra.mxu0 %v2408
        %2599 = vmatpush.msra.mxu0 %v2406
        %2600 = vmatpush.msra.mxu0 %v2404
        %2601 = vmatmul.f32.gmra.mxu0 %v2440
        %v2602 = vpop.f32.mrf.mxu0
        %v2603 = vadd.f32 %v2583, %v2602
        %2604 = vdwg.mxu0
        %v2605 = vrot.slane %v2603, 4
        %v2606 = vsel %vm890, %v2605, %v2523
        %v2608 = vunpack.c.l.s4 1934713408
        %v2609 = vunpack.c.0.s8 %v2608
        %v2610 = vperm.slane %v2606, %v2609
        %v2611 = vrot.slane %v2610, 4
        %v2612 = vsel %vm890, 0.0, %v2611
        %v2613 = vadd.f32 %v2610, %v2098
        %v2614 = vxor.u32 %v2613, 2147483648
        %v2615 = vmul.f32 %v2614, 1.442695
        %v2616 = vpow.pop %v2615
        %v2617 = vadd.f32 %v2616, 1.0
        %v2618 = vrcp.pop %v2617
        %v2619 = vmul.f32 %v2617, %v2618
        %v2620 = vsub.f32 1.0, %v2619
        %v2621 = vmul.f32 %v2618, %v2620
        %v2622 = vadd.f32 %v2618, %v2621
        %vm2623 = vweird.f32 %v2617
        %vm2624 = vweird.f32 %v2618
        %vm2625 = vmor %vm2623, %vm2624
        %v2626 = vsel %vm2625, %v2618, %v2622
        %v2627 = vand.u32 2147483647, %v2617
        %vm2628 = vcmp.eq.f32.partialorder %v2627, 8.507059e+37
        %v2629 = vand.u32 %v2617, 2147483648
        %v2630 = vor.u32 1.1754944e-38, %v2629
        %v2631 = vsel %vm2628, %v2630, %v2626
        %v2632 = vmul.f32 1.0, %v2631
        %v2634 = vrot.slane %v2098, 2
        %v2636 = vadd.f32 %v2612, %v2634
        %v2637 = vxor.u32 %v2636, 2147483648
        %v2638 = vmul.f32 %v2637, 1.442695
        %v2639 = vpow.pop %v2638
        %v2640 = vadd.f32 %v2639, 1.0
        %v2641 = vrcp.pop %v2640
        %v2642 = vmul.f32 %v2640, %v2641
        %v2643 = vsub.f32 1.0, %v2642
        %v2644 = vmul.f32 %v2641, %v2643
        %v2645 = vadd.f32 %v2641, %v2644
        %vm2646 = vweird.f32 %v2640
        %vm2647 = vweird.f32 %v2641
        %vm2648 = vmor %vm2646, %vm2647
        %v2649 = vsel %vm2648, %v2641, %v2645
        %v2650 = vand.u32 2147483647, %v2640
        %vm2651 = vcmp.eq.f32.partialorder %v2650, 8.507059e+37
        %v2652 = vand.u32 %v2640, 2147483648
        %v2653 = vor.u32 1.1754944e-38, %v2652
        %v2654 = vsel %vm2651, %v2653, %v2649
        %v2655 = vmul.f32 1.0, %v2654
        %v2656 = vmul.f32 %v2632, %v2096
        %v2657 = vmul.f32 %v2106, %v2656
        %v2658 = vmul.f32 %v2109, %v2656
        %2659 = vmatpush.msra.mxu0 %v2126
        %2660 = vmatpush.msra.mxu0 %v2125
        %2661 = vmatpush.msra.mxu0 %v2124
        %2662 = vmatpush.msra.mxu0 %v2123
        %2663 = vmatpush.msra.mxu0 %v2122
        %2664 = vmatpush.msra.mxu0 %v2121
        %2665 = vmatpush.msra.mxu0 %v2120
        %2666 = vmatpush.msra.mxu0 %v2119
        %2667 = vmatpush.msra.mxu0 %v2118
        %2668 = vmatpush.msra.mxu0 %v2117
        %2669 = vmatpush.msra.mxu0 %v2116
        %2670 = vmatpush.msra.mxu0 %v2115
        %2671 = vmatpush.msra.mxu0 %v2114
        %2672 = vmatpush.msra.mxu0 %v2113
        %2673 = vmatpush.msra.mxu0 %v2112
        %2674 = vmatpush.msra.mxu0 %v2111
        %2675 = vmatmul.f32.gmra.mxu0 %v2656
        %v2676 = vpop.f32.mrf.mxu0
        %v2677 = vadd.f32 0.0, %v2676
        %2678 = vdwg.mxu0
        %v2679 = vmul.f32 %v2156, %v2677
        %v2680 = vadd.f32 %v2657, %v2679
        %v2681 = vmul.f32 %v2160, %v2677
        %v2682 = vadd.f32 %v2658, %v2681
        %2683 = vmatpush.msra.mxu0 %v2126
        %2684 = vmatpush.msra.mxu0 %v2125
        %2685 = vmatpush.msra.mxu0 %v2124
        %2686 = vmatpush.msra.mxu0 %v2123
        %2687 = vmatpush.msra.mxu0 %v2122
        %2688 = vmatpush.msra.mxu0 %v2121
        %2689 = vmatpush.msra.mxu0 %v2120
        %2690 = vmatpush.msra.mxu0 %v2119
        %2691 = vmatpush.msra.mxu0 %v2118
        %2692 = vmatpush.msra.mxu0 %v2117
        %2693 = vmatpush.msra.mxu0 %v2116
        %2694 = vmatpush.msra.mxu0 %v2115
        %2695 = vmatpush.msra.mxu0 %v2114
        %2696 = vmatpush.msra.mxu0 %v2113
        %2697 = vmatpush.msra.mxu0 %v2112
        %2698 = vmatpush.msra.mxu0 %v2111
        %2699 = vmatmul.f32.gmra.mxu0 %v2677
        %v2700 = vpop.f32.mrf.mxu0
        %v2701 = vadd.f32 0.0, %v2700
        %2702 = vdwg.mxu0
        %v2703 = vmul.f32 %v2701, 2.0
        %v2704 = vsub.f32 %v2703, %v2656
        %v2705 = vmul.f32 %v2194, %v2704
        %v2706 = vadd.f32 %v2680, %v2705
        %v2707 = vmul.f32 %v2198, %v2704
        %v2708 = vadd.f32 %v2682, %v2707
        %2709 = vmatpush.msra.mxu0 %v2216
        %2710 = vmatpush.msra.mxu0 %v2215
        %2711 = vmatpush.msra.mxu0 %v2214
        %2712 = vmatpush.msra.mxu0 %v2213
        %2713 = vmatpush.msra.mxu0 %v2212
        %2714 = vmatpush.msra.mxu0 %v2211
        %2715 = vmatpush.msra.mxu0 %v2210
        %2716 = vmatpush.msra.mxu0 %v2209
        %2717 = vmatpush.msra.mxu0 %v2208
        %2718 = vmatpush.msra.mxu0 %v2207
        %2719 = vmatpush.msra.mxu0 %v2206
        %2720 = vmatpush.msra.mxu0 %v2205
        %2721 = vmatpush.msra.mxu0 %v2204
        %2722 = vmatpush.msra.mxu0 %v2203
        %2723 = vmatpush.msra.mxu0 %v2202
        %2724 = vmatpush.msra.mxu0 %v2201
        %2725 = vmatmul.f32.gmra.mxu0 %v2677
        %v2726 = vpop.f32.mrf.mxu0
        %v2727 = vadd.f32 0.0, %v2726
        %2728 = vdwg.mxu0
        %v2729 = vmul.f32 %v2246, %v2727
        %v2730 = vadd.f32 %v2706, %v2729
        %v2731 = vmul.f32 %v2250, %v2727
        %v2732 = vadd.f32 %v2708, %v2731
        %2733 = vmatpush.msra.mxu0 %v2216
        %2734 = vmatpush.msra.mxu0 %v2215
        %2735 = vmatpush.msra.mxu0 %v2214
        %2736 = vmatpush.msra.mxu0 %v2213
        %2737 = vmatpush.msra.mxu0 %v2212
        %2738 = vmatpush.msra.mxu0 %v2211
        %2739 = vmatpush.msra.mxu0 %v2210
        %2740 = vmatpush.msra.mxu0 %v2209
        %2741 = vmatpush.msra.mxu0 %v2208
        %2742 = vmatpush.msra.mxu0 %v2207
        %2743 = vmatpush.msra.mxu0 %v2206
        %2744 = vmatpush.msra.mxu0 %v2205
        %2745 = vmatpush.msra.mxu0 %v2204
        %2746 = vmatpush.msra.mxu0 %v2203
        %2747 = vmatpush.msra.mxu0 %v2202
        %2748 = vmatpush.msra.mxu0 %v2201
        %2749 = vmatmul.f32.gmra.mxu0 %v2727
        %v2750 = vpop.f32.mrf.mxu0
        %v2751 = vadd.f32 0.0, %v2750
        %2752 = vdwg.mxu0
        %v2753 = vmul.f32 %v2751, 2.0
        %v2754 = vsub.f32 %v2753, %v2677
        %v2755 = vmul.f32 %v2284, %v2754
        %v2756 = vadd.f32 %v2730, %v2755
        %v2757 = vmul.f32 %v2288, %v2754
        %v2758 = vadd.f32 %v2732, %v2757
        %v2760 = vrot.slane %v2758, 6
        %v2762 = vsel %vm581, %v2756, %v2760
        %v2764 = vunpack.c.l.s4 1935823168
        %v2765 = vunpack.c.0.s8 %v2764
        %v2766 = vperm.slane %v2762, %v2765
        %v2768 = vperm.slane %v2766, 0
        %v2769 = vperm.slane %v2766, 2
        %v2770 = vperm.slane %v2766, 4
        %v2771 = vperm.slane %v2766, 6
        %2776 = vmatpush.msra.mxu0 %v2337
        %2777 = vmatpush.msra.mxu0 %v2335
        %2778 = vmatpush.msra.mxu0 %v2333
        %2779 = vmatpush.msra.mxu0 %v2331
        %2780 = vmatpush.msra.mxu0 %v2329
        %2781 = vmatpush.msra.mxu0 %v2327
        %2782 = vmatpush.msra.mxu0 %v2325
        %2783 = vmatpush.msra.mxu0 %v2323
        %2784 = vmatpush.msra.mxu0 %v2321
        %2785 = vmatpush.msra.mxu0 %v2319
        %2786 = vmatpush.msra.mxu0 %v2317
        %2787 = vmatpush.msra.mxu0 %v2315
        %2788 = vmatpush.msra.mxu0 %v2313
        %2789 = vmatpush.msra.mxu0 %v2311
        %2790 = vmatpush.msra.mxu0 %v2309
        %2791 = vmatpush.msra.mxu0 %v2307
        %2792 = vmatmul.f32.gmra.mxu0 %v2768
        %v2793 = vpop.f32.mrf.mxu0
        %v2794 = vadd.f32 0.0, %v2793
        %2795 = vdwg.mxu0
        %2796 = vmatpush.msra.mxu0 %v2369
        %2797 = vmatpush.msra.mxu0 %v2367
        %2798 = vmatpush.msra.mxu0 %v2365
        %2799 = vmatpush.msra.mxu0 %v2363
        %2800 = vmatpush.msra.mxu0 %v2361
        %2801 = vmatpush.msra.mxu0 %v2359
        %2802 = vmatpush.msra.mxu0 %v2357
        %2803 = vmatpush.msra.mxu0 %v2355
        %2804 = vmatpush.msra.mxu0 %v2353
        %2805 = vmatpush.msra.mxu0 %v2351
        %2806 = vmatpush.msra.mxu0 %v2349
        %2807 = vmatpush.msra.mxu0 %v2347
        %2808 = vmatpush.msra.mxu0 %v2345
        %2809 = vmatpush.msra.mxu0 %v2343
        %2810 = vmatpush.msra.mxu0 %v2341
        %2811 = vmatpush.msra.mxu0 %v2339
        %2812 = vmatmul.f32.gmra.mxu0 %v2769
        %v2813 = vpop.f32.mrf.mxu0
        %v2814 = vadd.f32 %v2794, %v2813
        %2815 = vdwg.mxu0
        %2816 = vmatpush.msra.mxu0 %v2401
        %2817 = vmatpush.msra.mxu0 %v2399
        %2818 = vmatpush.msra.mxu0 %v2397
        %2819 = vmatpush.msra.mxu0 %v2395
        %2820 = vmatpush.msra.mxu0 %v2393
        %2821 = vmatpush.msra.mxu0 %v2391
        %2822 = vmatpush.msra.mxu0 %v2389
        %2823 = vmatpush.msra.mxu0 %v2387
        %2824 = vmatpush.msra.mxu0 %v2385
        %2825 = vmatpush.msra.mxu0 %v2383
        %2826 = vmatpush.msra.mxu0 %v2381
        %2827 = vmatpush.msra.mxu0 %v2379
        %2828 = vmatpush.msra.mxu0 %v2377
        %2829 = vmatpush.msra.mxu0 %v2375
        %2830 = vmatpush.msra.mxu0 %v2373
        %2831 = vmatpush.msra.mxu0 %v2371
        %2832 = vmatmul.f32.gmra.mxu0 %v2770
        %v2833 = vpop.f32.mrf.mxu0
        %v2834 = vadd.f32 %v2814, %v2833
        %2835 = vdwg.mxu0
        %2836 = vmatpush.msra.mxu0 %v2433
        %2837 = vmatpush.msra.mxu0 %v2431
        %2838 = vmatpush.msra.mxu0 %v2429
        %2839 = vmatpush.msra.mxu0 %v2427
        %2840 = vmatpush.msra.mxu0 %v2425
        %2841 = vmatpush.msra.mxu0 %v2423
        %2842 = vmatpush.msra.mxu0 %v2421
        %2843 = vmatpush.msra.mxu0 %v2419
        %2844 = vmatpush.msra.mxu0 %v2417
        %2845 = vmatpush.msra.mxu0 %v2415
        %2846 = vmatpush.msra.mxu0 %v2413
        %2847 = vmatpush.msra.mxu0 %v2411
        %2848 = vmatpush.msra.mxu0 %v2409
        %2849 = vmatpush.msra.mxu0 %v2407
        %2850 = vmatpush.msra.mxu0 %v2405
        %2851 = vmatpush.msra.mxu0 %v2403
        %2852 = vmatmul.f32.gmra.mxu0 %v2771
        %v2853 = vpop.f32.mrf.mxu0
        %v2854 = vadd.f32 %v2834, %v2853
        %2855 = vdwg.mxu0
        %2856 = vmatpush.msra.mxu0 %v2338
        %2857 = vmatpush.msra.mxu0 %v2336
        %2858 = vmatpush.msra.mxu0 %v2334
        %2859 = vmatpush.msra.mxu0 %v2332
        %2860 = vmatpush.msra.mxu0 %v2330
        %2861 = vmatpush.msra.mxu0 %v2328
        %2862 = vmatpush.msra.mxu0 %v2326
        %2863 = vmatpush.msra.mxu0 %v2324
        %2864 = vmatpush.msra.mxu0 %v2322
        %2865 = vmatpush.msra.mxu0 %v2320
        %2866 = vmatpush.msra.mxu0 %v2318
        %2867 = vmatpush.msra.mxu0 %v2316
        %2868 = vmatpush.msra.mxu0 %v2314
        %2869 = vmatpush.msra.mxu0 %v2312
        %2870 = vmatpush.msra.mxu0 %v2310
        %2871 = vmatpush.msra.mxu0 %v2308
        %2872 = vmatmul.f32.gmra.mxu0 %v2768
        %v2873 = vpop.f32.mrf.mxu0
        %v2874 = vadd.f32 0.0, %v2873
        %2875 = vdwg.mxu0
        %2876 = vmatpush.msra.mxu0 %v2370
        %2877 = vmatpush.msra.mxu0 %v2368
        %2878 = vmatpush.msra.mxu0 %v2366
        %2879 = vmatpush.msra.mxu0 %v2364
        %2880 = vmatpush.msra.mxu0 %v2362
        %2881 = vmatpush.msra.mxu0 %v2360
        %2882 = vmatpush.msra.mxu0 %v2358
        %2883 = vmatpush.msra.mxu0 %v2356
        %2884 = vmatpush.msra.mxu0 %v2354
        %2885 = vmatpush.msra.mxu0 %v2352
        %2886 = vmatpush.msra.mxu0 %v2350
        %2887 = vmatpush.msra.mxu0 %v2348
        %2888 = vmatpush.msra.mxu0 %v2346
        %2889 = vmatpush.msra.mxu0 %v2344
        %2890 = vmatpush.msra.mxu0 %v2342
        %2891 = vmatpush.msra.mxu0 %v2340
        %2892 = vmatmul.f32.gmra.mxu0 %v2769
        %v2893 = vpop.f32.mrf.mxu0
        %v2894 = vadd.f32 %v2874, %v2893
        %2895 = vdwg.mxu0
        %2896 = vmatpush.msra.mxu0 %v2402
        %2897 = vmatpush.msra.mxu0 %v2400
        %2898 = vmatpush.msra.mxu0 %v2398
        %2899 = vmatpush.msra.mxu0 %v2396
        %2900 = vmatpush.msra.mxu0 %v2394
        %2901 = vmatpush.msra.mxu0 %v2392
        %2902 = vmatpush.msra.mxu0 %v2390
        %2903 = vmatpush.msra.mxu0 %v2388
        %2904 = vmatpush.msra.mxu0 %v2386
        %2905 = vmatpush.msra.mxu0 %v2384
        %2906 = vmatpush.msra.mxu0 %v2382
        %2907 = vmatpush.msra.mxu0 %v2380
        %2908 = vmatpush.msra.mxu0 %v2378
        %2909 = vmatpush.msra.mxu0 %v2376
        %2910 = vmatpush.msra.mxu0 %v2374
        %2911 = vmatpush.msra.mxu0 %v2372
        %2912 = vmatmul.f32.gmra.mxu0 %v2770
        %v2913 = vpop.f32.mrf.mxu0
        %v2914 = vadd.f32 %v2894, %v2913
        %2915 = vdwg.mxu0
        %2916 = vmatpush.msra.mxu0 %v2434
        %2917 = vmatpush.msra.mxu0 %v2432
        %2918 = vmatpush.msra.mxu0 %v2430
        %2919 = vmatpush.msra.mxu0 %v2428
        %2920 = vmatpush.msra.mxu0 %v2426
        %2921 = vmatpush.msra.mxu0 %v2424
        %2922 = vmatpush.msra.mxu0 %v2422
        %2923 = vmatpush.msra.mxu0 %v2420
        %2924 = vmatpush.msra.mxu0 %v2418
        %2925 = vmatpush.msra.mxu0 %v2416
        %2926 = vmatpush.msra.mxu0 %v2414
        %2927 = vmatpush.msra.mxu0 %v2412
        %2928 = vmatpush.msra.mxu0 %v2410
        %2929 = vmatpush.msra.mxu0 %v2408
        %2930 = vmatpush.msra.mxu0 %v2406
        %2931 = vmatpush.msra.mxu0 %v2404
        %2932 = vmatmul.f32.gmra.mxu0 %v2771
        %v2933 = vpop.f32.mrf.mxu0
        %v2934 = vadd.f32 %v2914, %v2933
        %2935 = vdwg.mxu0
        %v2938 = vrot.slane %v2934, 4
        %v2939 = vsel %vm583, %v2854, %v2938
        %v2942 = vunpack.c.l.s4 1935823168
        %v2943 = vunpack.c.0.s8 %v2942
        %v2944 = vperm.slane %v2939, %v2943
        %v2945 = vadd.f32 %v2944, %v2634
        %v2946 = vtanh.pop %v2945
        %v2947 = vmul.f32 %v2655, %v2096
        %v2948 = vsub.f32 1.0, %v2655
        %v2949 = vmul.f32 %v2948, %v2946
        %v2950 = vadd.f32 %v2947, %v2949
        %2951 = vst [vmem:[#allocation2] sm:$0x3] %v2950
        %s2952 = scalar_lea.vmem %s348, 4 [#allocation13]
        %2953 = vst [vmem:[%s2952] sm:$0x3] %v2950
        %v2954 = vld [vmem:[#allocation2] sm:$0x3]
        %s2955 = scalar_lea.vmem %s295, 12 [#allocation7]
        %v2956 = vld [vmem:[%s2955] sm:$0xf]
        %s2957 = sld [smem:[#allocation3 + %s359]]
        %v2958 = vstv %s2957
        %v2959 = vmul.f32 %v2958, %v2954
        %s2960 = sld [smem:[#allocation3 + %s363]]
        %v2961 = vstv %s2960
        %v2962 = vmul.f32 %v2961, %v2954
        %s2963 = sld [smem:[#allocation3 + %s367]]
        %v2964 = vstv %s2963
        %v2965 = vmul.f32 %v2964, %v2954
        %s2966 = sld [smem:[#allocation3 + %s371]]
        %v2967 = vstv %s2966
        %v2968 = vmul.f32 %v2967, %v2954
        %v2969 = vld [vmem:[#allocation10] sm:$0xff]
        %v2970 = vld [vmem:[#allocation10 + $0x8] sm:$0xff]
        %v2971 = vld [vmem:[#allocation10 + $0x10] sm:$0xff]
        %v2972 = vld [vmem:[#allocation10 + $0x18] sm:$0xff]
        %v2973 = vld [vmem:[#allocation10 + $0x20] sm:$0xff]
        %v2974 = vld [vmem:[#allocation10 + $0x28] sm:$0xff]
        %v2975 = vld [vmem:[#allocation10 + $0x30] sm:$0xff]
        %v2976 = vld [vmem:[#allocation10 + $0x38] sm:$0xff]
        %v2977 = vld [vmem:[#allocation10 + $0x40] sm:$0xff]
        %v2978 = vld [vmem:[#allocation10 + $0x48] sm:$0xff]
        %v2979 = vld [vmem:[#allocation10 + $0x50] sm:$0xff]
        %v2980 = vld [vmem:[#allocation10 + $0x58] sm:$0xff]
        %v2981 = vld [vmem:[#allocation10 + $0x60] sm:$0xff]
        %v2982 = vld [vmem:[#allocation10 + $0x68] sm:$0xff]
        %v2983 = vld [vmem:[#allocation10 + $0x70] sm:$0xff]
        %v2984 = vld [vmem:[#allocation10 + $0x78] sm:$0xff]
        %2985 = vmatpush.msra.mxu0 %v2984
        %2986 = vmatpush.msra.mxu0 %v2983
        %2987 = vmatpush.msra.mxu0 %v2982
        %2988 = vmatpush.msra.mxu0 %v2981
        %2989 = vmatpush.msra.mxu0 %v2980
        %2990 = vmatpush.msra.mxu0 %v2979
        %2991 = vmatpush.msra.mxu0 %v2978
        %2992 = vmatpush.msra.mxu0 %v2977
        %2993 = vmatpush.msra.mxu0 %v2976
        %2994 = vmatpush.msra.mxu0 %v2975
        %2995 = vmatpush.msra.mxu0 %v2974
        %2996 = vmatpush.msra.mxu0 %v2973
        %2997 = vmatpush.msra.mxu0 %v2972
        %2998 = vmatpush.msra.mxu0 %v2971
        %2999 = vmatpush.msra.mxu0 %v2970
        %3000 = vmatpush.msra.mxu0 %v2969
        %3001 = vmatmul.f32.gmra.mxu0 %v2954
        %v3002 = vpop.f32.mrf.mxu0
        %v3003 = vadd.f32 0.0, %v3002
        %3004 = vdwg.mxu0
        %s3005 = sld [smem:[#allocation3 + %s411]]
        %v3006 = vstv %s3005
        %v3007 = vmul.f32 %v3006, %v3003
        %v3008 = vadd.f32 %v2959, %v3007
        %s3009 = sld [smem:[#allocation3 + %s416]]
        %v3010 = vstv %s3009
        %v3011 = vmul.f32 %v3010, %v3003
        %v3012 = vadd.f32 %v2962, %v3011
        %s3013 = sld [smem:[#allocation3 + %s421]]
        %v3014 = vstv %s3013
        %v3015 = vmul.f32 %v3014, %v3003
        %v3016 = vadd.f32 %v2965, %v3015
        %s3017 = sld [smem:[#allocation3 + %s426]]
        %v3018 = vstv %s3017
        %v3019 = vmul.f32 %v3018, %v3003
        %v3020 = vadd.f32 %v2968, %v3019
        %3021 = vmatpush.msra.mxu0 %v2984
        %3022 = vmatpush.msra.mxu0 %v2983
        %3023 = vmatpush.msra.mxu0 %v2982
        %3024 = vmatpush.msra.mxu0 %v2981
        %3025 = vmatpush.msra.mxu0 %v2980
        %3026 = vmatpush.msra.mxu0 %v2979
        %3027 = vmatpush.msra.mxu0 %v2978
        %3028 = vmatpush.msra.mxu0 %v2977
        %3029 = vmatpush.msra.mxu0 %v2976
        %3030 = vmatpush.msra.mxu0 %v2975
        %3031 = vmatpush.msra.mxu0 %v2974
        %3032 = vmatpush.msra.mxu0 %v2973
        %3033 = vmatpush.msra.mxu0 %v2972
        %3034 = vmatpush.msra.mxu0 %v2971
        %3035 = vmatpush.msra.mxu0 %v2970
        %3036 = vmatpush.msra.mxu0 %v2969
        %3037 = vmatmul.f32.gmra.mxu0 %v3003
        %v3038 = vpop.f32.mrf.mxu0
        %v3039 = vadd.f32 0.0, %v3038
        %3040 = vdwg.mxu0
        %v3041 = vmul.f32 %v3039, 2.0
        %v3042 = vsub.f32 %v3041, %v2954
        %s3043 = sld [smem:[#allocation3 + %s453]]
        %v3044 = vstv %s3043
        %v3045 = vmul.f32 %v3044, %v3042
        %v3046 = vadd.f32 %v3008, %v3045
        %s3047 = sld [smem:[#allocation3 + %s458]]
        %v3048 = vstv %s3047
        %v3049 = vmul.f32 %v3048, %v3042
        %v3050 = vadd.f32 %v3012, %v3049
        %s3051 = sld [smem:[#allocation3 + %s463]]
        %v3052 = vstv %s3051
        %v3053 = vmul.f32 %v3052, %v3042
        %v3054 = vadd.f32 %v3016, %v3053
        %s3055 = sld [smem:[#allocation3 + %s468]]
        %v3056 = vstv %s3055
        %v3057 = vmul.f32 %v3056, %v3042
        %v3058 = vadd.f32 %v3020, %v3057
        %v3059 = vld [vmem:[%s473] sm:$0xff]
        %v3060 = vld [vmem:[%s473 + $0x8] sm:$0xff]
        %v3061 = vld [vmem:[%s473 + $0x10] sm:$0xff]
        %v3062 = vld [vmem:[%s473 + $0x18] sm:$0xff]
        %v3063 = vld [vmem:[%s473 + $0x20] sm:$0xff]
        %v3064 = vld [vmem:[%s473 + $0x28] sm:$0xff]
        %v3065 = vld [vmem:[%s473 + $0x30] sm:$0xff]
        %v3066 = vld [vmem:[%s473 + $0x38] sm:$0xff]
        %v3067 = vld [vmem:[%s473 + $0x40] sm:$0xff]
        %v3068 = vld [vmem:[%s473 + $0x48] sm:$0xff]
        %v3069 = vld [vmem:[%s473 + $0x50] sm:$0xff]
        %v3070 = vld [vmem:[%s473 + $0x58] sm:$0xff]
        %v3071 = vld [vmem:[%s473 + $0x60] sm:$0xff]
        %v3072 = vld [vmem:[%s473 + $0x68] sm:$0xff]
        %v3073 = vld [vmem:[%s473 + $0x70] sm:$0xff]
        %v3074 = vld [vmem:[%s473 + $0x78] sm:$0xff]
        %3075 = vmatpush.msra.mxu0 %v3074
        %3076 = vmatpush.msra.mxu0 %v3073
        %3077 = vmatpush.msra.mxu0 %v3072
        %3078 = vmatpush.msra.mxu0 %v3071
        %3079 = vmatpush.msra.mxu0 %v3070
        %3080 = vmatpush.msra.mxu0 %v3069
        %3081 = vmatpush.msra.mxu0 %v3068
        %3082 = vmatpush.msra.mxu0 %v3067
        %3083 = vmatpush.msra.mxu0 %v3066
        %3084 = vmatpush.msra.mxu0 %v3065
        %3085 = vmatpush.msra.mxu0 %v3064
        %3086 = vmatpush.msra.mxu0 %v3063
        %3087 = vmatpush.msra.mxu0 %v3062
        %3088 = vmatpush.msra.mxu0 %v3061
        %3089 = vmatpush.msra.mxu0 %v3060
        %3090 = vmatpush.msra.mxu0 %v3059
        %3091 = vmatmul.f32.gmra.mxu0 %v3003
        %v3092 = vpop.f32.mrf.mxu0
        %v3093 = vadd.f32 0.0, %v3092
        %3094 = vdwg.mxu0
        %s3095 = sld [smem:[#allocation3 + %s510]]
        %v3096 = vstv %s3095
        %v3097 = vmul.f32 %v3096, %v3093
        %v3098 = vadd.f32 %v3046, %v3097
        %s3099 = sld [smem:[#allocation3 + %s515]]
        %v3100 = vstv %s3099
        %v3101 = vmul.f32 %v3100, %v3093
        %v3102 = vadd.f32 %v3050, %v3101
        %s3103 = sld [smem:[#allocation3 + %s520]]
        %v3104 = vstv %s3103
        %v3105 = vmul.f32 %v3104, %v3093
        %v3106 = vadd.f32 %v3054, %v3105
        %s3107 = sld [smem:[#allocation3 + %s525]]
        %v3108 = vstv %s3107
        %v3109 = vmul.f32 %v3108, %v3093
        %v3110 = vadd.f32 %v3058, %v3109
        %3111 = vmatpush.msra.mxu0 %v3074
        %3112 = vmatpush.msra.mxu0 %v3073
        %3113 = vmatpush.msra.mxu0 %v3072
        %3114 = vmatpush.msra.mxu0 %v3071
        %3115 = vmatpush.msra.mxu0 %v3070
        %3116 = vmatpush.msra.mxu0 %v3069
        %3117 = vmatpush.msra.mxu0 %v3068
        %3118 = vmatpush.msra.mxu0 %v3067
        %3119 = vmatpush.msra.mxu0 %v3066
        %3120 = vmatpush.msra.mxu0 %v3065
        %3121 = vmatpush.msra.mxu0 %v3064
        %3122 = vmatpush.msra.mxu0 %v3063
        %3123 = vmatpush.msra.mxu0 %v3062
        %3124 = vmatpush.msra.mxu0 %v3061
        %3125 = vmatpush.msra.mxu0 %v3060
        %3126 = vmatpush.msra.mxu0 %v3059
        %3127 = vmatmul.f32.gmra.mxu0 %v3093
        %v3128 = vpop.f32.mrf.mxu0
        %v3129 = vadd.f32 0.0, %v3128
        %3130 = vdwg.mxu0
        %v3131 = vmul.f32 %v3129, 2.0
        %v3132 = vsub.f32 %v3131, %v3003
        %s3133 = sld [smem:[#allocation3 + %s552]]
        %v3134 = vstv %s3133
        %v3135 = vmul.f32 %v3134, %v3132
        %v3136 = vadd.f32 %v3098, %v3135
        %s3137 = sld [smem:[#allocation3 + %s557]]
        %v3138 = vstv %s3137
        %v3139 = vmul.f32 %v3138, %v3132
        %v3140 = vadd.f32 %v3102, %v3139
        %s3141 = sld [smem:[#allocation3 + %s562]]
        %v3142 = vstv %s3141
        %v3143 = vmul.f32 %v3142, %v3132
        %v3144 = vadd.f32 %v3106, %v3143
        %s3145 = sld [smem:[#allocation3 + %s567]]
        %v3146 = vstv %s3145
        %v3147 = vmul.f32 %v3146, %v3132
        %v3148 = vadd.f32 %v3110, %v3147
        %v3150 = vrot.slane %v3140, 6
        %v3153 = vrot.slane %v3144, 4
        %v3156 = vrot.slane %v3148, 2
        %v3158 = vsel %vm581, %v3136, %v3150
        %v3159 = vsel %vm583, %v3158, %v3153
        %v3160 = vsel %vm585, %v3159, %v3156
        %v3162 = vunpack.c.l.s4 1935823168
        %v3163 = vunpack.c.0.s8 %v3162
        %v3164 = vperm.slane %v3160, %v3163
        %v3165 = vld [vmem:[#allocation11] sm:$0xff]
        %v3166 = vld [vmem:[#allocation11 + $0x8] sm:$0xff]
        %v3167 = vld [vmem:[#allocation11 + $0x10] sm:$0xff]
        %v3168 = vld [vmem:[#allocation11 + $0x18] sm:$0xff]
        %v3169 = vld [vmem:[#allocation11 + $0x20] sm:$0xff]
        %v3170 = vld [vmem:[#allocation11 + $0x28] sm:$0xff]
        %v3171 = vld [vmem:[#allocation11 + $0x30] sm:$0xff]
        %v3172 = vld [vmem:[#allocation11 + $0x38] sm:$0xff]
        %v3173 = vld [vmem:[#allocation11 + $0x40] sm:$0xff]
        %v3174 = vld [vmem:[#allocation11 + $0x48] sm:$0xff]
        %v3175 = vld [vmem:[#allocation11 + $0x50] sm:$0xff]
        %v3176 = vld [vmem:[#allocation11 + $0x58] sm:$0xff]
        %v3177 = vld [vmem:[#allocation11 + $0x60] sm:$0xff]
        %v3178 = vld [vmem:[#allocation11 + $0x68] sm:$0xff]
        %v3179 = vld [vmem:[#allocation11 + $0x70] sm:$0xff]
        %v3180 = vld [vmem:[#allocation11 + $0x78] sm:$0xff]
        %v3181 = vld [vmem:[#allocation11 + $0x80] sm:$0xff]
        %v3182 = vld [vmem:[#allocation11 + $0x88] sm:$0xff]
        %v3183 = vld [vmem:[#allocation11 + $0x90] sm:$0xff]
        %v3184 = vld [vmem:[#allocation11 + $0x98] sm:$0xff]
        %v3185 = vld [vmem:[#allocation11 + $0xa0] sm:$0xff]
        %v3186 = vld [vmem:[#allocation11 + $0xa8] sm:$0xff]
        %v3187 = vld [vmem:[#allocation11 + $0xb0] sm:$0xff]
        %v3188 = vld [vmem:[#allocation11 + $0xb8] sm:$0xff]
        %v3189 = vld [vmem:[#allocation11 + $0xc0] sm:$0xff]
        %v3190 = vld [vmem:[#allocation11 + $0xc8] sm:$0xff]
        %v3191 = vld [vmem:[#allocation11 + $0xd0] sm:$0xff]
        %v3192 = vld [vmem:[#allocation11 + $0xd8] sm:$0xff]
        %v3193 = vld [vmem:[#allocation11 + $0xe0] sm:$0xff]
        %v3194 = vld [vmem:[#allocation11 + $0xe8] sm:$0xff]
        %v3195 = vld [vmem:[#allocation11 + $0xf0] sm:$0xff]
        %v3196 = vld [vmem:[#allocation11 + $0xf8] sm:$0xff]
        %v3197 = vld [vmem:[#allocation11 + $0x100] sm:$0xff]
        %v3198 = vld [vmem:[#allocation11 + $0x108] sm:$0xff]
        %v3199 = vld [vmem:[#allocation11 + $0x110] sm:$0xff]
        %v3200 = vld [vmem:[#allocation11 + $0x118] sm:$0xff]
        %v3201 = vld [vmem:[#allocation11 + $0x120] sm:$0xff]
        %v3202 = vld [vmem:[#allocation11 + $0x128] sm:$0xff]
        %v3203 = vld [vmem:[#allocation11 + $0x130] sm:$0xff]
        %v3204 = vld [vmem:[#allocation11 + $0x138] sm:$0xff]
        %v3205 = vld [vmem:[#allocation11 + $0x140] sm:$0xff]
        %v3206 = vld [vmem:[#allocation11 + $0x148] sm:$0xff]
        %v3207 = vld [vmem:[#allocation11 + $0x150] sm:$0xff]
        %v3208 = vld [vmem:[#allocation11 + $0x158] sm:$0xff]
        %v3209 = vld [vmem:[#allocation11 + $0x160] sm:$0xff]
        %v3210 = vld [vmem:[#allocation11 + $0x168] sm:$0xff]
        %v3211 = vld [vmem:[#allocation11 + $0x170] sm:$0xff]
        %v3212 = vld [vmem:[#allocation11 + $0x178] sm:$0xff]
        %v3213 = vld [vmem:[#allocation11 + $0x180] sm:$0xff]
        %v3214 = vld [vmem:[#allocation11 + $0x188] sm:$0xff]
        %v3215 = vld [vmem:[#allocation11 + $0x190] sm:$0xff]
        %v3216 = vld [vmem:[#allocation11 + $0x198] sm:$0xff]
        %v3217 = vld [vmem:[#allocation11 + $0x1a0] sm:$0xff]
        %v3218 = vld [vmem:[#allocation11 + $0x1a8] sm:$0xff]
        %v3219 = vld [vmem:[#allocation11 + $0x1b0] sm:$0xff]
        %v3220 = vld [vmem:[#allocation11 + $0x1b8] sm:$0xff]
        %v3221 = vld [vmem:[#allocation11 + $0x1c0] sm:$0xff]
        %v3222 = vld [vmem:[#allocation11 + $0x1c8] sm:$0xff]
        %v3223 = vld [vmem:[#allocation11 + $0x1d0] sm:$0xff]
        %v3224 = vld [vmem:[#allocation11 + $0x1d8] sm:$0xff]
        %v3225 = vld [vmem:[#allocation11 + $0x1e0] sm:$0xff]
        %v3226 = vld [vmem:[#allocation11 + $0x1e8] sm:$0xff]
        %v3227 = vld [vmem:[#allocation11 + $0x1f0] sm:$0xff]
        %v3228 = vld [vmem:[#allocation11 + $0x1f8] sm:$0xff]
        %v3229 = vld [vmem:[#allocation11 + $0x200] sm:$0xff]
        %v3230 = vld [vmem:[#allocation11 + $0x208] sm:$0xff]
        %v3231 = vld [vmem:[#allocation11 + $0x210] sm:$0xff]
        %v3232 = vld [vmem:[#allocation11 + $0x218] sm:$0xff]
        %v3233 = vld [vmem:[#allocation11 + $0x220] sm:$0xff]
        %v3234 = vld [vmem:[#allocation11 + $0x228] sm:$0xff]
        %v3235 = vld [vmem:[#allocation11 + $0x230] sm:$0xff]
        %v3236 = vld [vmem:[#allocation11 + $0x238] sm:$0xff]
        %v3237 = vld [vmem:[#allocation11 + $0x240] sm:$0xff]
        %v3238 = vld [vmem:[#allocation11 + $0x248] sm:$0xff]
        %v3239 = vld [vmem:[#allocation11 + $0x250] sm:$0xff]
        %v3240 = vld [vmem:[#allocation11 + $0x258] sm:$0xff]
        %v3241 = vld [vmem:[#allocation11 + $0x260] sm:$0xff]
        %v3242 = vld [vmem:[#allocation11 + $0x268] sm:$0xff]
        %v3243 = vld [vmem:[#allocation11 + $0x270] sm:$0xff]
        %v3244 = vld [vmem:[#allocation11 + $0x278] sm:$0xff]
        %v3245 = vld [vmem:[#allocation11 + $0x280] sm:$0xff]
        %v3246 = vld [vmem:[#allocation11 + $0x288] sm:$0xff]
        %v3247 = vld [vmem:[#allocation11 + $0x290] sm:$0xff]
        %v3248 = vld [vmem:[#allocation11 + $0x298] sm:$0xff]
        %v3249 = vld [vmem:[#allocation11 + $0x2a0] sm:$0xff]
        %v3250 = vld [vmem:[#allocation11 + $0x2a8] sm:$0xff]
        %v3251 = vld [vmem:[#allocation11 + $0x2b0] sm:$0xff]
        %v3252 = vld [vmem:[#allocation11 + $0x2b8] sm:$0xff]
        %v3253 = vld [vmem:[#allocation11 + $0x2c0] sm:$0xff]
        %v3254 = vld [vmem:[#allocation11 + $0x2c8] sm:$0xff]
        %v3255 = vld [vmem:[#allocation11 + $0x2d0] sm:$0xff]
        %v3256 = vld [vmem:[#allocation11 + $0x2d8] sm:$0xff]
        %v3257 = vld [vmem:[#allocation11 + $0x2e0] sm:$0xff]
        %v3258 = vld [vmem:[#allocation11 + $0x2e8] sm:$0xff]
        %v3259 = vld [vmem:[#allocation11 + $0x2f0] sm:$0xff]
        %v3260 = vld [vmem:[#allocation11 + $0x2f8] sm:$0xff]
        %v3261 = vld [vmem:[#allocation11 + $0x300] sm:$0xff]
        %v3262 = vld [vmem:[#allocation11 + $0x308] sm:$0xff]
        %v3263 = vld [vmem:[#allocation11 + $0x310] sm:$0xff]
        %v3264 = vld [vmem:[#allocation11 + $0x318] sm:$0xff]
        %v3265 = vld [vmem:[#allocation11 + $0x320] sm:$0xff]
        %v3266 = vld [vmem:[#allocation11 + $0x328] sm:$0xff]
        %v3267 = vld [vmem:[#allocation11 + $0x330] sm:$0xff]
        %v3268 = vld [vmem:[#allocation11 + $0x338] sm:$0xff]
        %v3269 = vld [vmem:[#allocation11 + $0x340] sm:$0xff]
        %v3270 = vld [vmem:[#allocation11 + $0x348] sm:$0xff]
        %v3271 = vld [vmem:[#allocation11 + $0x350] sm:$0xff]
        %v3272 = vld [vmem:[#allocation11 + $0x358] sm:$0xff]
        %v3273 = vld [vmem:[#allocation11 + $0x360] sm:$0xff]
        %v3274 = vld [vmem:[#allocation11 + $0x368] sm:$0xff]
        %v3275 = vld [vmem:[#allocation11 + $0x370] sm:$0xff]
        %v3276 = vld [vmem:[#allocation11 + $0x378] sm:$0xff]
        %v3277 = vld [vmem:[#allocation11 + $0x380] sm:$0xff]
        %v3278 = vld [vmem:[#allocation11 + $0x388] sm:$0xff]
        %v3279 = vld [vmem:[#allocation11 + $0x390] sm:$0xff]
        %v3280 = vld [vmem:[#allocation11 + $0x398] sm:$0xff]
        %v3281 = vld [vmem:[#allocation11 + $0x3a0] sm:$0xff]
        %v3282 = vld [vmem:[#allocation11 + $0x3a8] sm:$0xff]
        %v3283 = vld [vmem:[#allocation11 + $0x3b0] sm:$0xff]
        %v3284 = vld [vmem:[#allocation11 + $0x3b8] sm:$0xff]
        %v3285 = vld [vmem:[#allocation11 + $0x3c0] sm:$0xff]
        %v3286 = vld [vmem:[#allocation11 + $0x3c8] sm:$0xff]
        %v3287 = vld [vmem:[#allocation11 + $0x3d0] sm:$0xff]
        %v3288 = vld [vmem:[#allocation11 + $0x3d8] sm:$0xff]
        %v3289 = vld [vmem:[#allocation11 + $0x3e0] sm:$0xff]
        %v3290 = vld [vmem:[#allocation11 + $0x3e8] sm:$0xff]
        %v3291 = vld [vmem:[#allocation11 + $0x3f0] sm:$0xff]
        %v3292 = vld [vmem:[#allocation11 + $0x3f8] sm:$0xff]
        %3294 = vst [vmem:[#allocation1] ss:$4 sm:$0xff] %v3164
        %v3295 = vld.sshfl [vmem:[#allocation1] sm:$0xff pattern:$0x73625140]
        %v3296 = vld.sshfl [vmem:[#allocation1 + $0x8] sm:$0xff pattern:$0x73625140]
        %v3297 = vld.sshfl [vmem:[#allocation1 + $0x10] sm:$0xff pattern:$0x73625140]
        %v3298 = vld.sshfl [vmem:[#allocation1 + $0x18] sm:$0xff pattern:$0x73625140]
        %3303 = vmatpush.msra.mxu0 %v3195
        %3304 = vmatpush.msra.mxu0 %v3193
        %3305 = vmatpush.msra.mxu0 %v3191
        %3306 = vmatpush.msra.mxu0 %v3189
        %3307 = vmatpush.msra.mxu0 %v3187
        %3308 = vmatpush.msra.mxu0 %v3185
        %3309 = vmatpush.msra.mxu0 %v3183
        %3310 = vmatpush.msra.mxu0 %v3181
        %3311 = vmatpush.msra.mxu0 %v3179
        %3312 = vmatpush.msra.mxu0 %v3177
        %3313 = vmatpush.msra.mxu0 %v3175
        %3314 = vmatpush.msra.mxu0 %v3173
        %3315 = vmatpush.msra.mxu0 %v3171
        %3316 = vmatpush.msra.mxu0 %v3169
        %3317 = vmatpush.msra.mxu0 %v3167
        %3318 = vmatpush.msra.mxu0 %v3165
        %3319 = vmatmul.f32.gmra.mxu0 %v3295
        %v3320 = vpop.f32.mrf.mxu0
        %v3321 = vadd.f32 0.0, %v3320
        %3322 = vdwg.mxu0
        %3323 = vmatpush.msra.mxu0 %v3227
        %3324 = vmatpush.msra.mxu0 %v3225
        %3325 = vmatpush.msra.mxu0 %v3223
        %3326 = vmatpush.msra.mxu0 %v3221
        %3327 = vmatpush.msra.mxu0 %v3219
        %3328 = vmatpush.msra.mxu0 %v3217
        %3329 = vmatpush.msra.mxu0 %v3215
        %3330 = vmatpush.msra.mxu0 %v3213
        %3331 = vmatpush.msra.mxu0 %v3211
        %3332 = vmatpush.msra.mxu0 %v3209
        %3333 = vmatpush.msra.mxu0 %v3207
        %3334 = vmatpush.msra.mxu0 %v3205
        %3335 = vmatpush.msra.mxu0 %v3203
        %3336 = vmatpush.msra.mxu0 %v3201
        %3337 = vmatpush.msra.mxu0 %v3199
        %3338 = vmatpush.msra.mxu0 %v3197
        %3339 = vmatmul.f32.gmra.mxu0 %v3296
        %v3340 = vpop.f32.mrf.mxu0
        %v3341 = vadd.f32 %v3321, %v3340
        %3342 = vdwg.mxu0
        %3343 = vmatpush.msra.mxu0 %v3259
        %3344 = vmatpush.msra.mxu0 %v3257
        %3345 = vmatpush.msra.mxu0 %v3255
        %3346 = vmatpush.msra.mxu0 %v3253
        %3347 = vmatpush.msra.mxu0 %v3251
        %3348 = vmatpush.msra.mxu0 %v3249
        %3349 = vmatpush.msra.mxu0 %v3247
        %3350 = vmatpush.msra.mxu0 %v3245
        %3351 = vmatpush.msra.mxu0 %v3243
        %3352 = vmatpush.msra.mxu0 %v3241
        %3353 = vmatpush.msra.mxu0 %v3239
        %3354 = vmatpush.msra.mxu0 %v3237
        %3355 = vmatpush.msra.mxu0 %v3235
        %3356 = vmatpush.msra.mxu0 %v3233
        %3357 = vmatpush.msra.mxu0 %v3231
        %3358 = vmatpush.msra.mxu0 %v3229
        %3359 = vmatmul.f32.gmra.mxu0 %v3297
        %v3360 = vpop.f32.mrf.mxu0
        %v3361 = vadd.f32 %v3341, %v3360
        %3362 = vdwg.mxu0
        %3363 = vmatpush.msra.mxu0 %v3291
        %3364 = vmatpush.msra.mxu0 %v3289
        %3365 = vmatpush.msra.mxu0 %v3287
        %3366 = vmatpush.msra.mxu0 %v3285
        %3367 = vmatpush.msra.mxu0 %v3283
        %3368 = vmatpush.msra.mxu0 %v3281
        %3369 = vmatpush.msra.mxu0 %v3279
        %3370 = vmatpush.msra.mxu0 %v3277
        %3371 = vmatpush.msra.mxu0 %v3275
        %3372 = vmatpush.msra.mxu0 %v3273
        %3373 = vmatpush.msra.mxu0 %v3271
        %3374 = vmatpush.msra.mxu0 %v3269
        %3375 = vmatpush.msra.mxu0 %v3267
        %3376 = vmatpush.msra.mxu0 %v3265
        %3377 = vmatpush.msra.mxu0 %v3263
        %3378 = vmatpush.msra.mxu0 %v3261
        %3379 = vmatmul.f32.gmra.mxu0 %v3298
        %v3380 = vpop.f32.mrf.mxu0
        %v3381 = vadd.f32 %v3361, %v3380
        %3382 = vdwg.mxu0
        %3383 = vmatpush.msra.mxu0 %v3196
        %3384 = vmatpush.msra.mxu0 %v3194
        %3385 = vmatpush.msra.mxu0 %v3192
        %3386 = vmatpush.msra.mxu0 %v3190
        %3387 = vmatpush.msra.mxu0 %v3188
        %3388 = vmatpush.msra.mxu0 %v3186
        %3389 = vmatpush.msra.mxu0 %v3184
        %3390 = vmatpush.msra.mxu0 %v3182
        %3391 = vmatpush.msra.mxu0 %v3180
        %3392 = vmatpush.msra.mxu0 %v3178
        %3393 = vmatpush.msra.mxu0 %v3176
        %3394 = vmatpush.msra.mxu0 %v3174
        %3395 = vmatpush.msra.mxu0 %v3172
        %3396 = vmatpush.msra.mxu0 %v3170
        %3397 = vmatpush.msra.mxu0 %v3168
        %3398 = vmatpush.msra.mxu0 %v3166
        %3399 = vmatmul.f32.gmra.mxu0 %v3295
        %v3400 = vpop.f32.mrf.mxu0
        %v3401 = vadd.f32 0.0, %v3400
        %3402 = vdwg.mxu0
        %3403 = vmatpush.msra.mxu0 %v3228
        %3404 = vmatpush.msra.mxu0 %v3226
        %3405 = vmatpush.msra.mxu0 %v3224
        %3406 = vmatpush.msra.mxu0 %v3222
        %3407 = vmatpush.msra.mxu0 %v3220
        %3408 = vmatpush.msra.mxu0 %v3218
        %3409 = vmatpush.msra.mxu0 %v3216
        %3410 = vmatpush.msra.mxu0 %v3214
        %3411 = vmatpush.msra.mxu0 %v3212
        %3412 = vmatpush.msra.mxu0 %v3210
        %3413 = vmatpush.msra.mxu0 %v3208
        %3414 = vmatpush.msra.mxu0 %v3206
        %3415 = vmatpush.msra.mxu0 %v3204
        %3416 = vmatpush.msra.mxu0 %v3202
        %3417 = vmatpush.msra.mxu0 %v3200
        %3418 = vmatpush.msra.mxu0 %v3198
        %3419 = vmatmul.f32.gmra.mxu0 %v3296
        %v3420 = vpop.f32.mrf.mxu0
        %v3421 = vadd.f32 %v3401, %v3420
        %3422 = vdwg.mxu0
        %3423 = vmatpush.msra.mxu0 %v3260
        %3424 = vmatpush.msra.mxu0 %v3258
        %3425 = vmatpush.msra.mxu0 %v3256
        %3426 = vmatpush.msra.mxu0 %v3254
        %3427 = vmatpush.msra.mxu0 %v3252
        %3428 = vmatpush.msra.mxu0 %v3250
        %3429 = vmatpush.msra.mxu0 %v3248
        %3430 = vmatpush.msra.mxu0 %v3246
        %3431 = vmatpush.msra.mxu0 %v3244
        %3432 = vmatpush.msra.mxu0 %v3242
        %3433 = vmatpush.msra.mxu0 %v3240
        %3434 = vmatpush.msra.mxu0 %v3238
        %3435 = vmatpush.msra.mxu0 %v3236
        %3436 = vmatpush.msra.mxu0 %v3234
        %3437 = vmatpush.msra.mxu0 %v3232
        %3438 = vmatpush.msra.mxu0 %v3230
        %3439 = vmatmul.f32.gmra.mxu0 %v3297
        %v3440 = vpop.f32.mrf.mxu0
        %v3441 = vadd.f32 %v3421, %v3440
        %3442 = vdwg.mxu0
        %3443 = vmatpush.msra.mxu0 %v3292
        %3444 = vmatpush.msra.mxu0 %v3290
        %3445 = vmatpush.msra.mxu0 %v3288
        %3446 = vmatpush.msra.mxu0 %v3286
        %3447 = vmatpush.msra.mxu0 %v3284
        %3448 = vmatpush.msra.mxu0 %v3282
        %3449 = vmatpush.msra.mxu0 %v3280
        %3450 = vmatpush.msra.mxu0 %v3278
        %3451 = vmatpush.msra.mxu0 %v3276
        %3452 = vmatpush.msra.mxu0 %v3274
        %3453 = vmatpush.msra.mxu0 %v3272
        %3454 = vmatpush.msra.mxu0 %v3270
        %3455 = vmatpush.msra.mxu0 %v3268
        %3456 = vmatpush.msra.mxu0 %v3266
        %3457 = vmatpush.msra.mxu0 %v3264
        %3458 = vmatpush.msra.mxu0 %v3262
        %3459 = vmatmul.f32.gmra.mxu0 %v3298
        %v3460 = vpop.f32.mrf.mxu0
        %v3461 = vadd.f32 %v3441, %v3460
        %3462 = vdwg.mxu0
        %v3463 = vrot.slane %v3461, 4
        %v3464 = vsel %vm890, %v3463, %v3381
        %v3466 = vunpack.c.l.s4 1934713408
        %v3467 = vunpack.c.0.s8 %v3466
        %v3468 = vperm.slane %v3464, %v3467
        %v3469 = vrot.slane %v3468, 4
        %v3470 = vsel %vm890, 0.0, %v3469
        %v3471 = vadd.f32 %v3468, %v2956
        %v3472 = vxor.u32 %v3471, 2147483648
        %v3473 = vmul.f32 %v3472, 1.442695
        %v3474 = vpow.pop %v3473
        %v3475 = vadd.f32 %v3474, 1.0
        %v3476 = vrcp.pop %v3475
        %v3477 = vmul.f32 %v3475, %v3476
        %v3478 = vsub.f32 1.0, %v3477
        %v3479 = vmul.f32 %v3476, %v3478
        %v3480 = vadd.f32 %v3476, %v3479
        %vm3481 = vweird.f32 %v3475
        %vm3482 = vweird.f32 %v3476
        %vm3483 = vmor %vm3481, %vm3482
        %v3484 = vsel %vm3483, %v3476, %v3480
        %v3485 = vand.u32 2147483647, %v3475
        %vm3486 = vcmp.eq.f32.partialorder %v3485, 8.507059e+37
        %v3487 = vand.u32 %v3475, 2147483648
        %v3488 = vor.u32 1.1754944e-38, %v3487
        %v3489 = vsel %vm3486, %v3488, %v3484
        %v3490 = vmul.f32 1.0, %v3489
        %v3492 = vrot.slane %v2956, 2
        %v3494 = vadd.f32 %v3470, %v3492
        %v3495 = vxor.u32 %v3494, 2147483648
        %v3496 = vmul.f32 %v3495, 1.442695
        %v3497 = vpow.pop %v3496
        %v3498 = vadd.f32 %v3497, 1.0
        %v3499 = vrcp.pop %v3498
        %v3500 = vmul.f32 %v3498, %v3499
        %v3501 = vsub.f32 1.0, %v3500
        %v3502 = vmul.f32 %v3499, %v3501
        %v3503 = vadd.f32 %v3499, %v3502
        %vm3504 = vweird.f32 %v3498
        %vm3505 = vweird.f32 %v3499
        %vm3506 = vmor %vm3504, %vm3505
        %v3507 = vsel %vm3506, %v3499, %v3503
        %v3508 = vand.u32 2147483647, %v3498
        %vm3509 = vcmp.eq.f32.partialorder %v3508, 8.507059e+37
        %v3510 = vand.u32 %v3498, 2147483648
        %v3511 = vor.u32 1.1754944e-38, %v3510
        %v3512 = vsel %vm3509, %v3511, %v3507
        %v3513 = vmul.f32 1.0, %v3512
        %v3514 = vmul.f32 %v3490, %v2954
        %v3515 = vmul.f32 %v2964, %v3514
        %v3516 = vmul.f32 %v2967, %v3514
        %3517 = vmatpush.msra.mxu0 %v2984
        %3518 = vmatpush.msra.mxu0 %v2983
        %3519 = vmatpush.msra.mxu0 %v2982
        %3520 = vmatpush.msra.mxu0 %v2981
        %3521 = vmatpush.msra.mxu0 %v2980
        %3522 = vmatpush.msra.mxu0 %v2979
        %3523 = vmatpush.msra.mxu0 %v2978
        %3524 = vmatpush.msra.mxu0 %v2977
        %3525 = vmatpush.msra.mxu0 %v2976
        %3526 = vmatpush.msra.mxu0 %v2975
        %3527 = vmatpush.msra.mxu0 %v2974
        %3528 = vmatpush.msra.mxu0 %v2973
        %3529 = vmatpush.msra.mxu0 %v2972
        %3530 = vmatpush.msra.mxu0 %v2971
        %3531 = vmatpush.msra.mxu0 %v2970
        %3532 = vmatpush.msra.mxu0 %v2969
        %3533 = vmatmul.f32.gmra.mxu0 %v3514
        %v3534 = vpop.f32.mrf.mxu0
        %v3535 = vadd.f32 0.0, %v3534
        %3536 = vdwg.mxu0
        %v3537 = vmul.f32 %v3014, %v3535
        %v3538 = vadd.f32 %v3515, %v3537
        %v3539 = vmul.f32 %v3018, %v3535
        %v3540 = vadd.f32 %v3516, %v3539
        %3541 = vmatpush.msra.mxu0 %v2984
        %3542 = vmatpush.msra.mxu0 %v2983
        %3543 = vmatpush.msra.mxu0 %v2982
        %3544 = vmatpush.msra.mxu0 %v2981
        %3545 = vmatpush.msra.mxu0 %v2980
        %3546 = vmatpush.msra.mxu0 %v2979
        %3547 = vmatpush.msra.mxu0 %v2978
        %3548 = vmatpush.msra.mxu0 %v2977
        %3549 = vmatpush.msra.mxu0 %v2976
        %3550 = vmatpush.msra.mxu0 %v2975
        %3551 = vmatpush.msra.mxu0 %v2974
        %3552 = vmatpush.msra.mxu0 %v2973
        %3553 = vmatpush.msra.mxu0 %v2972
        %3554 = vmatpush.msra.mxu0 %v2971
        %3555 = vmatpush.msra.mxu0 %v2970
        %3556 = vmatpush.msra.mxu0 %v2969
        %3557 = vmatmul.f32.gmra.mxu0 %v3535
        %v3558 = vpop.f32.mrf.mxu0
        %v3559 = vadd.f32 0.0, %v3558
        %3560 = vdwg.mxu0
        %v3561 = vmul.f32 %v3559, 2.0
        %v3562 = vsub.f32 %v3561, %v3514
        %v3563 = vmul.f32 %v3052, %v3562
        %v3564 = vadd.f32 %v3538, %v3563
        %v3565 = vmul.f32 %v3056, %v3562
        %v3566 = vadd.f32 %v3540, %v3565
        %3567 = vmatpush.msra.mxu0 %v3074
        %3568 = vmatpush.msra.mxu0 %v3073
        %3569 = vmatpush.msra.mxu0 %v3072
        %3570 = vmatpush.msra.mxu0 %v3071
        %3571 = vmatpush.msra.mxu0 %v3070
        %3572 = vmatpush.msra.mxu0 %v3069
        %3573 = vmatpush.msra.mxu0 %v3068
        %3574 = vmatpush.msra.mxu0 %v3067
        %3575 = vmatpush.msra.mxu0 %v3066
        %3576 = vmatpush.msra.mxu0 %v3065
        %3577 = vmatpush.msra.mxu0 %v3064
        %3578 = vmatpush.msra.mxu0 %v3063
        %3579 = vmatpush.msra.mxu0 %v3062
        %3580 = vmatpush.msra.mxu0 %v3061
        %3581 = vmatpush.msra.mxu0 %v3060
        %3582 = vmatpush.msra.mxu0 %v3059
        %3583 = vmatmul.f32.gmra.mxu0 %v3535
        %v3584 = vpop.f32.mrf.mxu0
        %v3585 = vadd.f32 0.0, %v3584
        %3586 = vdwg.mxu0
        %v3587 = vmul.f32 %v3104, %v3585
        %v3588 = vadd.f32 %v3564, %v3587
        %v3589 = vmul.f32 %v3108, %v3585
        %v3590 = vadd.f32 %v3566, %v3589
        %3591 = vmatpush.msra.mxu0 %v3074
        %3592 = vmatpush.msra.mxu0 %v3073
        %3593 = vmatpush.msra.mxu0 %v3072
        %3594 = vmatpush.msra.mxu0 %v3071
        %3595 = vmatpush.msra.mxu0 %v3070
        %3596 = vmatpush.msra.mxu0 %v3069
        %3597 = vmatpush.msra.mxu0 %v3068
        %3598 = vmatpush.msra.mxu0 %v3067
        %3599 = vmatpush.msra.mxu0 %v3066
        %3600 = vmatpush.msra.mxu0 %v3065
        %3601 = vmatpush.msra.mxu0 %v3064
        %3602 = vmatpush.msra.mxu0 %v3063
        %3603 = vmatpush.msra.mxu0 %v3062
        %3604 = vmatpush.msra.mxu0 %v3061
        %3605 = vmatpush.msra.mxu0 %v3060
        %3606 = vmatpush.msra.mxu0 %v3059
        %3607 = vmatmul.f32.gmra.mxu0 %v3585
        %v3608 = vpop.f32.mrf.mxu0
        %v3609 = vadd.f32 0.0, %v3608
        %3610 = vdwg.mxu0
        %v3611 = vmul.f32 %v3609, 2.0
        %v3612 = vsub.f32 %v3611, %v3535
        %v3613 = vmul.f32 %v3142, %v3612
        %v3614 = vadd.f32 %v3588, %v3613
        %v3615 = vmul.f32 %v3146, %v3612
        %v3616 = vadd.f32 %v3590, %v3615
        %v3618 = vrot.slane %v3616, 6
        %v3620 = vsel %vm581, %v3614, %v3618
        %v3622 = vunpack.c.l.s4 1935823168
        %v3623 = vunpack.c.0.s8 %v3622
        %v3624 = vperm.slane %v3620, %v3623
        %v3626 = vperm.slane %v3624, 0
        %v3627 = vperm.slane %v3624, 2
        %v3628 = vperm.slane %v3624, 4
        %v3629 = vperm.slane %v3624, 6
        %3634 = vmatpush.msra.mxu0 %v3195
        %3635 = vmatpush.msra.mxu0 %v3193
        %3636 = vmatpush.msra.mxu0 %v3191
        %3637 = vmatpush.msra.mxu0 %v3189
        %3638 = vmatpush.msra.mxu0 %v3187
        %3639 = vmatpush.msra.mxu0 %v3185
        %3640 = vmatpush.msra.mxu0 %v3183
        %3641 = vmatpush.msra.mxu0 %v3181
        %3642 = vmatpush.msra.mxu0 %v3179
        %3643 = vmatpush.msra.mxu0 %v3177
        %3644 = vmatpush.msra.mxu0 %v3175
        %3645 = vmatpush.msra.mxu0 %v3173
        %3646 = vmatpush.msra.mxu0 %v3171
        %3647 = vmatpush.msra.mxu0 %v3169
        %3648 = vmatpush.msra.mxu0 %v3167
        %3649 = vmatpush.msra.mxu0 %v3165
        %3650 = vmatmul.f32.gmra.mxu0 %v3626
        %v3651 = vpop.f32.mrf.mxu0
        %v3652 = vadd.f32 0.0, %v3651
        %3653 = vdwg.mxu0
        %3654 = vmatpush.msra.mxu0 %v3227
        %3655 = vmatpush.msra.mxu0 %v3225
        %3656 = vmatpush.msra.mxu0 %v3223
        %3657 = vmatpush.msra.mxu0 %v3221
        %3658 = vmatpush.msra.mxu0 %v3219
        %3659 = vmatpush.msra.mxu0 %v3217
        %3660 = vmatpush.msra.mxu0 %v3215
        %3661 = vmatpush.msra.mxu0 %v3213
        %3662 = vmatpush.msra.mxu0 %v3211
        %3663 = vmatpush.msra.mxu0 %v3209
        %3664 = vmatpush.msra.mxu0 %v3207
        %3665 = vmatpush.msra.mxu0 %v3205
        %3666 = vmatpush.msra.mxu0 %v3203
        %3667 = vmatpush.msra.mxu0 %v3201
        %3668 = vmatpush.msra.mxu0 %v3199
        %3669 = vmatpush.msra.mxu0 %v3197
        %3670 = vmatmul.f32.gmra.mxu0 %v3627
        %v3671 = vpop.f32.mrf.mxu0
        %v3672 = vadd.f32 %v3652, %v3671
        %3673 = vdwg.mxu0
        %3674 = vmatpush.msra.mxu0 %v3259
        %3675 = vmatpush.msra.mxu0 %v3257
        %3676 = vmatpush.msra.mxu0 %v3255
        %3677 = vmatpush.msra.mxu0 %v3253
        %3678 = vmatpush.msra.mxu0 %v3251
        %3679 = vmatpush.msra.mxu0 %v3249
        %3680 = vmatpush.msra.mxu0 %v3247
        %3681 = vmatpush.msra.mxu0 %v3245
        %3682 = vmatpush.msra.mxu0 %v3243
        %3683 = vmatpush.msra.mxu0 %v3241
        %3684 = vmatpush.msra.mxu0 %v3239
        %3685 = vmatpush.msra.mxu0 %v3237
        %3686 = vmatpush.msra.mxu0 %v3235
        %3687 = vmatpush.msra.mxu0 %v3233
        %3688 = vmatpush.msra.mxu0 %v3231
        %3689 = vmatpush.msra.mxu0 %v3229
        %3690 = vmatmul.f32.gmra.mxu0 %v3628
        %v3691 = vpop.f32.mrf.mxu0
        %v3692 = vadd.f32 %v3672, %v3691
        %3693 = vdwg.mxu0
        %3694 = vmatpush.msra.mxu0 %v3291
        %3695 = vmatpush.msra.mxu0 %v3289
        %3696 = vmatpush.msra.mxu0 %v3287
        %3697 = vmatpush.msra.mxu0 %v3285
        %3698 = vmatpush.msra.mxu0 %v3283
        %3699 = vmatpush.msra.mxu0 %v3281
        %3700 = vmatpush.msra.mxu0 %v3279
        %3701 = vmatpush.msra.mxu0 %v3277
        %3702 = vmatpush.msra.mxu0 %v3275
        %3703 = vmatpush.msra.mxu0 %v3273
        %3704 = vmatpush.msra.mxu0 %v3271
        %3705 = vmatpush.msra.mxu0 %v3269
        %3706 = vmatpush.msra.mxu0 %v3267
        %3707 = vmatpush.msra.mxu0 %v3265
        %3708 = vmatpush.msra.mxu0 %v3263
        %3709 = vmatpush.msra.mxu0 %v3261
        %3710 = vmatmul.f32.gmra.mxu0 %v3629
        %v3711 = vpop.f32.mrf.mxu0
        %v3712 = vadd.f32 %v3692, %v3711
        %3713 = vdwg.mxu0
        %3714 = vmatpush.msra.mxu0 %v3196
        %3715 = vmatpush.msra.mxu0 %v3194
        %3716 = vmatpush.msra.mxu0 %v3192
        %3717 = vmatpush.msra.mxu0 %v3190
        %3718 = vmatpush.msra.mxu0 %v3188
        %3719 = vmatpush.msra.mxu0 %v3186
        %3720 = vmatpush.msra.mxu0 %v3184
        %3721 = vmatpush.msra.mxu0 %v3182
        %3722 = vmatpush.msra.mxu0 %v3180
        %3723 = vmatpush.msra.mxu0 %v3178
        %3724 = vmatpush.msra.mxu0 %v3176
        %3725 = vmatpush.msra.mxu0 %v3174
        %3726 = vmatpush.msra.mxu0 %v3172
        %3727 = vmatpush.msra.mxu0 %v3170
        %3728 = vmatpush.msra.mxu0 %v3168
        %3729 = vmatpush.msra.mxu0 %v3166
        %3730 = vmatmul.f32.gmra.mxu0 %v3626
        %v3731 = vpop.f32.mrf.mxu0
        %v3732 = vadd.f32 0.0, %v3731
        %3733 = vdwg.mxu0
        %3734 = vmatpush.msra.mxu0 %v3228
        %3735 = vmatpush.msra.mxu0 %v3226
        %3736 = vmatpush.msra.mxu0 %v3224
        %3737 = vmatpush.msra.mxu0 %v3222
        %3738 = vmatpush.msra.mxu0 %v3220
        %3739 = vmatpush.msra.mxu0 %v3218
        %3740 = vmatpush.msra.mxu0 %v3216
        %3741 = vmatpush.msra.mxu0 %v3214
        %3742 = vmatpush.msra.mxu0 %v3212
        %3743 = vmatpush.msra.mxu0 %v3210
        %3744 = vmatpush.msra.mxu0 %v3208
        %3745 = vmatpush.msra.mxu0 %v3206
        %3746 = vmatpush.msra.mxu0 %v3204
        %3747 = vmatpush.msra.mxu0 %v3202
        %3748 = vmatpush.msra.mxu0 %v3200
        %3749 = vmatpush.msra.mxu0 %v3198
        %3750 = vmatmul.f32.gmra.mxu0 %v3627
        %v3751 = vpop.f32.mrf.mxu0
        %v3752 = vadd.f32 %v3732, %v3751
        %3753 = vdwg.mxu0
        %3754 = vmatpush.msra.mxu0 %v3260
        %3755 = vmatpush.msra.mxu0 %v3258
        %3756 = vmatpush.msra.mxu0 %v3256
        %3757 = vmatpush.msra.mxu0 %v3254
        %3758 = vmatpush.msra.mxu0 %v3252
        %3759 = vmatpush.msra.mxu0 %v3250
        %3760 = vmatpush.msra.mxu0 %v3248
        %3761 = vmatpush.msra.mxu0 %v3246
        %3762 = vmatpush.msra.mxu0 %v3244
        %3763 = vmatpush.msra.mxu0 %v3242
        %3764 = vmatpush.msra.mxu0 %v3240
        %3765 = vmatpush.msra.mxu0 %v3238
        %3766 = vmatpush.msra.mxu0 %v3236
        %3767 = vmatpush.msra.mxu0 %v3234
        %3768 = vmatpush.msra.mxu0 %v3232
        %3769 = vmatpush.msra.mxu0 %v3230
        %3770 = vmatmul.f32.gmra.mxu0 %v3628
        %v3771 = vpop.f32.mrf.mxu0
        %v3772 = vadd.f32 %v3752, %v3771
        %3773 = vdwg.mxu0
        %3774 = vmatpush.msra.mxu0 %v3292
        %3775 = vmatpush.msra.mxu0 %v3290
        %3776 = vmatpush.msra.mxu0 %v3288
        %3777 = vmatpush.msra.mxu0 %v3286
        %3778 = vmatpush.msra.mxu0 %v3284
        %3779 = vmatpush.msra.mxu0 %v3282
        %3780 = vmatpush.msra.mxu0 %v3280
        %3781 = vmatpush.msra.mxu0 %v3278
        %3782 = vmatpush.msra.mxu0 %v3276
        %3783 = vmatpush.msra.mxu0 %v3274
        %3784 = vmatpush.msra.mxu0 %v3272
        %3785 = vmatpush.msra.mxu0 %v3270
        %3786 = vmatpush.msra.mxu0 %v3268
        %3787 = vmatpush.msra.mxu0 %v3266
        %3788 = vmatpush.msra.mxu0 %v3264
        %3789 = vmatpush.msra.mxu0 %v3262
        %3790 = vmatmul.f32.gmra.mxu0 %v3629
        %v3791 = vpop.f32.mrf.mxu0
        %v3792 = vadd.f32 %v3772, %v3791
        %3793 = vdwg.mxu0
        %v3796 = vrot.slane %v3792, 4
        %v3797 = vsel %vm583, %v3712, %v3796
        %v3800 = vunpack.c.l.s4 1935823168
        %v3801 = vunpack.c.0.s8 %v3800
        %v3802 = vperm.slane %v3797, %v3801
        %v3803 = vadd.f32 %v3802, %v3492
        %v3804 = vtanh.pop %v3803
        %v3805 = vmul.f32 %v3513, %v2954
        %v3806 = vsub.f32 1.0, %v3513
        %v3807 = vmul.f32 %v3806, %v3804
        %v3808 = vadd.f32 %v3805, %v3807
        %3809 = vst [vmem:[#allocation2] sm:$0x3] %v3808
        %s3810 = scalar_lea.vmem %s348, 6 [#allocation13]
        %3811 = vst [vmem:[%s3810] sm:$0x3] %v3808
        %s3812 = sand.u32 %s166, 1
        %s3813 = scalar_lea.sflag [#allocation5], %s3812
        %s3814 = sand.u32 %s166, 1
        %s3815 = smul.addr %s3814, 8
        %s3816 = scalar_lea.vmem [#allocation13], %s3815
        // Predicated region
        $region65: #{tpu_custom_call.1} parent=39 // pred_check
          %p3817 = pneg %p176
        $region66: #{tpu_custom_call.1} parent=39 // pred_check_branch
          %3819 = sbr.rel (%p3817) target = $region68
        $region67: #{tpu_custom_call.1} parent=39 // pred_region
          %s3820 = smul.u32 4, %s32
          %3822 = vsyncadd %s3813, 0
          %s3823 = smul.addr %s31, 8
          %s3824 = sadd.s32 %s3820, %s3823
          %s3825 = smul.addr %s3824, 2
          %s3826 = scalar_lea.hbm %s5, %s3825
          %s3827 = sshll.u32 %s3816, 4
          %s3828 = int_to_ptr.vmem [resolvable:$true] %s3827
          %s3829 = sshll.u32 %s3826, 4
          %s3830 = int_to_ptr.hbm [resolvable:$true] %s3829
          %3835 = dma.vmem_to_hbm [thread:$0]  %s3828, 128, %s3830, %s3813, 32, 32, 2
        $region68: #{tpu_custom_call.1} parent=39 // pred_fallthru
          _
      $region40: #{tpu_custom_call.1} parent=5 // pred_fallthru
        _
      %p3836 = scmp.le.s32.totalorder 2, %s22
      // Predicated region
      $region69: #{tpu_custom_call.1} parent=5 // pred_check
        %p3837 = pneg %p3836
      $region70: #{tpu_custom_call.1} parent=5 // pred_check_branch
        %3839 = sbr.rel (%p3837) target = $region72
      $region71: #{tpu_custom_call.1} parent=5 // pred_region
        %s3840 = ssub.s32 %s22, 2
        // Predicated region
        $region73: #{tpu_custom_call.1} parent=71 // pred_check
          %p3841 = pneg %p182
        $region74: #{tpu_custom_call.1} parent=71 // pred_check_branch
          %3843 = sbr.rel (%p3841) target = $region76
        $region75: #{tpu_custom_call.1} parent=71 // pred_region
          %s3844 = sand.u32 %s167, 1
          %s3845 = scalar_lea.sflag [#allocation5], %s3844
          %s3846 = sand.u32 %s167, 1
          %s3847 = smul.addr %s3846, 8
          %s3848 = scalar_lea.vmem [#allocation13], %s3847
          %3850 = dma.done %s3845, 128
        $region76: #{tpu_custom_call.1} parent=71 // pred_fallthru
          _
      $region72: #{tpu_custom_call.1} parent=5 // pred_fallthru
        _
    $region6: #{tpu_custom_call.1} parent=1 // loop_footer
      %s26 = sadd.s32 1, %s22
    $region7: #{tpu_custom_call.1} parent=1 // loop_footer_branch
      %21 = sbr.rel target = $region3
    $region8: #{tpu_custom_call.1} parent=1 // loop_exit
      _
    %3851 = vsyncpa [#allocation4], 1
    %s3852 = scalar_lea.sflag [#allocation4], 1
    %3853 = vsyncpa %s3852, 1
    %3854 = vsyncpa [#allocation9], 1
    %s3855 = scalar_lea.sflag [#allocation9], 1
    %3856 = vsyncpa %s3855, 1
    %3857 = vsyncpa [#allocation12], 1
    %3858 = vsyncpa [#allocation5], 1
    %s3859 = scalar_lea.sflag [#allocation5], 1
    %3860 = vsyncpa %s3859, 1
    %3861 = vsyncpa [#allocation6], 1
    %s3862 = scalar_lea.sflag [#allocation6], 1
    %3863 = vsyncpa %s3862, 1

</llo_original>
